<compile_context>
chip_gen: v5e
topology: v5e:2x2
jax: 0.10.0
libtpu: 0.0.40
codegen_flags: <defaults>
</compile_context>

<pallas_src>
import math
from functools import partial

import jax
import jax.numpy as jnp
from jax.experimental import pallas as pl
from jax.experimental.pallas import tpu as pltpu


# ------------------------------------------------------------------ in-kernel helpers

def _layernorm(x, gamma, beta, eps):
    """TF-style LayerNorm over the last axis (biased variance, eps inside sqrt). f32."""
    u = jnp.mean(x, axis=-1, keepdims=True)
    d = x - u
    s = jnp.mean(d * d, axis=-1, keepdims=True)
    return gamma * (d * jax.lax.rsqrt(s + eps)) + beta


def _attention_into_dense(q, k, v, mask, dense_w, num_heads):
    """Multi-head attention, accumulating each head straight into the output projection.

    q: [Sq, H] f32 (softmax scale already folded into the Q projection)
    k, v: [Sk, H] f32
    mask: [Sq, Sk] f32 additive mask (broadcast over heads)
    dense_w: [H, E] bf16 output-projection weight
    returns: [Sq, E] f32  ==  concat_h(softmax(q_h k_h^T + mask) v_h) @ dense_w
    """
    H = q.shape[-1]
    E = dense_w.shape[-1]
    D = H // num_heads

    qb = q.astype(jnp.bfloat16)
    kb = k.astype(jnp.bfloat16)
    vb = v.astype(jnp.bfloat16)

    out = jnp.zeros((q.shape[0], E), jnp.float32)
    # TODO(synk): at production head counts replace this static unroll with
    # lax.fori_loop over heads (pl.ds + pl.multiple_of offsets) to bound vreg live ranges.
    for h in range(num_heads):
        sl = slice(h * D, (h + 1) * D)
        # contract on head_dim of both operands (no explicit transpose of k)
        s = jax.lax.dot_general(qb[:, sl], kb[:, sl], (((1,), (1,)), ((), ())),
                                preferred_element_type=jnp.float32)
        s = s + mask
        s = s - jnp.max(s, axis=-1, keepdims=True)          # numerically stable softmax
        p = jnp.exp(s)
        p = p * pl.reciprocal(jnp.sum(p, axis=-1, keepdims=True), approx=False)
        ctx = jnp.dot(p.astype(jnp.bfloat16), vb[:, sl],
                      preferred_element_type=jnp.float32)    # [Sq, D]
        # fold the head concat into the dense projection: accumulate partial products
        out = out + jnp.dot(ctx.astype(jnp.bfloat16), dense_w[sl, :],
                            preferred_element_type=jnp.float32)
    return out


# ------------------------------------------------------------------ fused layer kernel

def _decoder_layer_kernel(
    smask_ref, xmask_ref, h_ref, enc_ref,
    self_wqkv_ref, self_bqkv_ref, self_dw_ref, self_db_ref, ln1_g_ref, ln1_b_ref,
    cross_wq_ref, cross_bq_ref, cross_wkv_ref, cross_bkv_ref,
    cross_dw_ref, cross_db_ref, ln2_g_ref, ln2_b_ref,
    ffn_w1_ref, ffn_b1_ref, ffn_w2_ref, ffn_b2_ref, ln3_g_ref, ln3_b_ref,
    o_ref, *, num_heads, eps):
    h = h_ref[0]                                     # [Sq, E] f32
    enc = enc_ref[0]                                 # [Se, E] f32
    smask = smask_ref[0]                             # [Sq, Sq] f32
    xmask = xmask_ref[0]                             # [Sq, Se] f32

    H = self_dw_ref.shape[0]

    h_b = h.astype(jnp.bfloat16)
    enc_b = enc.astype(jnp.bfloat16)

    # ---------------- self-attention block ----------------
    qkv = jnp.dot(h_b, self_wqkv_ref[...],
                  preferred_element_type=jnp.float32) + self_bqkv_ref[...]    # [Sq, 3H]
    q, k, v = qkv[:, :H], qkv[:, H:2 * H], qkv[:, 2 * H:]
    dense = _attention_into_dense(q, k, v, smask, self_dw_ref[...],
                                  num_heads) + self_db_ref[...]               # [Sq, E]
    # dropout == identity (eval mode)
    x1 = _layernorm(dense + h, ln1_g_ref[...], ln1_b_ref[...], eps)           # [Sq, E]

    # ---------------- mutual (cross) attention block ----------------
    x1_b = x1.astype(jnp.bfloat16)
    q2 = jnp.dot(x1_b, cross_wq_ref[...],
                 preferred_element_type=jnp.float32) + cross_bq_ref[...]      # [Sq, H]
    kv2 = jnp.dot(enc_b, cross_wkv_ref[...],
                  preferred_element_type=jnp.float32) + cross_bkv_ref[...]    # [Se, 2H]
    k2, v2 = kv2[:, :H], kv2[:, H:]
    dense2 = _attention_into_dense(q2, k2, v2, xmask, cross_dw_ref[...],
                                   num_heads) + cross_db_ref[...]             # [Sq, E]
    x2 = _layernorm(dense2 + x1, ln2_g_ref[...], ln2_b_ref[...], eps)         # [Sq, E]

    # ---------------- feed-forward block ----------------
    ff1 = jnp.dot(x2.astype(jnp.bfloat16), ffn_w1_ref[...],
                  preferred_element_type=jnp.float32) + ffn_b1_ref[...]       # [Sq, I]
    ff1 = jnp.maximum(ff1, 0.0)
    ff2 = jnp.dot(ff1.astype(jnp.bfloat16), ffn_w2_ref[...],
                  preferred_element_type=jnp.float32) + ffn_b2_ref[...]       # [Sq, E]
    o_ref[0] = _layernorm(ff2 + x2, ln3_g_ref[...], ln3_b_ref[...], eps)


# ------------------------------------------------------------------ wrapper

def decoder_layer(hidden_states, encoder_output, output_mask, mutual_mask,
                  fused_params, num_heads, eps=1e-12, single_buffer_weights=True):
    fp = fused_params
    B, Sq, E = hidden_states.shape
    Se = encoder_output.shape[1]
    H = fp["self_dw"].shape[0]
    I = fp["ffn_w1"].shape[1]
    assert H % num_heads == 0

    # masks are broadcast over heads (head dim == 1 for this module's inputs);
    # pass them per-batch instead of replicating per head in HBM.
    smask = output_mask.reshape(B, Sq, Sq).astype(jnp.float32)
    xmask = mutual_mask.reshape(B, Sq, Se).astype(jnp.float32)

    weight_order = ["self_wqkv", "self_bqkv", "self_dw", "self_db", "ln1_g", "ln1_b",
                    "cross_wq", "cross_bq", "cross_wkv", "cross_bkv",
                    "cross_dw", "cross_db", "ln2_g", "ln2_b",
                    "ffn_w1", "ffn_b1", "ffn_w2", "ffn_b2", "ln3_g", "ln3_b"]
    weights = [fp[name] for name in weight_order]

    def _rep(arr):
        # constant block index -> DMA'd once and resident across grid steps;
        # Buffered(1): do not double-buffer never-changing weights.
        if single_buffer_weights:
            return pl.BlockSpec(arr.shape, lambda b: (0, 0),
                                pipeline_mode=pl.Buffered(1))
        return pl.BlockSpec(arr.shape, lambda b: (0, 0))

    in_specs = [
        pl.BlockSpec((1, Sq, Sq), lambda b: (b, 0, 0)),     # smask
        pl.BlockSpec((1, Sq, Se), lambda b: (b, 0, 0)),     # xmask
        pl.BlockSpec((1, Sq, E), lambda b: (b, 0, 0)),      # hidden_states
        pl.BlockSpec((1, Se, E), lambda b: (b, 0, 0)),      # encoder_output
    ] + [_rep(w) for w in weights]

    # ----- size the scoped-VMEM limit from the actual footprint -----
    def _nbytes(a):
        return int(a.size) * a.dtype.itemsize

    nbuf = 1 if single_buffer_weights else 2
    weight_bytes = nbuf * sum(_nbytes(w) for w in weights)
    io_block_bytes = 2 * 4 * (Sq * Sq + Sq * Se + Sq * E + Se * E + Sq * E)   # double-buffered
    interm_bytes = 4 * Sq * (5 * H + I + 8 * E + 2 * max(Sq, Se))             # rough scratch estimate
    vmem_limit = int(min(64 * 1024 * 1024,
                         max(8 * 1024 * 1024,
                             weight_bytes + io_block_bytes + interm_bytes + (2 << 20))))

    out = pl.pallas_call(
        partial(_decoder_layer_kernel, num_heads=num_heads, eps=eps),
        out_shape=jax.ShapeDtypeStruct((B, Sq, E), jnp.float32),
        grid=(B,),
        in_specs=in_specs,
        out_specs=pl.BlockSpec((1, Sq, E), lambda b: (b, 0, 0)),
        compiler_params=pltpu.CompilerParams(
            dimension_semantics=("parallel",),       # shards batch across TCs on v7x
            vmem_limit_bytes=vmem_limit),
    )(smask, xmask, hidden_states, encoder_output, *weights)
    return out


# ----------------------------------------------------------------- params

def init_params(key, embedding_size, hidden_size, intermediate_size):
    keys = jax.random.split(key, 16)
    sd = 0.02

    def lin(k, fan_in, fan_out):
        kw, kb = jax.random.split(k)
        w = jax.random.normal(kw, (fan_in, fan_out), jnp.float32) * sd
        b = jax.random.normal(kb, (1, fan_out), jnp.float32) * sd
        return w, b

    def mha(k):
        kq, kk, kv = jax.random.split(k, 3)
        wq, bq = lin(kq, embedding_size, hidden_size)
        wk, bk = lin(kk, embedding_size, hidden_size)
        wv, bv = lin(kv, embedding_size, hidden_size)
        return dict(wq=wq, bq=bq, wk=wk, bk=bk, wv=wv, bv=bv)

    p = {}
    p["self_att"] = mha(keys[0])
    p["self_dense_w"], p["self_dense_b"] = lin(keys[1], hidden_size, embedding_size)
    p["ln1_gamma"] = jnp.ones((1, embedding_size), jnp.float32)
    p["ln1_beta"] = jnp.zeros((1, embedding_size), jnp.float32)
    p["cross_att"] = mha(keys[2])
    p["cross_dense_w"], p["cross_dense_b"] = lin(keys[3], hidden_size, embedding_size)
    p["ln2_gamma"] = jnp.ones((1, embedding_size), jnp.float32)
    p["ln2_beta"] = jnp.zeros((1, embedding_size), jnp.float32)
    p["ffn_w1"], p["ffn_b1"] = lin(keys[4], embedding_size, intermediate_size)
    p["ffn_w2"], p["ffn_b2"] = lin(keys[5], intermediate_size, embedding_size)
    p["ln3_gamma"] = jnp.ones((1, embedding_size), jnp.float32)
    p["ln3_beta"] = jnp.zeros((1, embedding_size), jnp.float32)
    return p


def preprocess_params(params, num_heads):
    """One-time (outside jit) weight fusion, softmax-scale folding, and bf16 cast.

    * Q/K/V weights concatenated into [E,3H] (cross K/V into [E,2H]) so the kernel does
      one fused projection matmul per block.
    * The 1/sqrt(head_dim) softmax scale is folded into the Q weights/biases.
    * Matmul weights are cast to bf16 (MXU-native); biases / LN params stay f32.
    """
    sa, ca = params["self_att"], params["cross_att"]
    H = sa["wq"].shape[1]
    D = H // num_heads
    scale = 1.0 / math.sqrt(D)
    bf = jnp.bfloat16

    fp = dict(
        self_wqkv=jnp.concatenate([sa["wq"] * scale, sa["wk"], sa["wv"]], axis=1).astype(bf),
        self_bqkv=jnp.concatenate([sa["bq"] * scale, sa["bk"], sa["bv"]], axis=1),
        self_dw=params["self_dense_w"].astype(bf), self_db=params["self_dense_b"],
        ln1_g=params["ln1_gamma"], ln1_b=params["ln1_beta"],
        cross_wq=(ca["wq"] * scale).astype(bf), cross_bq=ca["bq"] * scale,
        cross_wkv=jnp.concatenate([ca["wk"], ca["wv"]], axis=1).astype(bf),
        cross_bkv=jnp.concatenate([ca["bk"], ca["bv"]], axis=1),
        cross_dw=params["cross_dense_w"].astype(bf), cross_db=params["cross_dense_b"],
        ln2_g=params["ln2_gamma"], ln2_b=params["ln2_beta"],
        ffn_w1=params["ffn_w1"].astype(bf), ffn_b1=params["ffn_b1"],
        ffn_w2=params["ffn_w2"].astype(bf), ffn_b2=params["ffn_b2"],
        ln3_g=params["ln3_gamma"], ln3_b=params["ln3_beta"],
    )
    return fp


# ------------------------------------------------------------------- main

if __name__ == "__main__":
    B, S_dec, S_enc = 2, 8, 8
    embedding_size = 32
    hidden_size = 32
    num_heads = 4
    intermediate_size = 64

    key = jax.random.PRNGKey(0)
    k_h, k_e, k_p = jax.random.split(key, 3)

    hidden_states = jax.random.normal(k_h, (B, S_dec, embedding_size), jnp.float32)
    encoder_output = jax.random.normal(k_e, (B, S_enc, embedding_size), jnp.float32)

    # additive causal mask for self-attention (0 where allowed, -1e9 where masked)
    causal = jnp.tril(jnp.ones((S_dec, S_dec), jnp.float32))
    output_mask = ((1.0 - causal) * -1e9)[None, None, :, :]
    output_mask = jnp.broadcast_to(output_mask, (B, 1, S_dec, S_dec))
    mutual_mask = jnp.zeros((B, 1, S_dec, S_enc), jnp.float32)   # no cross masking

    params = init_params(k_p, embedding_size, hidden_size, intermediate_size)
    fused = jax.tree_util.tree_map(jax.block_until_ready,
                                   preprocess_params(params, num_heads))

    def run(single_buffer_weights):
        fwd = jax.jit(partial(decoder_layer, num_heads=num_heads,
                              single_buffer_weights=single_buffer_weights))
        out = fwd(hidden_states, encoder_output, output_mask, mutual_mask, fused)
        jax.block_until_ready(out)
        return out

    try:
        out = run(True)        # single-buffered (Buffered(1)) resident weights
    except Exception:
        # Fallback for jax versions that reject pipeline_mode=pl.Buffered(1) on the
        # top-level pipeline; kernel math is identical, weights just double-buffer.
        out = run(False)

    assert out.shape == (B, S_dec, embedding_size)
    assert bool(jnp.all(jnp.isfinite(out)))
    print("KERNEL_OK")
</pallas_src>

<mosaic_0001>
module attributes {stable_mosaic.version = 11 : i64} {
  func.func @_decoder_layer_kernel(%arg0: i32, %arg1: memref<1x8x8xf32, #tpu.memory_space<vmem>>, %arg2: memref<1x8x8xf32, #tpu.memory_space<vmem>>, %arg3: memref<1x8x32xf32, #tpu.memory_space<vmem>>, %arg4: memref<1x8x32xf32, #tpu.memory_space<vmem>>, %arg5: memref<32x96xbf16, #tpu.memory_space<vmem>>, %arg6: memref<1x96xf32, #tpu.memory_space<vmem>>, %arg7: memref<32x32xbf16, #tpu.memory_space<vmem>>, %arg8: memref<1x32xf32, #tpu.memory_space<vmem>>, %arg9: memref<1x32xf32, #tpu.memory_space<vmem>>, %arg10: memref<1x32xf32, #tpu.memory_space<vmem>>, %arg11: memref<32x32xbf16, #tpu.memory_space<vmem>>, %arg12: memref<1x32xf32, #tpu.memory_space<vmem>>, %arg13: memref<32x64xbf16, #tpu.memory_space<vmem>>, %arg14: memref<1x64xf32, #tpu.memory_space<vmem>>, %arg15: memref<32x32xbf16, #tpu.memory_space<vmem>>, %arg16: memref<1x32xf32, #tpu.memory_space<vmem>>, %arg17: memref<1x32xf32, #tpu.memory_space<vmem>>, %arg18: memref<1x32xf32, #tpu.memory_space<vmem>>, %arg19: memref<32x64xbf16, #tpu.memory_space<vmem>>, %arg20: memref<1x64xf32, #tpu.memory_space<vmem>>, %arg21: memref<64x32xbf16, #tpu.memory_space<vmem>>, %arg22: memref<1x32xf32, #tpu.memory_space<vmem>>, %arg23: memref<1x32xf32, #tpu.memory_space<vmem>>, %arg24: memref<1x32xf32, #tpu.memory_space<vmem>>, %arg25: memref<1x8x32xf32, #tpu.memory_space<vmem>>) attributes {dimension_semantics = [#tpu.dimension_semantics<parallel>], iteration_bounds = array<i64: 2>, scalar_prefetch = 0 : i64, scratch_operands = 0 : i64, tpu.core_type = #tpu.core_type<tc>, window_params = [{transform_indices = @transform_0, window_bounds = array<i64: 1, 8, 8>}, {transform_indices = @transform_1, window_bounds = array<i64: 1, 8, 8>}, {transform_indices = @transform_2, window_bounds = array<i64: 1, 8, 32>}, {transform_indices = @transform_3, window_bounds = array<i64: 1, 8, 32>}, {pipeline_mode = #tpu.pipeline_mode<synchronous>, transform_indices = @transform_4, window_bounds = array<i64: 32, 96>}, {pipeline_mode = #tpu.pipeline_mode<synchronous>, transform_indices = @transform_5, window_bounds = array<i64: 1, 96>}, {pipeline_mode = #tpu.pipeline_mode<synchronous>, transform_indices = @transform_6, window_bounds = array<i64: 32, 32>}, {pipeline_mode = #tpu.pipeline_mode<synchronous>, transform_indices = @transform_7, window_bounds = array<i64: 1, 32>}, {pipeline_mode = #tpu.pipeline_mode<synchronous>, transform_indices = @transform_8, window_bounds = array<i64: 1, 32>}, {pipeline_mode = #tpu.pipeline_mode<synchronous>, transform_indices = @transform_9, window_bounds = array<i64: 1, 32>}, {pipeline_mode = #tpu.pipeline_mode<synchronous>, transform_indices = @transform_10, window_bounds = array<i64: 32, 32>}, {pipeline_mode = #tpu.pipeline_mode<synchronous>, transform_indices = @transform_11, window_bounds = array<i64: 1, 32>}, {pipeline_mode = #tpu.pipeline_mode<synchronous>, transform_indices = @transform_12, window_bounds = array<i64: 32, 64>}, {pipeline_mode = #tpu.pipeline_mode<synchronous>, transform_indices = @transform_13, window_bounds = array<i64: 1, 64>}, {pipeline_mode = #tpu.pipeline_mode<synchronous>, transform_indices = @transform_14, window_bounds = array<i64: 32, 32>}, {pipeline_mode = #tpu.pipeline_mode<synchronous>, transform_indices = @transform_15, window_bounds = array<i64: 1, 32>}, {pipeline_mode = #tpu.pipeline_mode<synchronous>, transform_indices = @transform_16, window_bounds = array<i64: 1, 32>}, {pipeline_mode = #tpu.pipeline_mode<synchronous>, transform_indices = @transform_17, window_bounds = array<i64: 1, 32>}, {pipeline_mode = #tpu.pipeline_mode<synchronous>, transform_indices = @transform_18, window_bounds = array<i64: 32, 64>}, {pipeline_mode = #tpu.pipeline_mode<synchronous>, transform_indices = @transform_19, window_bounds = array<i64: 1, 64>}, {pipeline_mode = #tpu.pipeline_mode<synchronous>, transform_indices = @transform_20, window_bounds = array<i64: 64, 32>}, {pipeline_mode = #tpu.pipeline_mode<synchronous>, transform_indices = @transform_21, window_bounds = array<i64: 1, 32>}, {pipeline_mode = #tpu.pipeline_mode<synchronous>, transform_indices = @transform_22, window_bounds = array<i64: 1, 32>}, {pipeline_mode = #tpu.pipeline_mode<synchronous>, transform_indices = @transform_23, window_bounds = array<i64: 1, 32>}, {transform_indices = @transform_24, window_bounds = array<i64: 1, 8, 32>}]} {
    %c0 = arith.constant 0 : index
    %c0_0 = arith.constant 0 : index
    %c0_1 = arith.constant 0 : index
    %0 = vector.load %arg3[%c0, %c0_0, %c0_1] : memref<1x8x32xf32, #tpu.memory_space<vmem>>, vector<1x8x32xf32>
    %1 = vector.shape_cast %0 : vector<1x8x32xf32> to vector<8x32xf32>
    %c0_2 = arith.constant 0 : index
    %c0_3 = arith.constant 0 : index
    %c0_4 = arith.constant 0 : index
    %2 = vector.load %arg4[%c0_2, %c0_3, %c0_4] : memref<1x8x32xf32, #tpu.memory_space<vmem>>, vector<1x8x32xf32>
    %3 = vector.shape_cast %2 : vector<1x8x32xf32> to vector<8x32xf32>
    %c0_5 = arith.constant 0 : index
    %c0_6 = arith.constant 0 : index
    %c0_7 = arith.constant 0 : index
    %4 = vector.load %arg1[%c0_5, %c0_6, %c0_7] : memref<1x8x8xf32, #tpu.memory_space<vmem>>, vector<1x8x8xf32>
    %5 = vector.shape_cast %4 : vector<1x8x8xf32> to vector<8x8xf32>
    %c0_8 = arith.constant 0 : index
    %c0_9 = arith.constant 0 : index
    %c0_10 = arith.constant 0 : index
    %6 = vector.load %arg2[%c0_8, %c0_9, %c0_10] : memref<1x8x8xf32, #tpu.memory_space<vmem>>, vector<1x8x8xf32>
    %7 = vector.shape_cast %6 : vector<1x8x8xf32> to vector<8x8xf32>
    %8 = arith.truncf %1 : vector<8x32xf32> to vector<8x32xbf16>
    %9 = arith.truncf %3 : vector<8x32xf32> to vector<8x32xbf16>
    %c0_11 = arith.constant 0 : index
    %c0_12 = arith.constant 0 : index
    %10 = vector.load %arg5[%c0_11, %c0_12] : memref<32x96xbf16, #tpu.memory_space<vmem>>, vector<32x96xbf16>
    %cst = arith.constant dense<0.000000e+00> : vector<8x96xf32>
    %11 = tpu.matmul %8, %10, %cst {dimension_numbers = #tpu.dot_dimension_numbers<[1], [0], [0], [1], [0, 0, 1, 1], [], []>} : vector<8x32xbf16>, vector<32x96xbf16>, vector<8x96xf32> -> vector<8x96xf32>
    %c0_13 = arith.constant 0 : index
    %c0_14 = arith.constant 0 : index
    %12 = vector.load %arg6[%c0_13, %c0_14] : memref<1x96xf32, #tpu.memory_space<vmem>>, vector<1x96xf32>
    %13 = vector.broadcast %12 : vector<1x96xf32> to vector<8x96xf32>
    %14 = arith.addf %11, %13 : vector<8x96xf32>
    %15 = vector.extract_strided_slice %14 {offsets = [0, 0], sizes = [8, 32], strides = [1, 1]} : vector<8x96xf32> to vector<8x32xf32>
    %16 = vector.extract_strided_slice %14 {offsets = [0, 32], sizes = [8, 32], strides = [1, 1]} : vector<8x96xf32> to vector<8x32xf32>
    %17 = vector.extract_strided_slice %14 {offsets = [0, 64], sizes = [8, 32], strides = [1, 1]} : vector<8x96xf32> to vector<8x32xf32>
    %c0_15 = arith.constant 0 : index
    %c0_16 = arith.constant 0 : index
    %18 = vector.load %arg7[%c0_15, %c0_16] : memref<32x32xbf16, #tpu.memory_space<vmem>>, vector<32x32xbf16>
    %19 = arith.truncf %15 : vector<8x32xf32> to vector<8x32xbf16>
    %20 = arith.truncf %16 : vector<8x32xf32> to vector<8x32xbf16>
    %21 = arith.truncf %17 : vector<8x32xf32> to vector<8x32xbf16>
    %cst_17 = arith.constant 0.000000e+00 : f32
    %22 = vector.broadcast %cst_17 : f32 to vector<8x32xf32>
    %23 = vector.extract_strided_slice %19 {offsets = [0, 0], sizes = [8, 8], strides = [1, 1]} : vector<8x32xbf16> to vector<8x8xbf16>
    %24 = vector.extract_strided_slice %20 {offsets = [0, 0], sizes = [8, 8], strides = [1, 1]} : vector<8x32xbf16> to vector<8x8xbf16>
    %cst_18 = arith.constant dense<0.000000e+00> : vector<8x8xf32>
    %25 = tpu.matmul %23, %24, %cst_18 {dimension_numbers = #tpu.dot_dimension_numbers<[1], [1], [0], [0], [0, 0, 1, 0], [], []>} : vector<8x8xbf16>, vector<8x8xbf16>, vector<8x8xf32> -> vector<8x8xf32>
    %26 = arith.addf %25, %5 : vector<8x8xf32>
    %cst_19 = arith.constant dense<0xFF800000> : vector<8xf32>
    %27 = vector.multi_reduction <maximumf>, %26, %cst_19 [1] : vector<8x8xf32> to vector<8xf32>
    %28 = vector.shape_cast %27 : vector<8xf32> to vector<8x1xf32>
    %29 = vector.broadcast %28 : vector<8x1xf32> to vector<8x8xf32>
    %30 = arith.subf %26, %29 : vector<8x8xf32>
    %31 = math.exp %30 : vector<8x8xf32>
    %cst_20 = arith.constant dense<0.000000e+00> : vector<8xf32>
    %32 = vector.multi_reduction <add>, %31, %cst_20 [1] : vector<8x8xf32> to vector<8xf32>
    %33 = vector.shape_cast %32 : vector<8xf32> to vector<8x1xf32>
    %34 = tpu.reciprocal %33 : vector<8x1xf32> -> vector<8x1xf32>
    %35 = vector.broadcast %34 : vector<8x1xf32> to vector<8x8xf32>
    %36 = arith.mulf %31, %35 : vector<8x8xf32>
    %37 = arith.truncf %36 : vector<8x8xf32> to vector<8x8xbf16>
    %38 = vector.extract_strided_slice %21 {offsets = [0, 0], sizes = [8, 8], strides = [1, 1]} : vector<8x32xbf16> to vector<8x8xbf16>
    %cst_21 = arith.constant dense<0.000000e+00> : vector<8x8xf32>
    %39 = tpu.matmul %37, %38, %cst_21 {dimension_numbers = #tpu.dot_dimension_numbers<[1], [0], [0], [1], [0, 0, 1, 1], [], []>} : vector<8x8xbf16>, vector<8x8xbf16>, vector<8x8xf32> -> vector<8x8xf32>
    %40 = arith.truncf %39 : vector<8x8xf32> to vector<8x8xbf16>
    %41 = vector.extract_strided_slice %18 {offsets = [0, 0], sizes = [8, 32], strides = [1, 1]} : vector<32x32xbf16> to vector<8x32xbf16>
    %cst_22 = arith.constant dense<0.000000e+00> : vector<8x32xf32>
    %42 = tpu.matmul %40, %41, %cst_22 {dimension_numbers = #tpu.dot_dimension_numbers<[1], [0], [0], [1], [0, 0, 1, 1], [], []>} : vector<8x8xbf16>, vector<8x32xbf16>, vector<8x32xf32> -> vector<8x32xf32>
    %43 = arith.addf %22, %42 : vector<8x32xf32>
    %44 = vector.extract_strided_slice %19 {offsets = [0, 8], sizes = [8, 8], strides = [1, 1]} : vector<8x32xbf16> to vector<8x8xbf16>
    %45 = vector.extract_strided_slice %20 {offsets = [0, 8], sizes = [8, 8], strides = [1, 1]} : vector<8x32xbf16> to vector<8x8xbf16>
    %cst_23 = arith.constant dense<0.000000e+00> : vector<8x8xf32>
    %46 = tpu.matmul %44, %45, %cst_23 {dimension_numbers = #tpu.dot_dimension_numbers<[1], [1], [0], [0], [0, 0, 1, 0], [], []>} : vector<8x8xbf16>, vector<8x8xbf16>, vector<8x8xf32> -> vector<8x8xf32>
    %47 = arith.addf %46, %5 : vector<8x8xf32>
    %cst_24 = arith.constant dense<0xFF800000> : vector<8xf32>
    %48 = vector.multi_reduction <maximumf>, %47, %cst_24 [1] : vector<8x8xf32> to vector<8xf32>
    %49 = vector.shape_cast %48 : vector<8xf32> to vector<8x1xf32>
    %50 = vector.broadcast %49 : vector<8x1xf32> to vector<8x8xf32>
    %51 = arith.subf %47, %50 : vector<8x8xf32>
    %52 = math.exp %51 : vector<8x8xf32>
    %cst_25 = arith.constant dense<0.000000e+00> : vector<8xf32>
    %53 = vector.multi_reduction <add>, %52, %cst_25 [1] : vector<8x8xf32> to vector<8xf32>
    %54 = vector.shape_cast %53 : vector<8xf32> to vector<8x1xf32>
    %55 = tpu.reciprocal %54 : vector<8x1xf32> -> vector<8x1xf32>
    %56 = vector.broadcast %55 : vector<8x1xf32> to vector<8x8xf32>
    %57 = arith.mulf %52, %56 : vector<8x8xf32>
    %58 = arith.truncf %57 : vector<8x8xf32> to vector<8x8xbf16>
    %59 = vector.extract_strided_slice %21 {offsets = [0, 8], sizes = [8, 8], strides = [1, 1]} : vector<8x32xbf16> to vector<8x8xbf16>
    %cst_26 = arith.constant dense<0.000000e+00> : vector<8x8xf32>
    %60 = tpu.matmul %58, %59, %cst_26 {dimension_numbers = #tpu.dot_dimension_numbers<[1], [0], [0], [1], [0, 0, 1, 1], [], []>} : vector<8x8xbf16>, vector<8x8xbf16>, vector<8x8xf32> -> vector<8x8xf32>
    %61 = arith.truncf %60 : vector<8x8xf32> to vector<8x8xbf16>
    %62 = vector.extract_strided_slice %18 {offsets = [8, 0], sizes = [8, 32], strides = [1, 1]} : vector<32x32xbf16> to vector<8x32xbf16>
    %cst_27 = arith.constant dense<0.000000e+00> : vector<8x32xf32>
    %63 = tpu.matmul %61, %62, %cst_27 {dimension_numbers = #tpu.dot_dimension_numbers<[1], [0], [0], [1], [0, 0, 1, 1], [], []>} : vector<8x8xbf16>, vector<8x32xbf16>, vector<8x32xf32> -> vector<8x32xf32>
    %64 = arith.addf %43, %63 : vector<8x32xf32>
    %65 = vector.extract_strided_slice %19 {offsets = [0, 16], sizes = [8, 8], strides = [1, 1]} : vector<8x32xbf16> to vector<8x8xbf16>
    %66 = vector.extract_strided_slice %20 {offsets = [0, 16], sizes = [8, 8], strides = [1, 1]} : vector<8x32xbf16> to vector<8x8xbf16>
    %cst_28 = arith.constant dense<0.000000e+00> : vector<8x8xf32>
    %67 = tpu.matmul %65, %66, %cst_28 {dimension_numbers = #tpu.dot_dimension_numbers<[1], [1], [0], [0], [0, 0, 1, 0], [], []>} : vector<8x8xbf16>, vector<8x8xbf16>, vector<8x8xf32> -> vector<8x8xf32>
    %68 = arith.addf %67, %5 : vector<8x8xf32>
    %cst_29 = arith.constant dense<0xFF800000> : vector<8xf32>
    %69 = vector.multi_reduction <maximumf>, %68, %cst_29 [1] : vector<8x8xf32> to vector<8xf32>
    %70 = vector.shape_cast %69 : vector<8xf32> to vector<8x1xf32>
    %71 = vector.broadcast %70 : vector<8x1xf32> to vector<8x8xf32>
    %72 = arith.subf %68, %71 : vector<8x8xf32>
    %73 = math.exp %72 : vector<8x8xf32>
    %cst_30 = arith.constant dense<0.000000e+00> : vector<8xf32>
    %74 = vector.multi_reduction <add>, %73, %cst_30 [1] : vector<8x8xf32> to vector<8xf32>
    %75 = vector.shape_cast %74 : vector<8xf32> to vector<8x1xf32>
    %76 = tpu.reciprocal %75 : vector<8x1xf32> -> vector<8x1xf32>
    %77 = vector.broadcast %76 : vector<8x1xf32> to vector<8x8xf32>
    %78 = arith.mulf %73, %77 : vector<8x8xf32>
    %79 = arith.truncf %78 : vector<8x8xf32> to vector<8x8xbf16>
    %80 = vector.extract_strided_slice %21 {offsets = [0, 16], sizes = [8, 8], strides = [1, 1]} : vector<8x32xbf16> to vector<8x8xbf16>
    %cst_31 = arith.constant dense<0.000000e+00> : vector<8x8xf32>
    %81 = tpu.matmul %79, %80, %cst_31 {dimension_numbers = #tpu.dot_dimension_numbers<[1], [0], [0], [1], [0, 0, 1, 1], [], []>} : vector<8x8xbf16>, vector<8x8xbf16>, vector<8x8xf32> -> vector<8x8xf32>
    %82 = arith.truncf %81 : vector<8x8xf32> to vector<8x8xbf16>
    %83 = vector.extract_strided_slice %18 {offsets = [16, 0], sizes = [8, 32], strides = [1, 1]} : vector<32x32xbf16> to vector<8x32xbf16>
    %cst_32 = arith.constant dense<0.000000e+00> : vector<8x32xf32>
    %84 = tpu.matmul %82, %83, %cst_32 {dimension_numbers = #tpu.dot_dimension_numbers<[1], [0], [0], [1], [0, 0, 1, 1], [], []>} : vector<8x8xbf16>, vector<8x32xbf16>, vector<8x32xf32> -> vector<8x32xf32>
    %85 = arith.addf %64, %84 : vector<8x32xf32>
    %86 = vector.extract_strided_slice %19 {offsets = [0, 24], sizes = [8, 8], strides = [1, 1]} : vector<8x32xbf16> to vector<8x8xbf16>
    %87 = vector.extract_strided_slice %20 {offsets = [0, 24], sizes = [8, 8], strides = [1, 1]} : vector<8x32xbf16> to vector<8x8xbf16>
    %cst_33 = arith.constant dense<0.000000e+00> : vector<8x8xf32>
    %88 = tpu.matmul %86, %87, %cst_33 {dimension_numbers = #tpu.dot_dimension_numbers<[1], [1], [0], [0], [0, 0, 1, 0], [], []>} : vector<8x8xbf16>, vector<8x8xbf16>, vector<8x8xf32> -> vector<8x8xf32>
    %89 = arith.addf %88, %5 : vector<8x8xf32>
    %cst_34 = arith.constant dense<0xFF800000> : vector<8xf32>
    %90 = vector.multi_reduction <maximumf>, %89, %cst_34 [1] : vector<8x8xf32> to vector<8xf32>
    %91 = vector.shape_cast %90 : vector<8xf32> to vector<8x1xf32>
    %92 = vector.broadcast %91 : vector<8x1xf32> to vector<8x8xf32>
    %93 = arith.subf %89, %92 : vector<8x8xf32>
    %94 = math.exp %93 : vector<8x8xf32>
    %cst_35 = arith.constant dense<0.000000e+00> : vector<8xf32>
    %95 = vector.multi_reduction <add>, %94, %cst_35 [1] : vector<8x8xf32> to vector<8xf32>
    %96 = vector.shape_cast %95 : vector<8xf32> to vector<8x1xf32>
    %97 = tpu.reciprocal %96 : vector<8x1xf32> -> vector<8x1xf32>
    %98 = vector.broadcast %97 : vector<8x1xf32> to vector<8x8xf32>
    %99 = arith.mulf %94, %98 : vector<8x8xf32>
    %100 = arith.truncf %99 : vector<8x8xf32> to vector<8x8xbf16>
    %101 = vector.extract_strided_slice %21 {offsets = [0, 24], sizes = [8, 8], strides = [1, 1]} : vector<8x32xbf16> to vector<8x8xbf16>
    %cst_36 = arith.constant dense<0.000000e+00> : vector<8x8xf32>
    %102 = tpu.matmul %100, %101, %cst_36 {dimension_numbers = #tpu.dot_dimension_numbers<[1], [0], [0], [1], [0, 0, 1, 1], [], []>} : vector<8x8xbf16>, vector<8x8xbf16>, vector<8x8xf32> -> vector<8x8xf32>
    %103 = arith.truncf %102 : vector<8x8xf32> to vector<8x8xbf16>
    %104 = vector.extract_strided_slice %18 {offsets = [24, 0], sizes = [8, 32], strides = [1, 1]} : vector<32x32xbf16> to vector<8x32xbf16>
    %cst_37 = arith.constant dense<0.000000e+00> : vector<8x32xf32>
    %105 = tpu.matmul %103, %104, %cst_37 {dimension_numbers = #tpu.dot_dimension_numbers<[1], [0], [0], [1], [0, 0, 1, 1], [], []>} : vector<8x8xbf16>, vector<8x32xbf16>, vector<8x32xf32> -> vector<8x32xf32>
    %106 = arith.addf %85, %105 : vector<8x32xf32>
    %c0_38 = arith.constant 0 : index
    %c0_39 = arith.constant 0 : index
    %107 = vector.load %arg8[%c0_38, %c0_39] : memref<1x32xf32, #tpu.memory_space<vmem>>, vector<1x32xf32>
    %108 = vector.broadcast %107 : vector<1x32xf32> to vector<8x32xf32>
    %109 = arith.addf %106, %108 : vector<8x32xf32>
    %110 = arith.addf %109, %1 : vector<8x32xf32>
    %c0_40 = arith.constant 0 : index
    %c0_41 = arith.constant 0 : index
    %111 = vector.load %arg9[%c0_40, %c0_41] : memref<1x32xf32, #tpu.memory_space<vmem>>, vector<1x32xf32>
    %c0_42 = arith.constant 0 : index
    %c0_43 = arith.constant 0 : index
    %112 = vector.load %arg10[%c0_42, %c0_43] : memref<1x32xf32, #tpu.memory_space<vmem>>, vector<1x32xf32>
    %cst_44 = arith.constant dense<0.000000e+00> : vector<8xf32>
    %113 = vector.multi_reduction <add>, %110, %cst_44 [1] : vector<8x32xf32> to vector<8xf32>
    %114 = vector.shape_cast %113 : vector<8xf32> to vector<8x1xf32>
    %cst_45 = arith.constant 3.200000e+01 : f32
    %115 = vector.broadcast %cst_45 : f32 to vector<8x1xf32>
    %116 = arith.divf %114, %115 : vector<8x1xf32>
    %117 = vector.broadcast %116 : vector<8x1xf32> to vector<8x32xf32>
    %118 = arith.subf %110, %117 : vector<8x32xf32>
    %119 = arith.mulf %118, %118 : vector<8x32xf32>
    %cst_46 = arith.constant dense<0.000000e+00> : vector<8xf32>
    %120 = vector.multi_reduction <add>, %119, %cst_46 [1] : vector<8x32xf32> to vector<8xf32>
    %121 = vector.shape_cast %120 : vector<8xf32> to vector<8x1xf32>
    %cst_47 = arith.constant 3.200000e+01 : f32
    %122 = vector.broadcast %cst_47 : f32 to vector<8x1xf32>
    %123 = arith.divf %121, %122 : vector<8x1xf32>
    %cst_48 = arith.constant 9.99999996E-13 : f32
    %124 = vector.broadcast %cst_48 : f32 to vector<8x1xf32>
    %125 = arith.addf %123, %124 : vector<8x1xf32>
    %126 = math.rsqrt %125 : vector<8x1xf32>
    %127 = vector.broadcast %126 : vector<8x1xf32> to vector<8x32xf32>
    %128 = arith.mulf %118, %127 : vector<8x32xf32>
    %129 = vector.broadcast %111 : vector<1x32xf32> to vector<8x32xf32>
    %130 = arith.mulf %129, %128 : vector<8x32xf32>
    %131 = vector.broadcast %112 : vector<1x32xf32> to vector<8x32xf32>
    %132 = arith.addf %130, %131 : vector<8x32xf32>
    %133 = arith.truncf %132 : vector<8x32xf32> to vector<8x32xbf16>
    %c0_49 = arith.constant 0 : index
    %c0_50 = arith.constant 0 : index
    %134 = vector.load %arg11[%c0_49, %c0_50] : memref<32x32xbf16, #tpu.memory_space<vmem>>, vector<32x32xbf16>
    %cst_51 = arith.constant dense<0.000000e+00> : vector<8x32xf32>
    %135 = tpu.matmul %133, %134, %cst_51 {dimension_numbers = #tpu.dot_dimension_numbers<[1], [0], [0], [1], [0, 0, 1, 1], [], []>} : vector<8x32xbf16>, vector<32x32xbf16>, vector<8x32xf32> -> vector<8x32xf32>
    %c0_52 = arith.constant 0 : index
    %c0_53 = arith.constant 0 : index
    %136 = vector.load %arg12[%c0_52, %c0_53] : memref<1x32xf32, #tpu.memory_space<vmem>>, vector<1x32xf32>
    %137 = vector.broadcast %136 : vector<1x32xf32> to vector<8x32xf32>
    %138 = arith.addf %135, %137 : vector<8x32xf32>
    %c0_54 = arith.constant 0 : index
    %c0_55 = arith.constant 0 : index
    %139 = vector.load %arg13[%c0_54, %c0_55] : memref<32x64xbf16, #tpu.memory_space<vmem>>, vector<32x64xbf16>
    %cst_56 = arith.constant dense<0.000000e+00> : vector<8x64xf32>
    %140 = tpu.matmul %9, %139, %cst_56 {dimension_numbers = #tpu.dot_dimension_numbers<[1], [0], [0], [1], [0, 0, 1, 1], [], []>} : vector<8x32xbf16>, vector<32x64xbf16>, vector<8x64xf32> -> vector<8x64xf32>
    %c0_57 = arith.constant 0 : index
    %c0_58 = arith.constant 0 : index
    %141 = vector.load %arg14[%c0_57, %c0_58] : memref<1x64xf32, #tpu.memory_space<vmem>>, vector<1x64xf32>
    %142 = vector.broadcast %141 : vector<1x64xf32> to vector<8x64xf32>
    %143 = arith.addf %140, %142 : vector<8x64xf32>
    %144 = vector.extract_strided_slice %143 {offsets = [0, 0], sizes = [8, 32], strides = [1, 1]} : vector<8x64xf32> to vector<8x32xf32>
    %145 = vector.extract_strided_slice %143 {offsets = [0, 32], sizes = [8, 32], strides = [1, 1]} : vector<8x64xf32> to vector<8x32xf32>
    %c0_59 = arith.constant 0 : index
    %c0_60 = arith.constant 0 : index
    %146 = vector.load %arg15[%c0_59, %c0_60] : memref<32x32xbf16, #tpu.memory_space<vmem>>, vector<32x32xbf16>
    %147 = arith.truncf %138 : vector<8x32xf32> to vector<8x32xbf16>
    %148 = arith.truncf %144 : vector<8x32xf32> to vector<8x32xbf16>
    %149 = arith.truncf %145 : vector<8x32xf32> to vector<8x32xbf16>
    %cst_61 = arith.constant 0.000000e+00 : f32
    %150 = vector.broadcast %cst_61 : f32 to vector<8x32xf32>
    %151 = vector.extract_strided_slice %147 {offsets = [0, 0], sizes = [8, 8], strides = [1, 1]} : vector<8x32xbf16> to vector<8x8xbf16>
    %152 = vector.extract_strided_slice %148 {offsets = [0, 0], sizes = [8, 8], strides = [1, 1]} : vector<8x32xbf16> to vector<8x8xbf16>
    %cst_62 = arith.constant dense<0.000000e+00> : vector<8x8xf32>
    %153 = tpu.matmul %151, %152, %cst_62 {dimension_numbers = #tpu.dot_dimension_numbers<[1], [1], [0], [0], [0, 0, 1, 0], [], []>} : vector<8x8xbf16>, vector<8x8xbf16>, vector<8x8xf32> -> vector<8x8xf32>
    %154 = arith.addf %153, %7 : vector<8x8xf32>
    %cst_63 = arith.constant dense<0xFF800000> : vector<8xf32>
    %155 = vector.multi_reduction <maximumf>, %154, %cst_63 [1] : vector<8x8xf32> to vector<8xf32>
    %156 = vector.shape_cast %155 : vector<8xf32> to vector<8x1xf32>
    %157 = vector.broadcast %156 : vector<8x1xf32> to vector<8x8xf32>
    %158 = arith.subf %154, %157 : vector<8x8xf32>
    %159 = math.exp %158 : vector<8x8xf32>
    %cst_64 = arith.constant dense<0.000000e+00> : vector<8xf32>
    %160 = vector.multi_reduction <add>, %159, %cst_64 [1] : vector<8x8xf32> to vector<8xf32>
    %161 = vector.shape_cast %160 : vector<8xf32> to vector<8x1xf32>
    %162 = tpu.reciprocal %161 : vector<8x1xf32> -> vector<8x1xf32>
    %163 = vector.broadcast %162 : vector<8x1xf32> to vector<8x8xf32>
    %164 = arith.mulf %159, %163 : vector<8x8xf32>
    %165 = arith.truncf %164 : vector<8x8xf32> to vector<8x8xbf16>
    %166 = vector.extract_strided_slice %149 {offsets = [0, 0], sizes = [8, 8], strides = [1, 1]} : vector<8x32xbf16> to vector<8x8xbf16>
    %cst_65 = arith.constant dense<0.000000e+00> : vector<8x8xf32>
    %167 = tpu.matmul %165, %166, %cst_65 {dimension_numbers = #tpu.dot_dimension_numbers<[1], [0], [0], [1], [0, 0, 1, 1], [], []>} : vector<8x8xbf16>, vector<8x8xbf16>, vector<8x8xf32> -> vector<8x8xf32>
    %168 = arith.truncf %167 : vector<8x8xf32> to vector<8x8xbf16>
    %169 = vector.extract_strided_slice %146 {offsets = [0, 0], sizes = [8, 32], strides = [1, 1]} : vector<32x32xbf16> to vector<8x32xbf16>
    %cst_66 = arith.constant dense<0.000000e+00> : vector<8x32xf32>
    %170 = tpu.matmul %168, %169, %cst_66 {dimension_numbers = #tpu.dot_dimension_numbers<[1], [0], [0], [1], [0, 0, 1, 1], [], []>} : vector<8x8xbf16>, vector<8x32xbf16>, vector<8x32xf32> -> vector<8x32xf32>
    %171 = arith.addf %150, %170 : vector<8x32xf32>
    %172 = vector.extract_strided_slice %147 {offsets = [0, 8], sizes = [8, 8], strides = [1, 1]} : vector<8x32xbf16> to vector<8x8xbf16>
    %173 = vector.extract_strided_slice %148 {offsets = [0, 8], sizes = [8, 8], strides = [1, 1]} : vector<8x32xbf16> to vector<8x8xbf16>
    %cst_67 = arith.constant dense<0.000000e+00> : vector<8x8xf32>
    %174 = tpu.matmul %172, %173, %cst_67 {dimension_numbers = #tpu.dot_dimension_numbers<[1], [1], [0], [0], [0, 0, 1, 0], [], []>} : vector<8x8xbf16>, vector<8x8xbf16>, vector<8x8xf32> -> vector<8x8xf32>
    %175 = arith.addf %174, %7 : vector<8x8xf32>
    %cst_68 = arith.constant dense<0xFF800000> : vector<8xf32>
    %176 = vector.multi_reduction <maximumf>, %175, %cst_68 [1] : vector<8x8xf32> to vector<8xf32>
    %177 = vector.shape_cast %176 : vector<8xf32> to vector<8x1xf32>
    %178 = vector.broadcast %177 : vector<8x1xf32> to vector<8x8xf32>
    %179 = arith.subf %175, %178 : vector<8x8xf32>
    %180 = math.exp %179 : vector<8x8xf32>
    %cst_69 = arith.constant dense<0.000000e+00> : vector<8xf32>
    %181 = vector.multi_reduction <add>, %180, %cst_69 [1] : vector<8x8xf32> to vector<8xf32>
    %182 = vector.shape_cast %181 : vector<8xf32> to vector<8x1xf32>
    %183 = tpu.reciprocal %182 : vector<8x1xf32> -> vector<8x1xf32>
    %184 = vector.broadcast %183 : vector<8x1xf32> to vector<8x8xf32>
    %185 = arith.mulf %180, %184 : vector<8x8xf32>
    %186 = arith.truncf %185 : vector<8x8xf32> to vector<8x8xbf16>
    %187 = vector.extract_strided_slice %149 {offsets = [0, 8], sizes = [8, 8], strides = [1, 1]} : vector<8x32xbf16> to vector<8x8xbf16>
    %cst_70 = arith.constant dense<0.000000e+00> : vector<8x8xf32>
    %188 = tpu.matmul %186, %187, %cst_70 {dimension_numbers = #tpu.dot_dimension_numbers<[1], [0], [0], [1], [0, 0, 1, 1], [], []>} : vector<8x8xbf16>, vector<8x8xbf16>, vector<8x8xf32> -> vector<8x8xf32>
    %189 = arith.truncf %188 : vector<8x8xf32> to vector<8x8xbf16>
    %190 = vector.extract_strided_slice %146 {offsets = [8, 0], sizes = [8, 32], strides = [1, 1]} : vector<32x32xbf16> to vector<8x32xbf16>
    %cst_71 = arith.constant dense<0.000000e+00> : vector<8x32xf32>
    %191 = tpu.matmul %189, %190, %cst_71 {dimension_numbers = #tpu.dot_dimension_numbers<[1], [0], [0], [1], [0, 0, 1, 1], [], []>} : vector<8x8xbf16>, vector<8x32xbf16>, vector<8x32xf32> -> vector<8x32xf32>
    %192 = arith.addf %171, %191 : vector<8x32xf32>
    %193 = vector.extract_strided_slice %147 {offsets = [0, 16], sizes = [8, 8], strides = [1, 1]} : vector<8x32xbf16> to vector<8x8xbf16>
    %194 = vector.extract_strided_slice %148 {offsets = [0, 16], sizes = [8, 8], strides = [1, 1]} : vector<8x32xbf16> to vector<8x8xbf16>
    %cst_72 = arith.constant dense<0.000000e+00> : vector<8x8xf32>
    %195 = tpu.matmul %193, %194, %cst_72 {dimension_numbers = #tpu.dot_dimension_numbers<[1], [1], [0], [0], [0, 0, 1, 0], [], []>} : vector<8x8xbf16>, vector<8x8xbf16>, vector<8x8xf32> -> vector<8x8xf32>
    %196 = arith.addf %195, %7 : vector<8x8xf32>
    %cst_73 = arith.constant dense<0xFF800000> : vector<8xf32>
    %197 = vector.multi_reduction <maximumf>, %196, %cst_73 [1] : vector<8x8xf32> to vector<8xf32>
    %198 = vector.shape_cast %197 : vector<8xf32> to vector<8x1xf32>
    %199 = vector.broadcast %198 : vector<8x1xf32> to vector<8x8xf32>
    %200 = arith.subf %196, %199 : vector<8x8xf32>
    %201 = math.exp %200 : vector<8x8xf32>
    %cst_74 = arith.constant dense<0.000000e+00> : vector<8xf32>
    %202 = vector.multi_reduction <add>, %201, %cst_74 [1] : vector<8x8xf32> to vector<8xf32>
    %203 = vector.shape_cast %202 : vector<8xf32> to vector<8x1xf32>
    %204 = tpu.reciprocal %203 : vector<8x1xf32> -> vector<8x1xf32>
    %205 = vector.broadcast %204 : vector<8x1xf32> to vector<8x8xf32>
    %206 = arith.mulf %201, %205 : vector<8x8xf32>
    %207 = arith.truncf %206 : vector<8x8xf32> to vector<8x8xbf16>
    %208 = vector.extract_strided_slice %149 {offsets = [0, 16], sizes = [8, 8], strides = [1, 1]} : vector<8x32xbf16> to vector<8x8xbf16>
    %cst_75 = arith.constant dense<0.000000e+00> : vector<8x8xf32>
    %209 = tpu.matmul %207, %208, %cst_75 {dimension_numbers = #tpu.dot_dimension_numbers<[1], [0], [0], [1], [0, 0, 1, 1], [], []>} : vector<8x8xbf16>, vector<8x8xbf16>, vector<8x8xf32> -> vector<8x8xf32>
    %210 = arith.truncf %209 : vector<8x8xf32> to vector<8x8xbf16>
    %211 = vector.extract_strided_slice %146 {offsets = [16, 0], sizes = [8, 32], strides = [1, 1]} : vector<32x32xbf16> to vector<8x32xbf16>
    %cst_76 = arith.constant dense<0.000000e+00> : vector<8x32xf32>
    %212 = tpu.matmul %210, %211, %cst_76 {dimension_numbers = #tpu.dot_dimension_numbers<[1], [0], [0], [1], [0, 0, 1, 1], [], []>} : vector<8x8xbf16>, vector<8x32xbf16>, vector<8x32xf32> -> vector<8x32xf32>
    %213 = arith.addf %192, %212 : vector<8x32xf32>
    %214 = vector.extract_strided_slice %147 {offsets = [0, 24], sizes = [8, 8], strides = [1, 1]} : vector<8x32xbf16> to vector<8x8xbf16>
    %215 = vector.extract_strided_slice %148 {offsets = [0, 24], sizes = [8, 8], strides = [1, 1]} : vector<8x32xbf16> to vector<8x8xbf16>
    %cst_77 = arith.constant dense<0.000000e+00> : vector<8x8xf32>
    %216 = tpu.matmul %214, %215, %cst_77 {dimension_numbers = #tpu.dot_dimension_numbers<[1], [1], [0], [0], [0, 0, 1, 0], [], []>} : vector<8x8xbf16>, vector<8x8xbf16>, vector<8x8xf32> -> vector<8x8xf32>
    %217 = arith.addf %216, %7 : vector<8x8xf32>
    %cst_78 = arith.constant dense<0xFF800000> : vector<8xf32>
    %218 = vector.multi_reduction <maximumf>, %217, %cst_78 [1] : vector<8x8xf32> to vector<8xf32>
    %219 = vector.shape_cast %218 : vector<8xf32> to vector<8x1xf32>
    %220 = vector.broadcast %219 : vector<8x1xf32> to vector<8x8xf32>
    %221 = arith.subf %217, %220 : vector<8x8xf32>
    %222 = math.exp %221 : vector<8x8xf32>
    %cst_79 = arith.constant dense<0.000000e+00> : vector<8xf32>
    %223 = vector.multi_reduction <add>, %222, %cst_79 [1] : vector<8x8xf32> to vector<8xf32>
    %224 = vector.shape_cast %223 : vector<8xf32> to vector<8x1xf32>
    %225 = tpu.reciprocal %224 : vector<8x1xf32> -> vector<8x1xf32>
    %226 = vector.broadcast %225 : vector<8x1xf32> to vector<8x8xf32>
    %227 = arith.mulf %222, %226 : vector<8x8xf32>
    %228 = arith.truncf %227 : vector<8x8xf32> to vector<8x8xbf16>
    %229 = vector.extract_strided_slice %149 {offsets = [0, 24], sizes = [8, 8], strides = [1, 1]} : vector<8x32xbf16> to vector<8x8xbf16>
    %cst_80 = arith.constant dense<0.000000e+00> : vector<8x8xf32>
    %230 = tpu.matmul %228, %229, %cst_80 {dimension_numbers = #tpu.dot_dimension_numbers<[1], [0], [0], [1], [0, 0, 1, 1], [], []>} : vector<8x8xbf16>, vector<8x8xbf16>, vector<8x8xf32> -> vector<8x8xf32>
    %231 = arith.truncf %230 : vector<8x8xf32> to vector<8x8xbf16>
    %232 = vector.extract_strided_slice %146 {offsets = [24, 0], sizes = [8, 32], strides = [1, 1]} : vector<32x32xbf16> to vector<8x32xbf16>
    %cst_81 = arith.constant dense<0.000000e+00> : vector<8x32xf32>
    %233 = tpu.matmul %231, %232, %cst_81 {dimension_numbers = #tpu.dot_dimension_numbers<[1], [0], [0], [1], [0, 0, 1, 1], [], []>} : vector<8x8xbf16>, vector<8x32xbf16>, vector<8x32xf32> -> vector<8x32xf32>
    %234 = arith.addf %213, %233 : vector<8x32xf32>
    %c0_82 = arith.constant 0 : index
    %c0_83 = arith.constant 0 : index
    %235 = vector.load %arg16[%c0_82, %c0_83] : memref<1x32xf32, #tpu.memory_space<vmem>>, vector<1x32xf32>
    %236 = vector.broadcast %235 : vector<1x32xf32> to vector<8x32xf32>
    %237 = arith.addf %234, %236 : vector<8x32xf32>
    %238 = arith.addf %237, %132 : vector<8x32xf32>
    %c0_84 = arith.constant 0 : index
    %c0_85 = arith.constant 0 : index
    %239 = vector.load %arg17[%c0_84, %c0_85] : memref<1x32xf32, #tpu.memory_space<vmem>>, vector<1x32xf32>
    %c0_86 = arith.constant 0 : index
    %c0_87 = arith.constant 0 : index
    %240 = vector.load %arg18[%c0_86, %c0_87] : memref<1x32xf32, #tpu.memory_space<vmem>>, vector<1x32xf32>
    %cst_88 = arith.constant dense<0.000000e+00> : vector<8xf32>
    %241 = vector.multi_reduction <add>, %238, %cst_88 [1] : vector<8x32xf32> to vector<8xf32>
    %242 = vector.shape_cast %241 : vector<8xf32> to vector<8x1xf32>
    %cst_89 = arith.constant 3.200000e+01 : f32
    %243 = vector.broadcast %cst_89 : f32 to vector<8x1xf32>
    %244 = arith.divf %242, %243 : vector<8x1xf32>
    %245 = vector.broadcast %244 : vector<8x1xf32> to vector<8x32xf32>
    %246 = arith.subf %238, %245 : vector<8x32xf32>
    %247 = arith.mulf %246, %246 : vector<8x32xf32>
    %cst_90 = arith.constant dense<0.000000e+00> : vector<8xf32>
    %248 = vector.multi_reduction <add>, %247, %cst_90 [1] : vector<8x32xf32> to vector<8xf32>
    %249 = vector.shape_cast %248 : vector<8xf32> to vector<8x1xf32>
    %cst_91 = arith.constant 3.200000e+01 : f32
    %250 = vector.broadcast %cst_91 : f32 to vector<8x1xf32>
    %251 = arith.divf %249, %250 : vector<8x1xf32>
    %cst_92 = arith.constant 9.99999996E-13 : f32
    %252 = vector.broadcast %cst_92 : f32 to vector<8x1xf32>
    %253 = arith.addf %251, %252 : vector<8x1xf32>
    %254 = math.rsqrt %253 : vector<8x1xf32>
    %255 = vector.broadcast %254 : vector<8x1xf32> to vector<8x32xf32>
    %256 = arith.mulf %246, %255 : vector<8x32xf32>
    %257 = vector.broadcast %239 : vector<1x32xf32> to vector<8x32xf32>
    %258 = arith.mulf %257, %256 : vector<8x32xf32>
    %259 = vector.broadcast %240 : vector<1x32xf32> to vector<8x32xf32>
    %260 = arith.addf %258, %259 : vector<8x32xf32>
    %261 = arith.truncf %260 : vector<8x32xf32> to vector<8x32xbf16>
    %c0_93 = arith.constant 0 : index
    %c0_94 = arith.constant 0 : index
    %262 = vector.load %arg19[%c0_93, %c0_94] : memref<32x64xbf16, #tpu.memory_space<vmem>>, vector<32x64xbf16>
    %cst_95 = arith.constant dense<0.000000e+00> : vector<8x64xf32>
    %263 = tpu.matmul %261, %262, %cst_95 {dimension_numbers = #tpu.dot_dimension_numbers<[1], [0], [0], [1], [0, 0, 1, 1], [], []>} : vector<8x32xbf16>, vector<32x64xbf16>, vector<8x64xf32> -> vector<8x64xf32>
    %c0_96 = arith.constant 0 : index
    %c0_97 = arith.constant 0 : index
    %264 = vector.load %arg20[%c0_96, %c0_97] : memref<1x64xf32, #tpu.memory_space<vmem>>, vector<1x64xf32>
    %265 = vector.broadcast %264 : vector<1x64xf32> to vector<8x64xf32>
    %266 = arith.addf %263, %265 : vector<8x64xf32>
    %cst_98 = arith.constant 0.000000e+00 : f32
    %267 = vector.broadcast %cst_98 : f32 to vector<8x64xf32>
    %268 = arith.maximumf %266, %267 : vector<8x64xf32>
    %269 = arith.truncf %268 : vector<8x64xf32> to vector<8x64xbf16>
    %c0_99 = arith.constant 0 : index
    %c0_100 = arith.constant 0 : index
    %270 = vector.load %arg21[%c0_99, %c0_100] : memref<64x32xbf16, #tpu.memory_space<vmem>>, vector<64x32xbf16>
    %cst_101 = arith.constant dense<0.000000e+00> : vector<8x32xf32>
    %271 = tpu.matmul %269, %270, %cst_101 {dimension_numbers = #tpu.dot_dimension_numbers<[1], [0], [0], [1], [0, 0, 1, 1], [], []>} : vector<8x64xbf16>, vector<64x32xbf16>, vector<8x32xf32> -> vector<8x32xf32>
    %c0_102 = arith.constant 0 : index
    %c0_103 = arith.constant 0 : index
    %272 = vector.load %arg22[%c0_102, %c0_103] : memref<1x32xf32, #tpu.memory_space<vmem>>, vector<1x32xf32>
    %273 = vector.broadcast %272 : vector<1x32xf32> to vector<8x32xf32>
    %274 = arith.addf %271, %273 : vector<8x32xf32>
    %275 = arith.addf %274, %260 : vector<8x32xf32>
    %c0_104 = arith.constant 0 : index
    %c0_105 = arith.constant 0 : index
    %276 = vector.load %arg23[%c0_104, %c0_105] : memref<1x32xf32, #tpu.memory_space<vmem>>, vector<1x32xf32>
    %c0_106 = arith.constant 0 : index
    %c0_107 = arith.constant 0 : index
    %277 = vector.load %arg24[%c0_106, %c0_107] : memref<1x32xf32, #tpu.memory_space<vmem>>, vector<1x32xf32>
    %cst_108 = arith.constant dense<0.000000e+00> : vector<8xf32>
    %278 = vector.multi_reduction <add>, %275, %cst_108 [1] : vector<8x32xf32> to vector<8xf32>
    %279 = vector.shape_cast %278 : vector<8xf32> to vector<8x1xf32>
    %cst_109 = arith.constant 3.200000e+01 : f32
    %280 = vector.broadcast %cst_109 : f32 to vector<8x1xf32>
    %281 = arith.divf %279, %280 : vector<8x1xf32>
    %282 = vector.broadcast %281 : vector<8x1xf32> to vector<8x32xf32>
    %283 = arith.subf %275, %282 : vector<8x32xf32>
    %284 = arith.mulf %283, %283 : vector<8x32xf32>
    %cst_110 = arith.constant dense<0.000000e+00> : vector<8xf32>
    %285 = vector.multi_reduction <add>, %284, %cst_110 [1] : vector<8x32xf32> to vector<8xf32>
    %286 = vector.shape_cast %285 : vector<8xf32> to vector<8x1xf32>
    %cst_111 = arith.constant 3.200000e+01 : f32
    %287 = vector.broadcast %cst_111 : f32 to vector<8x1xf32>
    %288 = arith.divf %286, %287 : vector<8x1xf32>
    %cst_112 = arith.constant 9.99999996E-13 : f32
    %289 = vector.broadcast %cst_112 : f32 to vector<8x1xf32>
    %290 = arith.addf %288, %289 : vector<8x1xf32>
    %291 = math.rsqrt %290 : vector<8x1xf32>
    %292 = vector.broadcast %291 : vector<8x1xf32> to vector<8x32xf32>
    %293 = arith.mulf %283, %292 : vector<8x32xf32>
    %294 = vector.broadcast %276 : vector<1x32xf32> to vector<8x32xf32>
    %295 = arith.mulf %294, %293 : vector<8x32xf32>
    %296 = vector.broadcast %277 : vector<1x32xf32> to vector<8x32xf32>
    %297 = arith.addf %295, %296 : vector<8x32xf32>
    %c0_113 = arith.constant 0 : index
    %c0_114 = arith.constant 0 : index
    %c0_115 = arith.constant 0 : index
    %298 = vector.load %arg25[%c0_113, %c0_114, %c0_115] : memref<1x8x32xf32, #tpu.memory_space<vmem>>, vector<1x8x32xf32>
    %299 = vector.shape_cast %298 : vector<1x8x32xf32> to vector<8x32xf32>
    %300 = vector.shape_cast %297 : vector<8x32xf32> to vector<1x8x32xf32>
    tpu.vector_store %arg25[%c0_113, %c0_114, %c0_115], %300 {strides = array<i32>} : memref<1x8x32xf32, #tpu.memory_space<vmem>>, vector<1x8x32xf32>,
    return
  }
  func.func @transform_0(%arg0: i32) -> (i32, i32, i32) {
    %c0_i32 = arith.constant 0 : i32
    %c0_i32_0 = arith.constant 0 : i32
    %c0_i32_1 = arith.constant 0 : i32
    return %arg0, %c0_i32, %c0_i32_0 : i32, i32, i32
  }
  func.func @transform_1(%arg0: i32) -> (i32, i32, i32) {
    %c0_i32 = arith.constant 0 : i32
    %c0_i32_0 = arith.constant 0 : i32
    %c0_i32_1 = arith.constant 0 : i32
    return %arg0, %c0_i32, %c0_i32_0 : i32, i32, i32
  }
  func.func @transform_2(%arg0: i32) -> (i32, i32, i32) {
    %c0_i32 = arith.constant 0 : i32
    %c0_i32_0 = arith.constant 0 : i32
    %c0_i32_1 = arith.constant 0 : i32
    return %arg0, %c0_i32, %c0_i32_0 : i32, i32, i32
  }
  func.func @transform_3(%arg0: i32) -> (i32, i32, i32) {
    %c0_i32 = arith.constant 0 : i32
    %c0_i32_0 = arith.constant 0 : i32
    %c0_i32_1 = arith.constant 0 : i32
    return %arg0, %c0_i32, %c0_i32_0 : i32, i32, i32
  }
  func.func @transform_4(%arg0: i32) -> (i32, i32) {
    %c0_i32 = arith.constant 0 : i32
    %c0_i32_0 = arith.constant 0 : i32
    %c0_i32_1 = arith.constant 0 : i32
    return %c0_i32, %c0_i32_0 : i32, i32
  }
  func.func @transform_5(%arg0: i32) -> (i32, i32) {
    %c0_i32 = arith.constant 0 : i32
    %c0_i32_0 = arith.constant 0 : i32
    %c0_i32_1 = arith.constant 0 : i32
    return %c0_i32, %c0_i32_0 : i32, i32
  }
  func.func @transform_6(%arg0: i32) -> (i32, i32) {
    %c0_i32 = arith.constant 0 : i32
    %c0_i32_0 = arith.constant 0 : i32
    %c0_i32_1 = arith.constant 0 : i32
    return %c0_i32, %c0_i32_0 : i32, i32
  }
  func.func @transform_7(%arg0: i32) -> (i32, i32) {
    %c0_i32 = arith.constant 0 : i32
    %c0_i32_0 = arith.constant 0 : i32
    %c0_i32_1 = arith.constant 0 : i32
    return %c0_i32, %c0_i32_0 : i32, i32
  }
  func.func @transform_8(%arg0: i32) -> (i32, i32) {
    %c0_i32 = arith.constant 0 : i32
    %c0_i32_0 = arith.constant 0 : i32
    %c0_i32_1 = arith.constant 0 : i32
    return %c0_i32, %c0_i32_0 : i32, i32
  }
  func.func @transform_9(%arg0: i32) -> (i32, i32) {
    %c0_i32 = arith.constant 0 : i32
    %c0_i32_0 = arith.constant 0 : i32
    %c0_i32_1 = arith.constant 0 : i32
    return %c0_i32, %c0_i32_0 : i32, i32
  }
  func.func @transform_10(%arg0: i32) -> (i32, i32) {
    %c0_i32 = arith.constant 0 : i32
    %c0_i32_0 = arith.constant 0 : i32
    %c0_i32_1 = arith.constant 0 : i32
    return %c0_i32, %c0_i32_0 : i32, i32
  }
  func.func @transform_11(%arg0: i32) -> (i32, i32) {
    %c0_i32 = arith.constant 0 : i32
    %c0_i32_0 = arith.constant 0 : i32
    %c0_i32_1 = arith.constant 0 : i32
    return %c0_i32, %c0_i32_0 : i32, i32
  }
  func.func @transform_12(%arg0: i32) -> (i32, i32) {
    %c0_i32 = arith.constant 0 : i32
    %c0_i32_0 = arith.constant 0 : i32
    %c0_i32_1 = arith.constant 0 : i32
    return %c0_i32, %c0_i32_0 : i32, i32
  }
  func.func @transform_13(%arg0: i32) -> (i32, i32) {
    %c0_i32 = arith.constant 0 : i32
    %c0_i32_0 = arith.constant 0 : i32
    %c0_i32_1 = arith.constant 0 : i32
    return %c0_i32, %c0_i32_0 : i32, i32
  }
  func.func @transform_14(%arg0: i32) -> (i32, i32) {
    %c0_i32 = arith.constant 0 : i32
    %c0_i32_0 = arith.constant 0 : i32
    %c0_i32_1 = arith.constant 0 : i32
    return %c0_i32, %c0_i32_0 : i32, i32
  }
  func.func @transform_15(%arg0: i32) -> (i32, i32) {
    %c0_i32 = arith.constant 0 : i32
    %c0_i32_0 = arith.constant 0 : i32
    %c0_i32_1 = arith.constant 0 : i32
    return %c0_i32, %c0_i32_0 : i32, i32
  }
  func.func @transform_16(%arg0: i32) -> (i32, i32) {
    %c0_i32 = arith.constant 0 : i32
    %c0_i32_0 = arith.constant 0 : i32
    %c0_i32_1 = arith.constant 0 : i32
    return %c0_i32, %c0_i32_0 : i32, i32
  }
  func.func @transform_17(%arg0: i32) -> (i32, i32) {
    %c0_i32 = arith.constant 0 : i32
    %c0_i32_0 = arith.constant 0 : i32
    %c0_i32_1 = arith.constant 0 : i32
    return %c0_i32, %c0_i32_0 : i32, i32
  }
  func.func @transform_18(%arg0: i32) -> (i32, i32) {
    %c0_i32 = arith.constant 0 : i32
    %c0_i32_0 = arith.constant 0 : i32
    %c0_i32_1 = arith.constant 0 : i32
    return %c0_i32, %c0_i32_0 : i32, i32
  }
  func.func @transform_19(%arg0: i32) -> (i32, i32) {
    %c0_i32 = arith.constant 0 : i32
    %c0_i32_0 = arith.constant 0 : i32
    %c0_i32_1 = arith.constant 0 : i32
    return %c0_i32, %c0_i32_0 : i32, i32
  }
  func.func @transform_20(%arg0: i32) -> (i32, i32) {
    %c0_i32 = arith.constant 0 : i32
    %c0_i32_0 = arith.constant 0 : i32
    %c0_i32_1 = arith.constant 0 : i32
    return %c0_i32, %c0_i32_0 : i32, i32
  }
  func.func @transform_21(%arg0: i32) -> (i32, i32) {
    %c0_i32 = arith.constant 0 : i32
    %c0_i32_0 = arith.constant 0 : i32
    %c0_i32_1 = arith.constant 0 : i32
    return %c0_i32, %c0_i32_0 : i32, i32
  }
  func.func @transform_22(%arg0: i32) -> (i32, i32) {
    %c0_i32 = arith.constant 0 : i32
    %c0_i32_0 = arith.constant 0 : i32
    %c0_i32_1 = arith.constant 0 : i32
    return %c0_i32, %c0_i32_0 : i32, i32
  }
  func.func @transform_23(%arg0: i32) -> (i32, i32) {
    %c0_i32 = arith.constant 0 : i32
    %c0_i32_0 = arith.constant 0 : i32
    %c0_i32_1 = arith.constant 0 : i32
    return %c0_i32, %c0_i32_0 : i32, i32
  }
  func.func @transform_24(%arg0: i32) -> (i32, i32, i32) {
    %c0_i32 = arith.constant 0 : i32
    %c0_i32_0 = arith.constant 0 : i32
    %c0_i32_1 = arith.constant 0 : i32
    return %arg0, %c0_i32, %c0_i32_0 : i32, i32, i32
  }
}

module attributes {stable_mosaic.version = 11 : i64} {
  func.func @_decoder_layer_kernel(%arg0: i32, %arg1: memref<1x8x8xf32, #tpu.memory_space<vmem>>, %arg2: memref<1x8x8xf32, #tpu.memory_space<vmem>>, %arg3: memref<1x8x32xf32, #tpu.memory_space<vmem>>, %arg4: memref<1x8x32xf32, #tpu.memory_space<vmem>>, %arg5: memref<32x96xbf16, #tpu.memory_space<vmem>>, %arg6: memref<1x96xf32, #tpu.memory_space<vmem>>, %arg7: memref<32x32xbf16, #tpu.memory_space<vmem>>, %arg8: memref<1x32xf32, #tpu.memory_space<vmem>>, %arg9: memref<1x32xf32, #tpu.memory_space<vmem>>, %arg10: memref<1x32xf32, #tpu.memory_space<vmem>>, %arg11: memref<32x32xbf16, #tpu.memory_space<vmem>>, %arg12: memref<1x32xf32, #tpu.memory_space<vmem>>, %arg13: memref<32x64xbf16, #tpu.memory_space<vmem>>, %arg14: memref<1x64xf32, #tpu.memory_space<vmem>>, %arg15: memref<32x32xbf16, #tpu.memory_space<vmem>>, %arg16: memref<1x32xf32, #tpu.memory_space<vmem>>, %arg17: memref<1x32xf32, #tpu.memory_space<vmem>>, %arg18: memref<1x32xf32, #tpu.memory_space<vmem>>, %arg19: memref<32x64xbf16, #tpu.memory_space<vmem>>, %arg20: memref<1x64xf32, #tpu.memory_space<vmem>>, %arg21: memref<64x32xbf16, #tpu.memory_space<vmem>>, %arg22: memref<1x32xf32, #tpu.memory_space<vmem>>, %arg23: memref<1x32xf32, #tpu.memory_space<vmem>>, %arg24: memref<1x32xf32, #tpu.memory_space<vmem>>, %arg25: memref<1x8x32xf32, #tpu.memory_space<vmem>>) attributes {dimension_semantics = [#tpu.dimension_semantics<parallel>], iteration_bounds = array<i64: 2>, scalar_prefetch = 0 : i64, scratch_operands = 0 : i64, tpu.core_type = #tpu.core_type<tc>, window_params = [{transform_indices = @transform_0, window_bounds = array<i64: 1, 8, 8>}, {transform_indices = @transform_1, window_bounds = array<i64: 1, 8, 8>}, {transform_indices = @transform_2, window_bounds = array<i64: 1, 8, 32>}, {transform_indices = @transform_3, window_bounds = array<i64: 1, 8, 32>}, {pipeline_mode = #tpu.pipeline_mode<synchronous>, transform_indices = @transform_4, window_bounds = array<i64: 32, 96>}, {pipeline_mode = #tpu.pipeline_mode<synchronous>, transform_indices = @transform_5, window_bounds = array<i64: 1, 96>}, {pipeline_mode = #tpu.pipeline_mode<synchronous>, transform_indices = @transform_6, window_bounds = array<i64: 32, 32>}, {pipeline_mode = #tpu.pipeline_mode<synchronous>, transform_indices = @transform_7, window_bounds = array<i64: 1, 32>}, {pipeline_mode = #tpu.pipeline_mode<synchronous>, transform_indices = @transform_8, window_bounds = array<i64: 1, 32>}, {pipeline_mode = #tpu.pipeline_mode<synchronous>, transform_indices = @transform_9, window_bounds = array<i64: 1, 32>}, {pipeline_mode = #tpu.pipeline_mode<synchronous>, transform_indices = @transform_10, window_bounds = array<i64: 32, 32>}, {pipeline_mode = #tpu.pipeline_mode<synchronous>, transform_indices = @transform_11, window_bounds = array<i64: 1, 32>}, {pipeline_mode = #tpu.pipeline_mode<synchronous>, transform_indices = @transform_12, window_bounds = array<i64: 32, 64>}, {pipeline_mode = #tpu.pipeline_mode<synchronous>, transform_indices = @transform_13, window_bounds = array<i64: 1, 64>}, {pipeline_mode = #tpu.pipeline_mode<synchronous>, transform_indices = @transform_14, window_bounds = array<i64: 32, 32>}, {pipeline_mode = #tpu.pipeline_mode<synchronous>, transform_indices = @transform_15, window_bounds = array<i64: 1, 32>}, {pipeline_mode = #tpu.pipeline_mode<synchronous>, transform_indices = @transform_16, window_bounds = array<i64: 1, 32>}, {pipeline_mode = #tpu.pipeline_mode<synchronous>, transform_indices = @transform_17, window_bounds = array<i64: 1, 32>}, {pipeline_mode = #tpu.pipeline_mode<synchronous>, transform_indices = @transform_18, window_bounds = array<i64: 32, 64>}, {pipeline_mode = #tpu.pipeline_mode<synchronous>, transform_indices = @transform_19, window_bounds = array<i64: 1, 64>}, {pipeline_mode = #tpu.pipeline_mode<synchronous>, transform_indices = @transform_20, window_bounds = array<i64: 64, 32>}, {pipeline_mode = #tpu.pipeline_mode<synchronous>, transform_indices = @transform_21, window_bounds = array<i64: 1, 32>}, {pipeline_mode = #tpu.pipeline_mode<synchronous>, transform_indices = @transform_22, window_bounds = array<i64: 1, 32>}, {pipeline_mode = #tpu.pipeline_mode<synchronous>, transform_indices = @transform_23, window_bounds = array<i64: 1, 32>}, {transform_indices = @transform_24, window_bounds = array<i64: 1, 8, 32>}]} {
    %c0 = arith.constant 0 : index
    %c0_0 = arith.constant 0 : index
    %c0_1 = arith.constant 0 : index
    %0 = vector.load %arg3[%c0, %c0_0, %c0_1] : memref<1x8x32xf32, #tpu.memory_space<vmem>>, vector<1x8x32xf32>
    %1 = vector.shape_cast %0 : vector<1x8x32xf32> to vector<8x32xf32>
    %c0_2 = arith.constant 0 : index
    %c0_3 = arith.constant 0 : index
    %c0_4 = arith.constant 0 : index
    %2 = vector.load %arg4[%c0_2, %c0_3, %c0_4] : memref<1x8x32xf32, #tpu.memory_space<vmem>>, vector<1x8x32xf32>
    %3 = vector.shape_cast %2 : vector<1x8x32xf32> to vector<8x32xf32>
    %c0_5 = arith.constant 0 : index
    %c0_6 = arith.constant 0 : index
    %c0_7 = arith.constant 0 : index
    %4 = vector.load %arg1[%c0_5, %c0_6, %c0_7] : memref<1x8x8xf32, #tpu.memory_space<vmem>>, vector<1x8x8xf32>
    %5 = vector.shape_cast %4 : vector<1x8x8xf32> to vector<8x8xf32>
    %c0_8 = arith.constant 0 : index
    %c0_9 = arith.constant 0 : index
    %c0_10 = arith.constant 0 : index
    %6 = vector.load %arg2[%c0_8, %c0_9, %c0_10] : memref<1x8x8xf32, #tpu.memory_space<vmem>>, vector<1x8x8xf32>
    %7 = vector.shape_cast %6 : vector<1x8x8xf32> to vector<8x8xf32>
    %8 = arith.truncf %1 : vector<8x32xf32> to vector<8x32xbf16>
    %9 = arith.truncf %3 : vector<8x32xf32> to vector<8x32xbf16>
    %c0_11 = arith.constant 0 : index
    %c0_12 = arith.constant 0 : index
    %10 = vector.load %arg5[%c0_11, %c0_12] : memref<32x96xbf16, #tpu.memory_space<vmem>>, vector<32x96xbf16>
    %cst = arith.constant dense<0.000000e+00> : vector<8x96xf32>
    %11 = tpu.matmul %8, %10, %cst {dimension_numbers = #tpu.dot_dimension_numbers<[1], [0], [0], [1], [0, 0, 1, 1], [], []>} : vector<8x32xbf16>, vector<32x96xbf16>, vector<8x96xf32> -> vector<8x96xf32>
    %c0_13 = arith.constant 0 : index
    %c0_14 = arith.constant 0 : index
    %12 = vector.load %arg6[%c0_13, %c0_14] : memref<1x96xf32, #tpu.memory_space<vmem>>, vector<1x96xf32>
    %13 = vector.broadcast %12 : vector<1x96xf32> to vector<8x96xf32>
    %14 = arith.addf %11, %13 : vector<8x96xf32>
    %15 = vector.extract_strided_slice %14 {offsets = [0, 0], sizes = [8, 32], strides = [1, 1]} : vector<8x96xf32> to vector<8x32xf32>
    %16 = vector.extract_strided_slice %14 {offsets = [0, 32], sizes = [8, 32], strides = [1, 1]} : vector<8x96xf32> to vector<8x32xf32>
    %17 = vector.extract_strided_slice %14 {offsets = [0, 64], sizes = [8, 32], strides = [1, 1]} : vector<8x96xf32> to vector<8x32xf32>
    %c0_15 = arith.constant 0 : index
    %c0_16 = arith.constant 0 : index
    %18 = vector.load %arg7[%c0_15, %c0_16] : memref<32x32xbf16, #tpu.memory_space<vmem>>, vector<32x32xbf16>
    %19 = arith.truncf %15 : vector<8x32xf32> to vector<8x32xbf16>
    %20 = arith.truncf %16 : vector<8x32xf32> to vector<8x32xbf16>
    %21 = arith.truncf %17 : vector<8x32xf32> to vector<8x32xbf16>
    %cst_17 = arith.constant 0.000000e+00 : f32
    %22 = vector.broadcast %cst_17 : f32 to vector<8x32xf32>
    %23 = vector.extract_strided_slice %19 {offsets = [0, 0], sizes = [8, 8], strides = [1, 1]} : vector<8x32xbf16> to vector<8x8xbf16>
    %24 = vector.extract_strided_slice %20 {offsets = [0, 0], sizes = [8, 8], strides = [1, 1]} : vector<8x32xbf16> to vector<8x8xbf16>
    %cst_18 = arith.constant dense<0.000000e+00> : vector<8x8xf32>
    %25 = tpu.matmul %23, %24, %cst_18 {dimension_numbers = #tpu.dot_dimension_numbers<[1], [1], [0], [0], [0, 0, 1, 0], [], []>} : vector<8x8xbf16>, vector<8x8xbf16>, vector<8x8xf32> -> vector<8x8xf32>
    %26 = arith.addf %25, %5 : vector<8x8xf32>
    %cst_19 = arith.constant dense<0xFF800000> : vector<8xf32>
    %27 = vector.multi_reduction <maximumf>, %26, %cst_19 [1] : vector<8x8xf32> to vector<8xf32>
    %28 = vector.shape_cast %27 : vector<8xf32> to vector<8x1xf32>
    %29 = vector.broadcast %28 : vector<8x1xf32> to vector<8x8xf32>
    %30 = arith.subf %26, %29 : vector<8x8xf32>
    %31 = math.exp %30 : vector<8x8xf32>
    %cst_20 = arith.constant dense<0.000000e+00> : vector<8xf32>
    %32 = vector.multi_reduction <add>, %31, %cst_20 [1] : vector<8x8xf32> to vector<8xf32>
    %33 = vector.shape_cast %32 : vector<8xf32> to vector<8x1xf32>
    %34 = tpu.reciprocal %33 : vector<8x1xf32> -> vector<8x1xf32>
    %35 = vector.broadcast %34 : vector<8x1xf32> to vector<8x8xf32>
    %36 = arith.mulf %31, %35 : vector<8x8xf32>
    %37 = arith.truncf %36 : vector<8x8xf32> to vector<8x8xbf16>
    %38 = vector.extract_strided_slice %21 {offsets = [0, 0], sizes = [8, 8], strides = [1, 1]} : vector<8x32xbf16> to vector<8x8xbf16>
    %cst_21 = arith.constant dense<0.000000e+00> : vector<8x8xf32>
    %39 = tpu.matmul %37, %38, %cst_21 {dimension_numbers = #tpu.dot_dimension_numbers<[1], [0], [0], [1], [0, 0, 1, 1], [], []>} : vector<8x8xbf16>, vector<8x8xbf16>, vector<8x8xf32> -> vector<8x8xf32>
    %40 = arith.truncf %39 : vector<8x8xf32> to vector<8x8xbf16>
    %41 = vector.extract_strided_slice %18 {offsets = [0, 0], sizes = [8, 32], strides = [1, 1]} : vector<32x32xbf16> to vector<8x32xbf16>
    %cst_22 = arith.constant dense<0.000000e+00> : vector<8x32xf32>
    %42 = tpu.matmul %40, %41, %cst_22 {dimension_numbers = #tpu.dot_dimension_numbers<[1], [0], [0], [1], [0, 0, 1, 1], [], []>} : vector<8x8xbf16>, vector<8x32xbf16>, vector<8x32xf32> -> vector<8x32xf32>
    %43 = arith.addf %22, %42 : vector<8x32xf32>
    %44 = vector.extract_strided_slice %19 {offsets = [0, 8], sizes = [8, 8], strides = [1, 1]} : vector<8x32xbf16> to vector<8x8xbf16>
    %45 = vector.extract_strided_slice %20 {offsets = [0, 8], sizes = [8, 8], strides = [1, 1]} : vector<8x32xbf16> to vector<8x8xbf16>
    %cst_23 = arith.constant dense<0.000000e+00> : vector<8x8xf32>
    %46 = tpu.matmul %44, %45, %cst_23 {dimension_numbers = #tpu.dot_dimension_numbers<[1], [1], [0], [0], [0, 0, 1, 0], [], []>} : vector<8x8xbf16>, vector<8x8xbf16>, vector<8x8xf32> -> vector<8x8xf32>
    %47 = arith.addf %46, %5 : vector<8x8xf32>
    %cst_24 = arith.constant dense<0xFF800000> : vector<8xf32>
    %48 = vector.multi_reduction <maximumf>, %47, %cst_24 [1] : vector<8x8xf32> to vector<8xf32>
    %49 = vector.shape_cast %48 : vector<8xf32> to vector<8x1xf32>
    %50 = vector.broadcast %49 : vector<8x1xf32> to vector<8x8xf32>
    %51 = arith.subf %47, %50 : vector<8x8xf32>
    %52 = math.exp %51 : vector<8x8xf32>
    %cst_25 = arith.constant dense<0.000000e+00> : vector<8xf32>
    %53 = vector.multi_reduction <add>, %52, %cst_25 [1] : vector<8x8xf32> to vector<8xf32>
    %54 = vector.shape_cast %53 : vector<8xf32> to vector<8x1xf32>
    %55 = tpu.reciprocal %54 : vector<8x1xf32> -> vector<8x1xf32>
    %56 = vector.broadcast %55 : vector<8x1xf32> to vector<8x8xf32>
    %57 = arith.mulf %52, %56 : vector<8x8xf32>
    %58 = arith.truncf %57 : vector<8x8xf32> to vector<8x8xbf16>
    %59 = vector.extract_strided_slice %21 {offsets = [0, 8], sizes = [8, 8], strides = [1, 1]} : vector<8x32xbf16> to vector<8x8xbf16>
    %cst_26 = arith.constant dense<0.000000e+00> : vector<8x8xf32>
    %60 = tpu.matmul %58, %59, %cst_26 {dimension_numbers = #tpu.dot_dimension_numbers<[1], [0], [0], [1], [0, 0, 1, 1], [], []>} : vector<8x8xbf16>, vector<8x8xbf16>, vector<8x8xf32> -> vector<8x8xf32>
    %61 = arith.truncf %60 : vector<8x8xf32> to vector<8x8xbf16>
    %62 = vector.extract_strided_slice %18 {offsets = [8, 0], sizes = [8, 32], strides = [1, 1]} : vector<32x32xbf16> to vector<8x32xbf16>
    %cst_27 = arith.constant dense<0.000000e+00> : vector<8x32xf32>
    %63 = tpu.matmul %61, %62, %cst_27 {dimension_numbers = #tpu.dot_dimension_numbers<[1], [0], [0], [1], [0, 0, 1, 1], [], []>} : vector<8x8xbf16>, vector<8x32xbf16>, vector<8x32xf32> -> vector<8x32xf32>
    %64 = arith.addf %43, %63 : vector<8x32xf32>
    %65 = vector.extract_strided_slice %19 {offsets = [0, 16], sizes = [8, 8], strides = [1, 1]} : vector<8x32xbf16> to vector<8x8xbf16>
    %66 = vector.extract_strided_slice %20 {offsets = [0, 16], sizes = [8, 8], strides = [1, 1]} : vector<8x32xbf16> to vector<8x8xbf16>
    %cst_28 = arith.constant dense<0.000000e+00> : vector<8x8xf32>
    %67 = tpu.matmul %65, %66, %cst_28 {dimension_numbers = #tpu.dot_dimension_numbers<[1], [1], [0], [0], [0, 0, 1, 0], [], []>} : vector<8x8xbf16>, vector<8x8xbf16>, vector<8x8xf32> -> vector<8x8xf32>
    %68 = arith.addf %67, %5 : vector<8x8xf32>
    %cst_29 = arith.constant dense<0xFF800000> : vector<8xf32>
    %69 = vector.multi_reduction <maximumf>, %68, %cst_29 [1] : vector<8x8xf32> to vector<8xf32>
    %70 = vector.shape_cast %69 : vector<8xf32> to vector<8x1xf32>
    %71 = vector.broadcast %70 : vector<8x1xf32> to vector<8x8xf32>
    %72 = arith.subf %68, %71 : vector<8x8xf32>
    %73 = math.exp %72 : vector<8x8xf32>
    %cst_30 = arith.constant dense<0.000000e+00> : vector<8xf32>
    %74 = vector.multi_reduction <add>, %73, %cst_30 [1] : vector<8x8xf32> to vector<8xf32>
    %75 = vector.shape_cast %74 : vector<8xf32> to vector<8x1xf32>
    %76 = tpu.reciprocal %75 : vector<8x1xf32> -> vector<8x1xf32>
    %77 = vector.broadcast %76 : vector<8x1xf32> to vector<8x8xf32>
    %78 = arith.mulf %73, %77 : vector<8x8xf32>
    %79 = arith.truncf %78 : vector<8x8xf32> to vector<8x8xbf16>
    %80 = vector.extract_strided_slice %21 {offsets = [0, 16], sizes = [8, 8], strides = [1, 1]} : vector<8x32xbf16> to vector<8x8xbf16>
    %cst_31 = arith.constant dense<0.000000e+00> : vector<8x8xf32>
    %81 = tpu.matmul %79, %80, %cst_31 {dimension_numbers = #tpu.dot_dimension_numbers<[1], [0], [0], [1], [0, 0, 1, 1], [], []>} : vector<8x8xbf16>, vector<8x8xbf16>, vector<8x8xf32> -> vector<8x8xf32>
    %82 = arith.truncf %81 : vector<8x8xf32> to vector<8x8xbf16>
    %83 = vector.extract_strided_slice %18 {offsets = [16, 0], sizes = [8, 32], strides = [1, 1]} : vector<32x32xbf16> to vector<8x32xbf16>
    %cst_32 = arith.constant dense<0.000000e+00> : vector<8x32xf32>
    %84 = tpu.matmul %82, %83, %cst_32 {dimension_numbers = #tpu.dot_dimension_numbers<[1], [0], [0], [1], [0, 0, 1, 1], [], []>} : vector<8x8xbf16>, vector<8x32xbf16>, vector<8x32xf32> -> vector<8x32xf32>
    %85 = arith.addf %64, %84 : vector<8x32xf32>
    %86 = vector.extract_strided_slice %19 {offsets = [0, 24], sizes = [8, 8], strides = [1, 1]} : vector<8x32xbf16> to vector<8x8xbf16>
    %87 = vector.extract_strided_slice %20 {offsets = [0, 24], sizes = [8, 8], strides = [1, 1]} : vector<8x32xbf16> to vector<8x8xbf16>
    %cst_33 = arith.constant dense<0.000000e+00> : vector<8x8xf32>
    %88 = tpu.matmul %86, %87, %cst_33 {dimension_numbers = #tpu.dot_dimension_numbers<[1], [1], [0], [0], [0, 0, 1, 0], [], []>} : vector<8x8xbf16>, vector<8x8xbf16>, vector<8x8xf32> -> vector<8x8xf32>
    %89 = arith.addf %88, %5 : vector<8x8xf32>
    %cst_34 = arith.constant dense<0xFF800000> : vector<8xf32>
    %90 = vector.multi_reduction <maximumf>, %89, %cst_34 [1] : vector<8x8xf32> to vector<8xf32>
    %91 = vector.shape_cast %90 : vector<8xf32> to vector<8x1xf32>
    %92 = vector.broadcast %91 : vector<8x1xf32> to vector<8x8xf32>
    %93 = arith.subf %89, %92 : vector<8x8xf32>
    %94 = math.exp %93 : vector<8x8xf32>
    %cst_35 = arith.constant dense<0.000000e+00> : vector<8xf32>
    %95 = vector.multi_reduction <add>, %94, %cst_35 [1] : vector<8x8xf32> to vector<8xf32>
    %96 = vector.shape_cast %95 : vector<8xf32> to vector<8x1xf32>
    %97 = tpu.reciprocal %96 : vector<8x1xf32> -> vector<8x1xf32>
    %98 = vector.broadcast %97 : vector<8x1xf32> to vector<8x8xf32>
    %99 = arith.mulf %94, %98 : vector<8x8xf32>
    %100 = arith.truncf %99 : vector<8x8xf32> to vector<8x8xbf16>
    %101 = vector.extract_strided_slice %21 {offsets = [0, 24], sizes = [8, 8], strides = [1, 1]} : vector<8x32xbf16> to vector<8x8xbf16>
    %cst_36 = arith.constant dense<0.000000e+00> : vector<8x8xf32>
    %102 = tpu.matmul %100, %101, %cst_36 {dimension_numbers = #tpu.dot_dimension_numbers<[1], [0], [0], [1], [0, 0, 1, 1], [], []>} : vector<8x8xbf16>, vector<8x8xbf16>, vector<8x8xf32> -> vector<8x8xf32>
    %103 = arith.truncf %102 : vector<8x8xf32> to vector<8x8xbf16>
    %104 = vector.extract_strided_slice %18 {offsets = [24, 0], sizes = [8, 32], strides = [1, 1]} : vector<32x32xbf16> to vector<8x32xbf16>
    %cst_37 = arith.constant dense<0.000000e+00> : vector<8x32xf32>
    %105 = tpu.matmul %103, %104, %cst_37 {dimension_numbers = #tpu.dot_dimension_numbers<[1], [0], [0], [1], [0, 0, 1, 1], [], []>} : vector<8x8xbf16>, vector<8x32xbf16>, vector<8x32xf32> -> vector<8x32xf32>
    %106 = arith.addf %85, %105 : vector<8x32xf32>
    %c0_38 = arith.constant 0 : index
    %c0_39 = arith.constant 0 : index
    %107 = vector.load %arg8[%c0_38, %c0_39] : memref<1x32xf32, #tpu.memory_space<vmem>>, vector<1x32xf32>
    %108 = vector.broadcast %107 : vector<1x32xf32> to vector<8x32xf32>
    %109 = arith.addf %106, %108 : vector<8x32xf32>
    %110 = arith.addf %109, %1 : vector<8x32xf32>
    %c0_40 = arith.constant 0 : index
    %c0_41 = arith.constant 0 : index
    %111 = vector.load %arg9[%c0_40, %c0_41] : memref<1x32xf32, #tpu.memory_space<vmem>>, vector<1x32xf32>
    %c0_42 = arith.constant 0 : index
    %c0_43 = arith.constant 0 : index
    %112 = vector.load %arg10[%c0_42, %c0_43] : memref<1x32xf32, #tpu.memory_space<vmem>>, vector<1x32xf32>
    %cst_44 = arith.constant dense<0.000000e+00> : vector<8xf32>
    %113 = vector.multi_reduction <add>, %110, %cst_44 [1] : vector<8x32xf32> to vector<8xf32>
    %114 = vector.shape_cast %113 : vector<8xf32> to vector<8x1xf32>
    %cst_45 = arith.constant 3.200000e+01 : f32
    %115 = vector.broadcast %cst_45 : f32 to vector<8x1xf32>
    %116 = arith.divf %114, %115 : vector<8x1xf32>
    %117 = vector.broadcast %116 : vector<8x1xf32> to vector<8x32xf32>
    %118 = arith.subf %110, %117 : vector<8x32xf32>
    %119 = arith.mulf %118, %118 : vector<8x32xf32>
    %cst_46 = arith.constant dense<0.000000e+00> : vector<8xf32>
    %120 = vector.multi_reduction <add>, %119, %cst_46 [1] : vector<8x32xf32> to vector<8xf32>
    %121 = vector.shape_cast %120 : vector<8xf32> to vector<8x1xf32>
    %cst_47 = arith.constant 3.200000e+01 : f32
    %122 = vector.broadcast %cst_47 : f32 to vector<8x1xf32>
    %123 = arith.divf %121, %122 : vector<8x1xf32>
    %cst_48 = arith.constant 9.99999996E-13 : f32
    %124 = vector.broadcast %cst_48 : f32 to vector<8x1xf32>
    %125 = arith.addf %123, %124 : vector<8x1xf32>
    %126 = math.rsqrt %125 : vector<8x1xf32>
    %127 = vector.broadcast %126 : vector<8x1xf32> to vector<8x32xf32>
    %128 = arith.mulf %118, %127 : vector<8x32xf32>
    %129 = vector.broadcast %111 : vector<1x32xf32> to vector<8x32xf32>
    %130 = arith.mulf %129, %128 : vector<8x32xf32>
    %131 = vector.broadcast %112 : vector<1x32xf32> to vector<8x32xf32>
    %132 = arith.addf %130, %131 : vector<8x32xf32>
    %133 = arith.truncf %132 : vector<8x32xf32> to vector<8x32xbf16>
    %c0_49 = arith.constant 0 : index
    %c0_50 = arith.constant 0 : index
    %134 = vector.load %arg11[%c0_49, %c0_50] : memref<32x32xbf16, #tpu.memory_space<vmem>>, vector<32x32xbf16>
    %cst_51 = arith.constant dense<0.000000e+00> : vector<8x32xf32>
    %135 = tpu.matmul %133, %134, %cst_51 {dimension_numbers = #tpu.dot_dimension_numbers<[1], [0], [0], [1], [0, 0, 1, 1], [], []>} : vector<8x32xbf16>, vector<32x32xbf16>, vector<8x32xf32> -> vector<8x32xf32>
    %c0_52 = arith.constant 0 : index
    %c0_53 = arith.constant 0 : index
    %136 = vector.load %arg12[%c0_52, %c0_53] : memref<1x32xf32, #tpu.memory_space<vmem>>, vector<1x32xf32>
    %137 = vector.broadcast %136 : vector<1x32xf32> to vector<8x32xf32>
    %138 = arith.addf %135, %137 : vector<8x32xf32>
    %c0_54 = arith.constant 0 : index
    %c0_55 = arith.constant 0 : index
    %139 = vector.load %arg13[%c0_54, %c0_55] : memref<32x64xbf16, #tpu.memory_space<vmem>>, vector<32x64xbf16>
    %cst_56 = arith.constant dense<0.000000e+00> : vector<8x64xf32>
    %140 = tpu.matmul %9, %139, %cst_56 {dimension_numbers = #tpu.dot_dimension_numbers<[1], [0], [0], [1], [0, 0, 1, 1], [], []>} : vector<8x32xbf16>, vector<32x64xbf16>, vector<8x64xf32> -> vector<8x64xf32>
    %c0_57 = arith.constant 0 : index
    %c0_58 = arith.constant 0 : index
    %141 = vector.load %arg14[%c0_57, %c0_58] : memref<1x64xf32, #tpu.memory_space<vmem>>, vector<1x64xf32>
    %142 = vector.broadcast %141 : vector<1x64xf32> to vector<8x64xf32>
    %143 = arith.addf %140, %142 : vector<8x64xf32>
    %144 = vector.extract_strided_slice %143 {offsets = [0, 0], sizes = [8, 32], strides = [1, 1]} : vector<8x64xf32> to vector<8x32xf32>
    %145 = vector.extract_strided_slice %143 {offsets = [0, 32], sizes = [8, 32], strides = [1, 1]} : vector<8x64xf32> to vector<8x32xf32>
    %c0_59 = arith.constant 0 : index
    %c0_60 = arith.constant 0 : index
    %146 = vector.load %arg15[%c0_59, %c0_60] : memref<32x32xbf16, #tpu.memory_space<vmem>>, vector<32x32xbf16>
    %147 = arith.truncf %138 : vector<8x32xf32> to vector<8x32xbf16>
    %148 = arith.truncf %144 : vector<8x32xf32> to vector<8x32xbf16>
    %149 = arith.truncf %145 : vector<8x32xf32> to vector<8x32xbf16>
    %cst_61 = arith.constant 0.000000e+00 : f32
    %150 = vector.broadcast %cst_61 : f32 to vector<8x32xf32>
    %151 = vector.extract_strided_slice %147 {offsets = [0, 0], sizes = [8, 8], strides = [1, 1]} : vector<8x32xbf16> to vector<8x8xbf16>
    %152 = vector.extract_strided_slice %148 {offsets = [0, 0], sizes = [8, 8], strides = [1, 1]} : vector<8x32xbf16> to vector<8x8xbf16>
    %cst_62 = arith.constant dense<0.000000e+00> : vector<8x8xf32>
    %153 = tpu.matmul %151, %152, %cst_62 {dimension_numbers = #tpu.dot_dimension_numbers<[1], [1], [0], [0], [0, 0, 1, 0], [], []>} : vector<8x8xbf16>, vector<8x8xbf16>, vector<8x8xf32> -> vector<8x8xf32>
    %154 = arith.addf %153, %7 : vector<8x8xf32>
    %cst_63 = arith.constant dense<0xFF800000> : vector<8xf32>
    %155 = vector.multi_reduction <maximumf>, %154, %cst_63 [1] : vector<8x8xf32> to vector<8xf32>
    %156 = vector.shape_cast %155 : vector<8xf32> to vector<8x1xf32>
    %157 = vector.broadcast %156 : vector<8x1xf32> to vector<8x8xf32>
    %158 = arith.subf %154, %157 : vector<8x8xf32>
    %159 = math.exp %158 : vector<8x8xf32>
    %cst_64 = arith.constant dense<0.000000e+00> : vector<8xf32>
    %160 = vector.multi_reduction <add>, %159, %cst_64 [1] : vector<8x8xf32> to vector<8xf32>
    %161 = vector.shape_cast %160 : vector<8xf32> to vector<8x1xf32>
    %162 = tpu.reciprocal %161 : vector<8x1xf32> -> vector<8x1xf32>
    %163 = vector.broadcast %162 : vector<8x1xf32> to vector<8x8xf32>
    %164 = arith.mulf %159, %163 : vector<8x8xf32>
    %165 = arith.truncf %164 : vector<8x8xf32> to vector<8x8xbf16>
    %166 = vector.extract_strided_slice %149 {offsets = [0, 0], sizes = [8, 8], strides = [1, 1]} : vector<8x32xbf16> to vector<8x8xbf16>
    %cst_65 = arith.constant dense<0.000000e+00> : vector<8x8xf32>
    %167 = tpu.matmul %165, %166, %cst_65 {dimension_numbers = #tpu.dot_dimension_numbers<[1], [0], [0], [1], [0, 0, 1, 1], [], []>} : vector<8x8xbf16>, vector<8x8xbf16>, vector<8x8xf32> -> vector<8x8xf32>
    %168 = arith.truncf %167 : vector<8x8xf32> to vector<8x8xbf16>
    %169 = vector.extract_strided_slice %146 {offsets = [0, 0], sizes = [8, 32], strides = [1, 1]} : vector<32x32xbf16> to vector<8x32xbf16>
    %cst_66 = arith.constant dense<0.000000e+00> : vector<8x32xf32>
    %170 = tpu.matmul %168, %169, %cst_66 {dimension_numbers = #tpu.dot_dimension_numbers<[1], [0], [0], [1], [0, 0, 1, 1], [], []>} : vector<8x8xbf16>, vector<8x32xbf16>, vector<8x32xf32> -> vector<8x32xf32>
    %171 = arith.addf %150, %170 : vector<8x32xf32>
    %172 = vector.extract_strided_slice %147 {offsets = [0, 8], sizes = [8, 8], strides = [1, 1]} : vector<8x32xbf16> to vector<8x8xbf16>
    %173 = vector.extract_strided_slice %148 {offsets = [0, 8], sizes = [8, 8], strides = [1, 1]} : vector<8x32xbf16> to vector<8x8xbf16>
    %cst_67 = arith.constant dense<0.000000e+00> : vector<8x8xf32>
    %174 = tpu.matmul %172, %173, %cst_67 {dimension_numbers = #tpu.dot_dimension_numbers<[1], [1], [0], [0], [0, 0, 1, 0], [], []>} : vector<8x8xbf16>, vector<8x8xbf16>, vector<8x8xf32> -> vector<8x8xf32>
    %175 = arith.addf %174, %7 : vector<8x8xf32>
    %cst_68 = arith.constant dense<0xFF800000> : vector<8xf32>
    %176 = vector.multi_reduction <maximumf>, %175, %cst_68 [1] : vector<8x8xf32> to vector<8xf32>
    %177 = vector.shape_cast %176 : vector<8xf32> to vector<8x1xf32>
    %178 = vector.broadcast %177 : vector<8x1xf32> to vector<8x8xf32>
    %179 = arith.subf %175, %178 : vector<8x8xf32>
    %180 = math.exp %179 : vector<8x8xf32>
    %cst_69 = arith.constant dense<0.000000e+00> : vector<8xf32>
    %181 = vector.multi_reduction <add>, %180, %cst_69 [1] : vector<8x8xf32> to vector<8xf32>
    %182 = vector.shape_cast %181 : vector<8xf32> to vector<8x1xf32>
    %183 = tpu.reciprocal %182 : vector<8x1xf32> -> vector<8x1xf32>
    %184 = vector.broadcast %183 : vector<8x1xf32> to vector<8x8xf32>
    %185 = arith.mulf %180, %184 : vector<8x8xf32>
    %186 = arith.truncf %185 : vector<8x8xf32> to vector<8x8xbf16>
    %187 = vector.extract_strided_slice %149 {offsets = [0, 8], sizes = [8, 8], strides = [1, 1]} : vector<8x32xbf16> to vector<8x8xbf16>
    %cst_70 = arith.constant dense<0.000000e+00> : vector<8x8xf32>
    %188 = tpu.matmul %186, %187, %cst_70 {dimension_numbers = #tpu.dot_dimension_numbers<[1], [0], [0], [1], [0, 0, 1, 1], [], []>} : vector<8x8xbf16>, vector<8x8xbf16>, vector<8x8xf32> -> vector<8x8xf32>
    %189 = arith.truncf %188 : vector<8x8xf32> to vector<8x8xbf16>
    %190 = vector.extract_strided_slice %146 {offsets = [8, 0], sizes = [8, 32], strides = [1, 1]} : vector<32x32xbf16> to vector<8x32xbf16>
    %cst_71 = arith.constant dense<0.000000e+00> : vector<8x32xf32>
    %191 = tpu.matmul %189, %190, %cst_71 {dimension_numbers = #tpu.dot_dimension_numbers<[1], [0], [0], [1], [0, 0, 1, 1], [], []>} : vector<8x8xbf16>, vector<8x32xbf16>, vector<8x32xf32> -> vector<8x32xf32>
    %192 = arith.addf %171, %191 : vector<8x32xf32>
    %193 = vector.extract_strided_slice %147 {offsets = [0, 16], sizes = [8, 8], strides = [1, 1]} : vector<8x32xbf16> to vector<8x8xbf16>
    %194 = vector.extract_strided_slice %148 {offsets = [0, 16], sizes = [8, 8], strides = [1, 1]} : vector<8x32xbf16> to vector<8x8xbf16>
    %cst_72 = arith.constant dense<0.000000e+00> : vector<8x8xf32>
    %195 = tpu.matmul %193, %194, %cst_72 {dimension_numbers = #tpu.dot_dimension_numbers<[1], [1], [0], [0], [0, 0, 1, 0], [], []>} : vector<8x8xbf16>, vector<8x8xbf16>, vector<8x8xf32> -> vector<8x8xf32>
    %196 = arith.addf %195, %7 : vector<8x8xf32>
    %cst_73 = arith.constant dense<0xFF800000> : vector<8xf32>
    %197 = vector.multi_reduction <maximumf>, %196, %cst_73 [1] : vector<8x8xf32> to vector<8xf32>
    %198 = vector.shape_cast %197 : vector<8xf32> to vector<8x1xf32>
    %199 = vector.broadcast %198 : vector<8x1xf32> to vector<8x8xf32>
    %200 = arith.subf %196, %199 : vector<8x8xf32>
    %201 = math.exp %200 : vector<8x8xf32>
    %cst_74 = arith.constant dense<0.000000e+00> : vector<8xf32>
    %202 = vector.multi_reduction <add>, %201, %cst_74 [1] : vector<8x8xf32> to vector<8xf32>
    %203 = vector.shape_cast %202 : vector<8xf32> to vector<8x1xf32>
    %204 = tpu.reciprocal %203 : vector<8x1xf32> -> vector<8x1xf32>
    %205 = vector.broadcast %204 : vector<8x1xf32> to vector<8x8xf32>
    %206 = arith.mulf %201, %205 : vector<8x8xf32>
    %207 = arith.truncf %206 : vector<8x8xf32> to vector<8x8xbf16>
    %208 = vector.extract_strided_slice %149 {offsets = [0, 16], sizes = [8, 8], strides = [1, 1]} : vector<8x32xbf16> to vector<8x8xbf16>
    %cst_75 = arith.constant dense<0.000000e+00> : vector<8x8xf32>
    %209 = tpu.matmul %207, %208, %cst_75 {dimension_numbers = #tpu.dot_dimension_numbers<[1], [0], [0], [1], [0, 0, 1, 1], [], []>} : vector<8x8xbf16>, vector<8x8xbf16>, vector<8x8xf32> -> vector<8x8xf32>
    %210 = arith.truncf %209 : vector<8x8xf32> to vector<8x8xbf16>
    %211 = vector.extract_strided_slice %146 {offsets = [16, 0], sizes = [8, 32], strides = [1, 1]} : vector<32x32xbf16> to vector<8x32xbf16>
    %cst_76 = arith.constant dense<0.000000e+00> : vector<8x32xf32>
    %212 = tpu.matmul %210, %211, %cst_76 {dimension_numbers = #tpu.dot_dimension_numbers<[1], [0], [0], [1], [0, 0, 1, 1], [], []>} : vector<8x8xbf16>, vector<8x32xbf16>, vector<8x32xf32> -> vector<8x32xf32>
    %213 = arith.addf %192, %212 : vector<8x32xf32>
    %214 = vector.extract_strided_slice %147 {offsets = [0, 24], sizes = [8, 8], strides = [1, 1]} : vector<8x32xbf16> to vector<8x8xbf16>
    %215 = vector.extract_strided_slice %148 {offsets = [0, 24], sizes = [8, 8], strides = [1, 1]} : vector<8x32xbf16> to vector<8x8xbf16>
    %cst_77 = arith.constant dense<0.000000e+00> : vector<8x8xf32>
    %216 = tpu.matmul %214, %215, %cst_77 {dimension_numbers = #tpu.dot_dimension_numbers<[1], [1], [0], [0], [0, 0, 1, 0], [], []>} : vector<8x8xbf16>, vector<8x8xbf16>, vector<8x8xf32> -> vector<8x8xf32>
    %217 = arith.addf %216, %7 : vector<8x8xf32>
    %cst_78 = arith.constant dense<0xFF800000> : vector<8xf32>
    %218 = vector.multi_reduction <maximumf>, %217, %cst_78 [1] : vector<8x8xf32> to vector<8xf32>
    %219 = vector.shape_cast %218 : vector<8xf32> to vector<8x1xf32>
    %220 = vector.broadcast %219 : vector<8x1xf32> to vector<8x8xf32>
    %221 = arith.subf %217, %220 : vector<8x8xf32>
    %222 = math.exp %221 : vector<8x8xf32>
    %cst_79 = arith.constant dense<0.000000e+00> : vector<8xf32>
    %223 = vector.multi_reduction <add>, %222, %cst_79 [1] : vector<8x8xf32> to vector<8xf32>
    %224 = vector.shape_cast %223 : vector<8xf32> to vector<8x1xf32>
    %225 = tpu.reciprocal %224 : vector<8x1xf32> -> vector<8x1xf32>
    %226 = vector.broadcast %225 : vector<8x1xf32> to vector<8x8xf32>
    %227 = arith.mulf %222, %226 : vector<8x8xf32>
    %228 = arith.truncf %227 : vector<8x8xf32> to vector<8x8xbf16>
    %229 = vector.extract_strided_slice %149 {offsets = [0, 24], sizes = [8, 8], strides = [1, 1]} : vector<8x32xbf16> to vector<8x8xbf16>
    %cst_80 = arith.constant dense<0.000000e+00> : vector<8x8xf32>
    %230 = tpu.matmul %228, %229, %cst_80 {dimension_numbers = #tpu.dot_dimension_numbers<[1], [0], [0], [1], [0, 0, 1, 1], [], []>} : vector<8x8xbf16>, vector<8x8xbf16>, vector<8x8xf32> -> vector<8x8xf32>
    %231 = arith.truncf %230 : vector<8x8xf32> to vector<8x8xbf16>
    %232 = vector.extract_strided_slice %146 {offsets = [24, 0], sizes = [8, 32], strides = [1, 1]} : vector<32x32xbf16> to vector<8x32xbf16>
    %cst_81 = arith.constant dense<0.000000e+00> : vector<8x32xf32>
    %233 = tpu.matmul %231, %232, %cst_81 {dimension_numbers = #tpu.dot_dimension_numbers<[1], [0], [0], [1], [0, 0, 1, 1], [], []>} : vector<8x8xbf16>, vector<8x32xbf16>, vector<8x32xf32> -> vector<8x32xf32>
    %234 = arith.addf %213, %233 : vector<8x32xf32>
    %c0_82 = arith.constant 0 : index
    %c0_83 = arith.constant 0 : index
    %235 = vector.load %arg16[%c0_82, %c0_83] : memref<1x32xf32, #tpu.memory_space<vmem>>, vector<1x32xf32>
    %236 = vector.broadcast %235 : vector<1x32xf32> to vector<8x32xf32>
    %237 = arith.addf %234, %236 : vector<8x32xf32>
    %238 = arith.addf %237, %132 : vector<8x32xf32>
    %c0_84 = arith.constant 0 : index
    %c0_85 = arith.constant 0 : index
    %239 = vector.load %arg17[%c0_84, %c0_85] : memref<1x32xf32, #tpu.memory_space<vmem>>, vector<1x32xf32>
    %c0_86 = arith.constant 0 : index
    %c0_87 = arith.constant 0 : index
    %240 = vector.load %arg18[%c0_86, %c0_87] : memref<1x32xf32, #tpu.memory_space<vmem>>, vector<1x32xf32>
    %cst_88 = arith.constant dense<0.000000e+00> : vector<8xf32>
    %241 = vector.multi_reduction <add>, %238, %cst_88 [1] : vector<8x32xf32> to vector<8xf32>
    %242 = vector.shape_cast %241 : vector<8xf32> to vector<8x1xf32>
    %cst_89 = arith.constant 3.200000e+01 : f32
    %243 = vector.broadcast %cst_89 : f32 to vector<8x1xf32>
    %244 = arith.divf %242, %243 : vector<8x1xf32>
    %245 = vector.broadcast %244 : vector<8x1xf32> to vector<8x32xf32>
    %246 = arith.subf %238, %245 : vector<8x32xf32>
    %247 = arith.mulf %246, %246 : vector<8x32xf32>
    %cst_90 = arith.constant dense<0.000000e+00> : vector<8xf32>
    %248 = vector.multi_reduction <add>, %247, %cst_90 [1] : vector<8x32xf32> to vector<8xf32>
    %249 = vector.shape_cast %248 : vector<8xf32> to vector<8x1xf32>
    %cst_91 = arith.constant 3.200000e+01 : f32
    %250 = vector.broadcast %cst_91 : f32 to vector<8x1xf32>
    %251 = arith.divf %249, %250 : vector<8x1xf32>
    %cst_92 = arith.constant 9.99999996E-13 : f32
    %252 = vector.broadcast %cst_92 : f32 to vector<8x1xf32>
    %253 = arith.addf %251, %252 : vector<8x1xf32>
    %254 = math.rsqrt %253 : vector<8x1xf32>
    %255 = vector.broadcast %254 : vector<8x1xf32> to vector<8x32xf32>
    %256 = arith.mulf %246, %255 : vector<8x32xf32>
    %257 = vector.broadcast %239 : vector<1x32xf32> to vector<8x32xf32>
    %258 = arith.mulf %257, %256 : vector<8x32xf32>
    %259 = vector.broadcast %240 : vector<1x32xf32> to vector<8x32xf32>
    %260 = arith.addf %258, %259 : vector<8x32xf32>
    %261 = arith.truncf %260 : vector<8x32xf32> to vector<8x32xbf16>
    %c0_93 = arith.constant 0 : index
    %c0_94 = arith.constant 0 : index
    %262 = vector.load %arg19[%c0_93, %c0_94] : memref<32x64xbf16, #tpu.memory_space<vmem>>, vector<32x64xbf16>
    %cst_95 = arith.constant dense<0.000000e+00> : vector<8x64xf32>
    %263 = tpu.matmul %261, %262, %cst_95 {dimension_numbers = #tpu.dot_dimension_numbers<[1], [0], [0], [1], [0, 0, 1, 1], [], []>} : vector<8x32xbf16>, vector<32x64xbf16>, vector<8x64xf32> -> vector<8x64xf32>
    %c0_96 = arith.constant 0 : index
    %c0_97 = arith.constant 0 : index
    %264 = vector.load %arg20[%c0_96, %c0_97] : memref<1x64xf32, #tpu.memory_space<vmem>>, vector<1x64xf32>
    %265 = vector.broadcast %264 : vector<1x64xf32> to vector<8x64xf32>
    %266 = arith.addf %263, %265 : vector<8x64xf32>
    %cst_98 = arith.constant 0.000000e+00 : f32
    %267 = vector.broadcast %cst_98 : f32 to vector<8x64xf32>
    %268 = arith.maximumf %266, %267 : vector<8x64xf32>
    %269 = arith.truncf %268 : vector<8x64xf32> to vector<8x64xbf16>
    %c0_99 = arith.constant 0 : index
    %c0_100 = arith.constant 0 : index
    %270 = vector.load %arg21[%c0_99, %c0_100] : memref<64x32xbf16, #tpu.memory_space<vmem>>, vector<64x32xbf16>
    %cst_101 = arith.constant dense<0.000000e+00> : vector<8x32xf32>
    %271 = tpu.matmul %269, %270, %cst_101 {dimension_numbers = #tpu.dot_dimension_numbers<[1], [0], [0], [1], [0, 0, 1, 1], [], []>} : vector<8x64xbf16>, vector<64x32xbf16>, vector<8x32xf32> -> vector<8x32xf32>
    %c0_102 = arith.constant 0 : index
    %c0_103 = arith.constant 0 : index
    %272 = vector.load %arg22[%c0_102, %c0_103] : memref<1x32xf32, #tpu.memory_space<vmem>>, vector<1x32xf32>
    %273 = vector.broadcast %272 : vector<1x32xf32> to vector<8x32xf32>
    %274 = arith.addf %271, %273 : vector<8x32xf32>
    %275 = arith.addf %274, %260 : vector<8x32xf32>
    %c0_104 = arith.constant 0 : index
    %c0_105 = arith.constant 0 : index
    %276 = vector.load %arg23[%c0_104, %c0_105] : memref<1x32xf32, #tpu.memory_space<vmem>>, vector<1x32xf32>
    %c0_106 = arith.constant 0 : index
    %c0_107 = arith.constant 0 : index
    %277 = vector.load %arg24[%c0_106, %c0_107] : memref<1x32xf32, #tpu.memory_space<vmem>>, vector<1x32xf32>
    %cst_108 = arith.constant dense<0.000000e+00> : vector<8xf32>
    %278 = vector.multi_reduction <add>, %275, %cst_108 [1] : vector<8x32xf32> to vector<8xf32>
    %279 = vector.shape_cast %278 : vector<8xf32> to vector<8x1xf32>
    %cst_109 = arith.constant 3.200000e+01 : f32
    %280 = vector.broadcast %cst_109 : f32 to vector<8x1xf32>
    %281 = arith.divf %279, %280 : vector<8x1xf32>
    %282 = vector.broadcast %281 : vector<8x1xf32> to vector<8x32xf32>
    %283 = arith.subf %275, %282 : vector<8x32xf32>
    %284 = arith.mulf %283, %283 : vector<8x32xf32>
    %cst_110 = arith.constant dense<0.000000e+00> : vector<8xf32>
    %285 = vector.multi_reduction <add>, %284, %cst_110 [1] : vector<8x32xf32> to vector<8xf32>
    %286 = vector.shape_cast %285 : vector<8xf32> to vector<8x1xf32>
    %cst_111 = arith.constant 3.200000e+01 : f32
    %287 = vector.broadcast %cst_111 : f32 to vector<8x1xf32>
    %288 = arith.divf %286, %287 : vector<8x1xf32>
    %cst_112 = arith.constant 9.99999996E-13 : f32
    %289 = vector.broadcast %cst_112 : f32 to vector<8x1xf32>
    %290 = arith.addf %288, %289 : vector<8x1xf32>
    %291 = math.rsqrt %290 : vector<8x1xf32>
    %292 = vector.broadcast %291 : vector<8x1xf32> to vector<8x32xf32>
    %293 = arith.mulf %283, %292 : vector<8x32xf32>
    %294 = vector.broadcast %276 : vector<1x32xf32> to vector<8x32xf32>
    %295 = arith.mulf %294, %293 : vector<8x32xf32>
    %296 = vector.broadcast %277 : vector<1x32xf32> to vector<8x32xf32>
    %297 = arith.addf %295, %296 : vector<8x32xf32>
    %c0_113 = arith.constant 0 : index
    %c0_114 = arith.constant 0 : index
    %c0_115 = arith.constant 0 : index
    %298 = vector.load %arg25[%c0_113, %c0_114, %c0_115] : memref<1x8x32xf32, #tpu.memory_space<vmem>>, vector<1x8x32xf32>
    %299 = vector.shape_cast %298 : vector<1x8x32xf32> to vector<8x32xf32>
    %300 = vector.shape_cast %297 : vector<8x32xf32> to vector<1x8x32xf32>
    tpu.vector_store %arg25[%c0_113, %c0_114, %c0_115], %300 {strides = array<i32>} : memref<1x8x32xf32, #tpu.memory_space<vmem>>, vector<1x8x32xf32>,
    return
  }
  func.func @transform_0(%arg0: i32) -> (i32, i32, i32) {
    %c0_i32 = arith.constant 0 : i32
    %c0_i32_0 = arith.constant 0 : i32
    %c0_i32_1 = arith.constant 0 : i32
    return %arg0, %c0_i32, %c0_i32_0 : i32, i32, i32
  }
  func.func @transform_1(%arg0: i32) -> (i32, i32, i32) {
    %c0_i32 = arith.constant 0 : i32
    %c0_i32_0 = arith.constant 0 : i32
    %c0_i32_1 = arith.constant 0 : i32
    return %arg0, %c0_i32, %c0_i32_0 : i32, i32, i32
  }
  func.func @transform_2(%arg0: i32) -> (i32, i32, i32) {
    %c0_i32 = arith.constant 0 : i32
    %c0_i32_0 = arith.constant 0 : i32
    %c0_i32_1 = arith.constant 0 : i32
    return %arg0, %c0_i32, %c0_i32_0 : i32, i32, i32
  }
  func.func @transform_3(%arg0: i32) -> (i32, i32, i32) {
    %c0_i32 = arith.constant 0 : i32
    %c0_i32_0 = arith.constant 0 : i32
    %c0_i32_1 = arith.constant 0 : i32
    return %arg0, %c0_i32, %c0_i32_0 : i32, i32, i32
  }
  func.func @transform_4(%arg0: i32) -> (i32, i32) {
    %c0_i32 = arith.constant 0 : i32
    %c0_i32_0 = arith.constant 0 : i32
    %c0_i32_1 = arith.constant 0 : i32
    return %c0_i32, %c0_i32_0 : i32, i32
  }
  func.func @transform_5(%arg0: i32) -> (i32, i32) {
    %c0_i32 = arith.constant 0 : i32
    %c0_i32_0 = arith.constant 0 : i32
    %c0_i32_1 = arith.constant 0 : i32
    return %c0_i32, %c0_i32_0 : i32, i32
  }
  func.func @transform_6(%arg0: i32) -> (i32, i32) {
    %c0_i32 = arith.constant 0 : i32
    %c0_i32_0 = arith.constant 0 : i32
    %c0_i32_1 = arith.constant 0 : i32
    return %c0_i32, %c0_i32_0 : i32, i32
  }
  func.func @transform_7(%arg0: i32) -> (i32, i32) {
    %c0_i32 = arith.constant 0 : i32
    %c0_i32_0 = arith.constant 0 : i32
    %c0_i32_1 = arith.constant 0 : i32
    return %c0_i32, %c0_i32_0 : i32, i32
  }
  func.func @transform_8(%arg0: i32) -> (i32, i32) {
    %c0_i32 = arith.constant 0 : i32
    %c0_i32_0 = arith.constant 0 : i32
    %c0_i32_1 = arith.constant 0 : i32
    return %c0_i32, %c0_i32_0 : i32, i32
  }
  func.func @transform_9(%arg0: i32) -> (i32, i32) {
    %c0_i32 = arith.constant 0 : i32
    %c0_i32_0 = arith.constant 0 : i32
    %c0_i32_1 = arith.constant 0 : i32
    return %c0_i32, %c0_i32_0 : i32, i32
  }
  func.func @transform_10(%arg0: i32) -> (i32, i32) {
    %c0_i32 = arith.constant 0 : i32
    %c0_i32_0 = arith.constant 0 : i32
    %c0_i32_1 = arith.constant 0 : i32
    return %c0_i32, %c0_i32_0 : i32, i32
  }
  func.func @transform_11(%arg0: i32) -> (i32, i32) {
    %c0_i32 = arith.constant 0 : i32
    %c0_i32_0 = arith.constant 0 : i32
    %c0_i32_1 = arith.constant 0 : i32
    return %c0_i32, %c0_i32_0 : i32, i32
  }
  func.func @transform_12(%arg0: i32) -> (i32, i32) {
    %c0_i32 = arith.constant 0 : i32
    %c0_i32_0 = arith.constant 0 : i32
    %c0_i32_1 = arith.constant 0 : i32
    return %c0_i32, %c0_i32_0 : i32, i32
  }
  func.func @transform_13(%arg0: i32) -> (i32, i32) {
    %c0_i32 = arith.constant 0 : i32
    %c0_i32_0 = arith.constant 0 : i32
    %c0_i32_1 = arith.constant 0 : i32
    return %c0_i32, %c0_i32_0 : i32, i32
  }
  func.func @transform_14(%arg0: i32) -> (i32, i32) {
    %c0_i32 = arith.constant 0 : i32
    %c0_i32_0 = arith.constant 0 : i32
    %c0_i32_1 = arith.constant 0 : i32
    return %c0_i32, %c0_i32_0 : i32, i32
  }
  func.func @transform_15(%arg0: i32) -> (i32, i32) {
    %c0_i32 = arith.constant 0 : i32
    %c0_i32_0 = arith.constant 0 : i32
    %c0_i32_1 = arith.constant 0 : i32
    return %c0_i32, %c0_i32_0 : i32, i32
  }
  func.func @transform_16(%arg0: i32) -> (i32, i32) {
    %c0_i32 = arith.constant 0 : i32
    %c0_i32_0 = arith.constant 0 : i32
    %c0_i32_1 = arith.constant 0 : i32
    return %c0_i32, %c0_i32_0 : i32, i32
  }
  func.func @transform_17(%arg0: i32) -> (i32, i32) {
    %c0_i32 = arith.constant 0 : i32
    %c0_i32_0 = arith.constant 0 : i32
    %c0_i32_1 = arith.constant 0 : i32
    return %c0_i32, %c0_i32_0 : i32, i32
  }
  func.func @transform_18(%arg0: i32) -> (i32, i32) {
    %c0_i32 = arith.constant 0 : i32
    %c0_i32_0 = arith.constant 0 : i32
    %c0_i32_1 = arith.constant 0 : i32
    return %c0_i32, %c0_i32_0 : i32, i32
  }
  func.func @transform_19(%arg0: i32) -> (i32, i32) {
    %c0_i32 = arith.constant 0 : i32
    %c0_i32_0 = arith.constant 0 : i32
    %c0_i32_1 = arith.constant 0 : i32
    return %c0_i32, %c0_i32_0 : i32, i32
  }
  func.func @transform_20(%arg0: i32) -> (i32, i32) {
    %c0_i32 = arith.constant 0 : i32
    %c0_i32_0 = arith.constant 0 : i32
    %c0_i32_1 = arith.constant 0 : i32
    return %c0_i32, %c0_i32_0 : i32, i32
  }
  func.func @transform_21(%arg0: i32) -> (i32, i32) {
    %c0_i32 = arith.constant 0 : i32
    %c0_i32_0 = arith.constant 0 : i32
    %c0_i32_1 = arith.constant 0 : i32
    return %c0_i32, %c0_i32_0 : i32, i32
  }
  func.func @transform_22(%arg0: i32) -> (i32, i32) {
    %c0_i32 = arith.constant 0 : i32
    %c0_i32_0 = arith.constant 0 : i32
    %c0_i32_1 = arith.constant 0 : i32
    return %c0_i32, %c0_i32_0 : i32, i32
  }
  func.func @transform_23(%arg0: i32) -> (i32, i32) {
    %c0_i32 = arith.constant 0 : i32
    %c0_i32_0 = arith.constant 0 : i32
    %c0_i32_1 = arith.constant 0 : i32
    return %c0_i32, %c0_i32_0 : i32, i32
  }
  func.func @transform_24(%arg0: i32) -> (i32, i32, i32) {
    %c0_i32 = arith.constant 0 : i32
    %c0_i32_0 = arith.constant 0 : i32
    %c0_i32_1 = arith.constant 0 : i32
    return %arg0, %c0_i32, %c0_i32_0 : i32, i32, i32
  }
}

</mosaic_0001>

<llo_original>
// kernel: decoder_layer.1
$region0: #{decoder_layer.1}
  #allocation0 [shape = 'u32[]', space=smem, size = 0x4, offset = 0x4, fixed_abs, tag = 'smem constant byte address 0x4 - core index']
  #allocation1 [shape = 'u32[72,128]{1,0:T(1,128)}', space=vmem, size = 0x9000, scoped, tag = 'internal scratch']
  %s0 = inlined_call_operand.vmem [shape: f32[2,8,8], index: 0, kind: input, shape index: {}]
  %s1 = inlined_call_operand.vmem [shape: f32[2,8,8], index: 1, kind: input, shape index: {}]
  %s2 = inlined_call_operand.vmem [shape: f32[2,8,32], index: 2, kind: input, shape index: {}]
  %s3 = inlined_call_operand.hbm [shape: f32[2,8,32], index: 3, kind: input, shape index: {}]
  %s4 = inlined_call_operand.vmem [shape: bf16[32,96], index: 4, kind: input, shape index: {}]
  %s5 = inlined_call_operand.vmem [shape: f32[1,96], index: 5, kind: input, shape index: {}]
  %s6 = inlined_call_operand.hbm [shape: bf16[32,32], index: 6, kind: input, shape index: {}]
  %s7 = inlined_call_operand.vmem [shape: f32[1,32], index: 7, kind: input, shape index: {}]
  %s8 = inlined_call_operand.hbm [shape: f32[1,32], index: 8, kind: input, shape index: {}]
  %s9 = inlined_call_operand.hbm [shape: f32[1,32], index: 9, kind: input, shape index: {}]
  %s10 = inlined_call_operand.hbm [shape: bf16[32,32], index: 10, kind: input, shape index: {}]
  %s11 = inlined_call_operand.hbm [shape: f32[1,32], index: 11, kind: input, shape index: {}]
  %s12 = inlined_call_operand.hbm [shape: bf16[32,64], index: 12, kind: input, shape index: {}]
  %s13 = inlined_call_operand.hbm [shape: f32[1,64], index: 13, kind: input, shape index: {}]
  %s14 = inlined_call_operand.hbm [shape: bf16[32,32], index: 14, kind: input, shape index: {}]
  %s15 = inlined_call_operand.hbm [shape: f32[1,32], index: 15, kind: input, shape index: {}]
  %s16 = inlined_call_operand.hbm [shape: f32[1,32], index: 16, kind: input, shape index: {}]
  %s17 = inlined_call_operand.hbm [shape: f32[1,32], index: 17, kind: input, shape index: {}]
  %s18 = inlined_call_operand.hbm [shape: bf16[32,64], index: 18, kind: input, shape index: {}]
  %s19 = inlined_call_operand.hbm [shape: f32[1,64], index: 19, kind: input, shape index: {}]
  %s20 = inlined_call_operand.vmem [shape: bf16[64,32], index: 20, kind: input, shape index: {}]
  %s21 = inlined_call_operand.hbm [shape: f32[1,32], index: 21, kind: input, shape index: {}]
  %s22 = inlined_call_operand.vmem [shape: f32[1,32], index: 22, kind: input, shape index: {}]
  %s23 = inlined_call_operand.hbm [shape: f32[1,32], index: 23, kind: input, shape index: {}]
  %s24 = inlined_call_operand.hbm [shape: f32[2,8,32], index: 24, kind: output, shape index: {}]
  %s25 = sld [smem:[#allocation0]]
  $region193: #{decoder_layer.1} parent=0
    _
  %s27 = ssub.s32 1, %s25
  %s28 = scalar_select 0, %s27, %s25
  $region1: #{decoder_layer.1} parent=0
    #allocation2 [shape = 'u8[8192]{0}', space=vmem, size = 0x2000, scoped, tag = 'input window, operand 3']
    #allocation3 [shape = 's32[2]{0}', space=sflag, size = 0x8, scoped, tag = 'scoped memory for decoder_layer.1']
    #allocation4 [shape = 's32[2]{0}', space=sflag, size = 0x8, scoped, tag = 'scoped memory for decoder_layer.1']
    #allocation5 [shape = 'u8[8192]{0}', space=vmem, size = 0x2000, scoped, tag = 'input window, operand 6, single buffered']
    #allocation6 [shape = 's32[1]{0}', space=sflag, size = 0x4, scoped, tag = 'scoped memory for decoder_layer.1']
    #allocation7 [shape = 'u8[512]{0}', space=vmem, size = 0x400, scoped, tag = 'input window, operand 8, single buffered']
    #allocation8 [shape = 'u8[512]{0}', space=vmem, size = 0x400, scoped, tag = 'input window, operand 9, single buffered']
    #allocation9 [shape = 's32[1]{0}', space=sflag, size = 0x4, scoped, tag = 'scoped memory for decoder_layer.1']
    #allocation10 [shape = 'u8[8192]{0}', space=vmem, size = 0x2000, scoped, tag = 'input window, operand 10, single buffered']
    #allocation11 [shape = 'u8[512]{0}', space=vmem, size = 0x400, scoped, tag = 'input window, operand 11, single buffered']
    #allocation12 [shape = 's32[1]{0}', space=sflag, size = 0x4, scoped, tag = 'scoped memory for decoder_layer.1']
    #allocation13 [shape = 'u8[8192]{0}', space=vmem, size = 0x2000, scoped, tag = 'input window, operand 12, single buffered']
    #allocation14 [shape = 'u8[512]{0}', space=vmem, size = 0x400, scoped, tag = 'input window, operand 13, single buffered']
    #allocation15 [shape = 's32[1]{0}', space=sflag, size = 0x4, scoped, tag = 'scoped memory for decoder_layer.1']
    #allocation16 [shape = 'u8[8192]{0}', space=vmem, size = 0x2000, scoped, tag = 'input window, operand 14, single buffered']
    #allocation17 [shape = 'u8[512]{0}', space=vmem, size = 0x400, scoped, tag = 'input window, operand 15, single buffered']
    #allocation18 [shape = 's32[1]{0}', space=sflag, size = 0x4, scoped, tag = 'scoped memory for decoder_layer.1']
    #allocation19 [shape = 'u8[512]{0}', space=vmem, size = 0x400, scoped, tag = 'input window, operand 16, single buffered']
    #allocation20 [shape = 'u8[512]{0}', space=vmem, size = 0x400, scoped, tag = 'input window, operand 17, single buffered']
    #allocation21 [shape = 's32[1]{0}', space=sflag, size = 0x4, scoped, tag = 'scoped memory for decoder_layer.1']
    #allocation22 [shape = 'u8[8192]{0}', space=vmem, size = 0x2000, scoped, tag = 'input window, operand 18, single buffered']
    #allocation23 [shape = 'u8[512]{0}', space=vmem, size = 0x400, scoped, tag = 'input window, operand 19, single buffered']
    #allocation24 [shape = 's32[1]{0}', space=sflag, size = 0x4, scoped, tag = 'scoped memory for decoder_layer.1']
    #allocation25 [shape = 'u8[512]{0}', space=vmem, size = 0x400, scoped, tag = 'input window, operand 21, single buffered']
    #allocation26 [shape = 'u8[512]{0}', space=vmem, size = 0x400, scoped, tag = 'input window, operand 23, single buffered']
    #allocation27 [shape = 's32[1]{0}', space=sflag, size = 0x4, scoped, tag = 'scoped memory for decoder_layer.1']
    #allocation28 [shape = 'u8[8192]{0}', space=vmem, size = 0x2000, scoped, tag = 'output window, operand 0']
    %29 = vsyncpa [#allocation3], 0
    %s30 = scalar_lea.sflag [#allocation3], 1
    %31 = vsyncpa %s30, 0
    %32 = vsyncpa [#allocation6], 0
    %33 = vsyncpa [#allocation9], 0
    %34 = vsyncpa [#allocation12], 0
    %35 = vsyncpa [#allocation15], 0
    %36 = vsyncpa [#allocation18], 0
    %37 = vsyncpa [#allocation21], 0
    %38 = vsyncpa [#allocation24], 0
    %39 = vsyncpa [#allocation27], 0
    %40 = vsyncpa [#allocation4], 0
    %s41 = scalar_lea.sflag [#allocation4], 1
    %42 = vsyncpa %s41, 0
    loop: start=0, step=1, limit=4
    $region2: #{decoder_layer.1} parent=1 // loop_pre_header
      _
    $region3: #{decoder_layer.1} parent=1 // loop_header
      %s44 = sphi 0, %s48
      %p45 = scmp.ge.s32.totalorder %s44, 4
      %s54 = sphi 0, %s56
      %s57 = sphi 0, %s54
      %s58 = sphi 0, %s57
      %s74 = sphi 0, %s58
      %s80 = sphi 0, %s82
      %s83 = sphi 0, %s80
      %s84 = sphi 0, %s83
      %s100 = sphi 0, %s84
      %s106 = sphi 0, %s108
      %s109 = sphi 0, %s106
      %s110 = sphi 0, %s109
      %s126 = sphi 0, %s110
      %s132 = sphi 0, %s134
      %s135 = sphi 0, %s132
      %s136 = sphi 0, %s135
      %s152 = sphi 0, %s136
      %s156 = sphi 0, %s156
      %s158 = sphi 0, %s156
      %s159 = sphi 0, %s158
      %s173 = sphi 0, %s159
      %s177 = sphi 0, %s177
      %s179 = sphi 0, %s177
      %s180 = sphi 0, %s179
      %s194 = sphi 0, %s180
      %s198 = sphi 0, %s198
      %s200 = sphi 0, %s198
      %s201 = sphi 0, %s200
      %s215 = sphi 0, %s201
      %s219 = sphi 0, %s219
      %s221 = sphi 0, %s219
      %s222 = sphi 0, %s221
      %s236 = sphi 0, %s222
      %s240 = sphi 0, %s240
      %s242 = sphi 0, %s240
      %s243 = sphi 0, %s242
      %s257 = sphi 0, %s243
      %s261 = sphi 0, %s261
      %s263 = sphi 0, %s261
      %s264 = sphi 0, %s263
      %s278 = sphi 0, %s264
      %s282 = sphi 0, %s282
      %s284 = sphi 0, %s282
      %s285 = sphi 0, %s284
      %s299 = sphi 0, %s285
      %s303 = sphi 0, %s303
      %s305 = sphi 0, %s303
      %s306 = sphi 0, %s305
      %s320 = sphi 0, %s306
      %s324 = sphi 0, %s324
      %s326 = sphi 0, %s324
      %s327 = sphi 0, %s326
      %s341 = sphi 0, %s327
      %s345 = sphi 0, %s345
      %s347 = sphi 0, %s345
      %s348 = sphi 0, %s347
      %s362 = sphi 0, %s348
      %s366 = sphi 0, %s366
      %s368 = sphi 0, %s366
      %s369 = sphi 0, %s368
      %s383 = sphi 0, %s369
      %s387 = sphi 0, %s387
      %s389 = sphi 0, %s387
      %s390 = sphi 0, %s389
      %s404 = sphi 0, %s390
      %s408 = sphi 0, %s408
      %s410 = sphi 0, %s408
      %s411 = sphi 0, %s410
      %s425 = sphi 0, %s411
      %s429 = sphi 0, %s429
      %s431 = sphi 0, %s429
      %s432 = sphi 0, %s431
      %s446 = sphi 0, %s432
      %s450 = sphi 0, %s450
      %s452 = sphi 0, %s450
      %s453 = sphi 0, %s452
      %s467 = sphi 0, %s453
      %s471 = sphi 0, %s471
      %s473 = sphi 0, %s471
      %s474 = sphi 0, %s473
      %s488 = sphi 0, %s474
      %s492 = sphi 0, %s492
      %s494 = sphi 0, %s492
      %s495 = sphi 0, %s494
      %s509 = sphi 0, %s495
      %s513 = sphi 0, %s513
      %s515 = sphi 0, %s513
      %s516 = sphi 0, %s515
      %s530 = sphi 0, %s516
      %s534 = sphi 0, %s534
      %s536 = sphi 0, %s534
      %s537 = sphi 0, %s536
      %s551 = sphi 0, %s537
      %s555 = sphi 0, %s555
      %s557 = sphi 0, %s555
      %s558 = sphi 0, %s557
      %s572 = sphi 0, %s558
      %s578 = sphi 0, %s580
      %s581 = sphi 0, %s578
      %s582 = sphi 0, %s581
      %s598 = sphi 0, %s582
    $region4: #{decoder_layer.1} parent=1 // loop_header_branch
      %47 = sbr.rel (%p45) target = $region8
    $region5: #{decoder_layer.1} parent=1 // loop_body
      %s49 = ssub.s32 %s44, 1
      %s50 = ssub.s32 %s44, 2
      %s51 = sadd.s32 %s44, 1
      %s52 = ssub.s32 %s44, %s51
      %p53 = scmp.eq.s32.totalorder %s52, 0
      %s55 = sadd.s32 %s54, 1
      %s56 = scalar_select %p53, %s54, %s55
      %p59 = pneg %p53
      %p60 = scmp.eq.s32.totalorder %s44, 1
      %p61 = por %p59, %p60
      %p62 = scmp.ne.s32.totalorder %s54, %s57
      %p63 = scmp.eq.s32.totalorder %s44, 0
      %p64 = por %p62, %p63
      %p65 = scmp.ne.s32.totalorder %s54, %s57
      %p66 = scmp.eq.s32.totalorder %s49, 1
      %p67 = por %p65, %p66
      %p68 = scmp.ne.s32.totalorder %s57, %s58
      %p69 = scmp.eq.s32.totalorder %s49, 0
      %p70 = por %p68, %p69
      %p71 = scmp.ne.s32.totalorder %s57, %s58
      %p72 = scmp.eq.s32.totalorder %s50, 1
      %p73 = por %p71, %p72
      %p75 = scmp.ne.s32.totalorder %s58, %s74
      %p76 = scmp.eq.s32.totalorder %s50, 0
      %p77 = por %p75, %p76
      %s78 = ssub.s32 %s44, %s51
      %p79 = scmp.eq.s32.totalorder %s78, 0
      %s81 = sadd.s32 %s80, 1
      %s82 = scalar_select %p79, %s80, %s81
      %p85 = pneg %p79
      %p86 = scmp.eq.s32.totalorder %s44, 1
      %p87 = por %p85, %p86
      %p88 = scmp.ne.s32.totalorder %s80, %s83
      %p89 = scmp.eq.s32.totalorder %s44, 0
      %p90 = por %p88, %p89
      %p91 = scmp.ne.s32.totalorder %s80, %s83
      %p92 = scmp.eq.s32.totalorder %s49, 1
      %p93 = por %p91, %p92
      %p94 = scmp.ne.s32.totalorder %s83, %s84
      %p95 = scmp.eq.s32.totalorder %s49, 0
      %p96 = por %p94, %p95
      %p97 = scmp.ne.s32.totalorder %s83, %s84
      %p98 = scmp.eq.s32.totalorder %s50, 1
      %p99 = por %p97, %p98
      %p101 = scmp.ne.s32.totalorder %s84, %s100
      %p102 = scmp.eq.s32.totalorder %s50, 0
      %p103 = por %p101, %p102
      %s104 = ssub.s32 %s44, %s51
      %p105 = scmp.eq.s32.totalorder %s104, 0
      %s107 = sadd.s32 %s106, 1
      %s108 = scalar_select %p105, %s106, %s107
      %p111 = pneg %p105
      %p112 = scmp.eq.s32.totalorder %s44, 1
      %p113 = por %p111, %p112
      %p114 = scmp.ne.s32.totalorder %s106, %s109
      %p115 = scmp.eq.s32.totalorder %s44, 0
      %p116 = por %p114, %p115
      %p117 = scmp.ne.s32.totalorder %s106, %s109
      %p118 = scmp.eq.s32.totalorder %s49, 1
      %p119 = por %p117, %p118
      %p120 = scmp.ne.s32.totalorder %s109, %s110
      %p121 = scmp.eq.s32.totalorder %s49, 0
      %p122 = por %p120, %p121
      %p123 = scmp.ne.s32.totalorder %s109, %s110
      %p124 = scmp.eq.s32.totalorder %s50, 1
      %p125 = por %p123, %p124
      %p127 = scmp.ne.s32.totalorder %s110, %s126
      %p128 = scmp.eq.s32.totalorder %s50, 0
      %p129 = por %p127, %p128
      %s130 = ssub.s32 %s44, %s51
      %p131 = scmp.eq.s32.totalorder %s130, 0
      %s133 = sadd.s32 %s132, 1
      %s134 = scalar_select %p131, %s132, %s133
      %p137 = pneg %p131
      %p138 = scmp.eq.s32.totalorder %s44, 1
      %p139 = por %p137, %p138
      %p140 = scmp.ne.s32.totalorder %s132, %s135
      %p141 = scmp.eq.s32.totalorder %s44, 0
      %p142 = por %p140, %p141
      %p143 = scmp.ne.s32.totalorder %s132, %s135
      %p144 = scmp.eq.s32.totalorder %s49, 1
      %p145 = por %p143, %p144
      %p146 = scmp.ne.s32.totalorder %s135, %s136
      %p147 = scmp.eq.s32.totalorder %s49, 0
      %p148 = por %p146, %p147
      %p149 = scmp.ne.s32.totalorder %s135, %s136
      %p150 = scmp.eq.s32.totalorder %s50, 1
      %p151 = por %p149, %p150
      %p153 = scmp.ne.s32.totalorder %s136, %s152
      %p154 = scmp.eq.s32.totalorder %s50, 0
      %p155 = por %p153, %p154
      %s157 = sadd.s32 %s156, 1
      %p160 = scmp.eq.s32.totalorder %s44, 1
      %p161 = scmp.ne.s32.totalorder %s156, %s158
      %p162 = scmp.eq.s32.totalorder %s44, 0
      %p163 = por %p161, %p162
      %p164 = scmp.ne.s32.totalorder %s156, %s158
      %p165 = scmp.eq.s32.totalorder %s49, 1
      %p166 = por %p164, %p165
      %p167 = scmp.ne.s32.totalorder %s158, %s159
      %p168 = scmp.eq.s32.totalorder %s49, 0
      %p169 = por %p167, %p168
      %p170 = scmp.ne.s32.totalorder %s158, %s159
      %p171 = scmp.eq.s32.totalorder %s50, 1
      %p172 = por %p170, %p171
      %p174 = scmp.ne.s32.totalorder %s159, %s173
      %p175 = scmp.eq.s32.totalorder %s50, 0
      %p176 = por %p174, %p175
      %s178 = sadd.s32 %s177, 1
      %p181 = scmp.eq.s32.totalorder %s44, 1
      %p182 = scmp.ne.s32.totalorder %s177, %s179
      %p183 = scmp.eq.s32.totalorder %s44, 0
      %p184 = por %p182, %p183
      %p185 = scmp.ne.s32.totalorder %s177, %s179
      %p186 = scmp.eq.s32.totalorder %s49, 1
      %p187 = por %p185, %p186
      %p188 = scmp.ne.s32.totalorder %s179, %s180
      %p189 = scmp.eq.s32.totalorder %s49, 0
      %p190 = por %p188, %p189
      %p191 = scmp.ne.s32.totalorder %s179, %s180
      %p192 = scmp.eq.s32.totalorder %s50, 1
      %p193 = por %p191, %p192
      %p195 = scmp.ne.s32.totalorder %s180, %s194
      %p196 = scmp.eq.s32.totalorder %s50, 0
      %p197 = por %p195, %p196
      %s199 = sadd.s32 %s198, 1
      %p202 = scmp.eq.s32.totalorder %s44, 1
      %p203 = scmp.ne.s32.totalorder %s198, %s200
      %p204 = scmp.eq.s32.totalorder %s44, 0
      %p205 = por %p203, %p204
      %p206 = scmp.ne.s32.totalorder %s198, %s200
      %p207 = scmp.eq.s32.totalorder %s49, 1
      %p208 = por %p206, %p207
      %p209 = scmp.ne.s32.totalorder %s200, %s201
      %p210 = scmp.eq.s32.totalorder %s49, 0
      %p211 = por %p209, %p210
      %p212 = scmp.ne.s32.totalorder %s200, %s201
      %p213 = scmp.eq.s32.totalorder %s50, 1
      %p214 = por %p212, %p213
      %p216 = scmp.ne.s32.totalorder %s201, %s215
      %p217 = scmp.eq.s32.totalorder %s50, 0
      %p218 = por %p216, %p217
      %s220 = sadd.s32 %s219, 1
      %p223 = scmp.eq.s32.totalorder %s44, 1
      %p224 = scmp.ne.s32.totalorder %s219, %s221
      %p225 = scmp.eq.s32.totalorder %s44, 0
      %p226 = por %p224, %p225
      %p227 = scmp.ne.s32.totalorder %s219, %s221
      %p228 = scmp.eq.s32.totalorder %s49, 1
      %p229 = por %p227, %p228
      %p230 = scmp.ne.s32.totalorder %s221, %s222
      %p231 = scmp.eq.s32.totalorder %s49, 0
      %p232 = por %p230, %p231
      %p233 = scmp.ne.s32.totalorder %s221, %s222
      %p234 = scmp.eq.s32.totalorder %s50, 1
      %p235 = por %p233, %p234
      %p237 = scmp.ne.s32.totalorder %s222, %s236
      %p238 = scmp.eq.s32.totalorder %s50, 0
      %p239 = por %p237, %p238
      %s241 = sadd.s32 %s240, 1
      %p244 = scmp.eq.s32.totalorder %s44, 1
      %p245 = scmp.ne.s32.totalorder %s240, %s242
      %p246 = scmp.eq.s32.totalorder %s44, 0
      %p247 = por %p245, %p246
      %p248 = scmp.ne.s32.totalorder %s240, %s242
      %p249 = scmp.eq.s32.totalorder %s49, 1
      %p250 = por %p248, %p249
      %p251 = scmp.ne.s32.totalorder %s242, %s243
      %p252 = scmp.eq.s32.totalorder %s49, 0
      %p253 = por %p251, %p252
      %p254 = scmp.ne.s32.totalorder %s242, %s243
      %p255 = scmp.eq.s32.totalorder %s50, 1
      %p256 = por %p254, %p255
      %p258 = scmp.ne.s32.totalorder %s243, %s257
      %p259 = scmp.eq.s32.totalorder %s50, 0
      %p260 = por %p258, %p259
      %s262 = sadd.s32 %s261, 1
      %p265 = scmp.eq.s32.totalorder %s44, 1
      %p266 = scmp.ne.s32.totalorder %s261, %s263
      %p267 = scmp.eq.s32.totalorder %s44, 0
      %p268 = por %p266, %p267
      %p269 = scmp.ne.s32.totalorder %s261, %s263
      %p270 = scmp.eq.s32.totalorder %s49, 1
      %p271 = por %p269, %p270
      %p272 = scmp.ne.s32.totalorder %s263, %s264
      %p273 = scmp.eq.s32.totalorder %s49, 0
      %p274 = por %p272, %p273
      %p275 = scmp.ne.s32.totalorder %s263, %s264
      %p276 = scmp.eq.s32.totalorder %s50, 1
      %p277 = por %p275, %p276
      %p279 = scmp.ne.s32.totalorder %s264, %s278
      %p280 = scmp.eq.s32.totalorder %s50, 0
      %p281 = por %p279, %p280
      %s283 = sadd.s32 %s282, 1
      %p286 = scmp.eq.s32.totalorder %s44, 1
      %p287 = scmp.ne.s32.totalorder %s282, %s284
      %p288 = scmp.eq.s32.totalorder %s44, 0
      %p289 = por %p287, %p288
      %p290 = scmp.ne.s32.totalorder %s282, %s284
      %p291 = scmp.eq.s32.totalorder %s49, 1
      %p292 = por %p290, %p291
      %p293 = scmp.ne.s32.totalorder %s284, %s285
      %p294 = scmp.eq.s32.totalorder %s49, 0
      %p295 = por %p293, %p294
      %p296 = scmp.ne.s32.totalorder %s284, %s285
      %p297 = scmp.eq.s32.totalorder %s50, 1
      %p298 = por %p296, %p297
      %p300 = scmp.ne.s32.totalorder %s285, %s299
      %p301 = scmp.eq.s32.totalorder %s50, 0
      %p302 = por %p300, %p301
      %s304 = sadd.s32 %s303, 1
      %p307 = scmp.eq.s32.totalorder %s44, 1
      %p308 = scmp.ne.s32.totalorder %s303, %s305
      %p309 = scmp.eq.s32.totalorder %s44, 0
      %p310 = por %p308, %p309
      %p311 = scmp.ne.s32.totalorder %s303, %s305
      %p312 = scmp.eq.s32.totalorder %s49, 1
      %p313 = por %p311, %p312
      %p314 = scmp.ne.s32.totalorder %s305, %s306
      %p315 = scmp.eq.s32.totalorder %s49, 0
      %p316 = por %p314, %p315
      %p317 = scmp.ne.s32.totalorder %s305, %s306
      %p318 = scmp.eq.s32.totalorder %s50, 1
      %p319 = por %p317, %p318
      %p321 = scmp.ne.s32.totalorder %s306, %s320
      %p322 = scmp.eq.s32.totalorder %s50, 0
      %p323 = por %p321, %p322
      %s325 = sadd.s32 %s324, 1
      %p328 = scmp.eq.s32.totalorder %s44, 1
      %p329 = scmp.ne.s32.totalorder %s324, %s326
      %p330 = scmp.eq.s32.totalorder %s44, 0
      %p331 = por %p329, %p330
      %p332 = scmp.ne.s32.totalorder %s324, %s326
      %p333 = scmp.eq.s32.totalorder %s49, 1
      %p334 = por %p332, %p333
      %p335 = scmp.ne.s32.totalorder %s326, %s327
      %p336 = scmp.eq.s32.totalorder %s49, 0
      %p337 = por %p335, %p336
      %p338 = scmp.ne.s32.totalorder %s326, %s327
      %p339 = scmp.eq.s32.totalorder %s50, 1
      %p340 = por %p338, %p339
      %p342 = scmp.ne.s32.totalorder %s327, %s341
      %p343 = scmp.eq.s32.totalorder %s50, 0
      %p344 = por %p342, %p343
      %s346 = sadd.s32 %s345, 1
      %p349 = scmp.eq.s32.totalorder %s44, 1
      %p350 = scmp.ne.s32.totalorder %s345, %s347
      %p351 = scmp.eq.s32.totalorder %s44, 0
      %p352 = por %p350, %p351
      %p353 = scmp.ne.s32.totalorder %s345, %s347
      %p354 = scmp.eq.s32.totalorder %s49, 1
      %p355 = por %p353, %p354
      %p356 = scmp.ne.s32.totalorder %s347, %s348
      %p357 = scmp.eq.s32.totalorder %s49, 0
      %p358 = por %p356, %p357
      %p359 = scmp.ne.s32.totalorder %s347, %s348
      %p360 = scmp.eq.s32.totalorder %s50, 1
      %p361 = por %p359, %p360
      %p363 = scmp.ne.s32.totalorder %s348, %s362
      %p364 = scmp.eq.s32.totalorder %s50, 0
      %p365 = por %p363, %p364
      %s367 = sadd.s32 %s366, 1
      %p370 = scmp.eq.s32.totalorder %s44, 1
      %p371 = scmp.ne.s32.totalorder %s366, %s368
      %p372 = scmp.eq.s32.totalorder %s44, 0
      %p373 = por %p371, %p372
      %p374 = scmp.ne.s32.totalorder %s366, %s368
      %p375 = scmp.eq.s32.totalorder %s49, 1
      %p376 = por %p374, %p375
      %p377 = scmp.ne.s32.totalorder %s368, %s369
      %p378 = scmp.eq.s32.totalorder %s49, 0
      %p379 = por %p377, %p378
      %p380 = scmp.ne.s32.totalorder %s368, %s369
      %p381 = scmp.eq.s32.totalorder %s50, 1
      %p382 = por %p380, %p381
      %p384 = scmp.ne.s32.totalorder %s369, %s383
      %p385 = scmp.eq.s32.totalorder %s50, 0
      %p386 = por %p384, %p385
      %s388 = sadd.s32 %s387, 1
      %p391 = scmp.eq.s32.totalorder %s44, 1
      %p392 = scmp.ne.s32.totalorder %s387, %s389
      %p393 = scmp.eq.s32.totalorder %s44, 0
      %p394 = por %p392, %p393
      %p395 = scmp.ne.s32.totalorder %s387, %s389
      %p396 = scmp.eq.s32.totalorder %s49, 1
      %p397 = por %p395, %p396
      %p398 = scmp.ne.s32.totalorder %s389, %s390
      %p399 = scmp.eq.s32.totalorder %s49, 0
      %p400 = por %p398, %p399
      %p401 = scmp.ne.s32.totalorder %s389, %s390
      %p402 = scmp.eq.s32.totalorder %s50, 1
      %p403 = por %p401, %p402
      %p405 = scmp.ne.s32.totalorder %s390, %s404
      %p406 = scmp.eq.s32.totalorder %s50, 0
      %p407 = por %p405, %p406
      %s409 = sadd.s32 %s408, 1
      %p412 = scmp.eq.s32.totalorder %s44, 1
      %p413 = scmp.ne.s32.totalorder %s408, %s410
      %p414 = scmp.eq.s32.totalorder %s44, 0
      %p415 = por %p413, %p414
      %p416 = scmp.ne.s32.totalorder %s408, %s410
      %p417 = scmp.eq.s32.totalorder %s49, 1
      %p418 = por %p416, %p417
      %p419 = scmp.ne.s32.totalorder %s410, %s411
      %p420 = scmp.eq.s32.totalorder %s49, 0
      %p421 = por %p419, %p420
      %p422 = scmp.ne.s32.totalorder %s410, %s411
      %p423 = scmp.eq.s32.totalorder %s50, 1
      %p424 = por %p422, %p423
      %p426 = scmp.ne.s32.totalorder %s411, %s425
      %p427 = scmp.eq.s32.totalorder %s50, 0
      %p428 = por %p426, %p427
      %s430 = sadd.s32 %s429, 1
      %p433 = scmp.eq.s32.totalorder %s44, 1
      %p434 = scmp.ne.s32.totalorder %s429, %s431
      %p435 = scmp.eq.s32.totalorder %s44, 0
      %p436 = por %p434, %p435
      %p437 = scmp.ne.s32.totalorder %s429, %s431
      %p438 = scmp.eq.s32.totalorder %s49, 1
      %p439 = por %p437, %p438
      %p440 = scmp.ne.s32.totalorder %s431, %s432
      %p441 = scmp.eq.s32.totalorder %s49, 0
      %p442 = por %p440, %p441
      %p443 = scmp.ne.s32.totalorder %s431, %s432
      %p444 = scmp.eq.s32.totalorder %s50, 1
      %p445 = por %p443, %p444
      %p447 = scmp.ne.s32.totalorder %s432, %s446
      %p448 = scmp.eq.s32.totalorder %s50, 0
      %p449 = por %p447, %p448
      %s451 = sadd.s32 %s450, 1
      %p454 = scmp.eq.s32.totalorder %s44, 1
      %p455 = scmp.ne.s32.totalorder %s450, %s452
      %p456 = scmp.eq.s32.totalorder %s44, 0
      %p457 = por %p455, %p456
      %p458 = scmp.ne.s32.totalorder %s450, %s452
      %p459 = scmp.eq.s32.totalorder %s49, 1
      %p460 = por %p458, %p459
      %p461 = scmp.ne.s32.totalorder %s452, %s453
      %p462 = scmp.eq.s32.totalorder %s49, 0
      %p463 = por %p461, %p462
      %p464 = scmp.ne.s32.totalorder %s452, %s453
      %p465 = scmp.eq.s32.totalorder %s50, 1
      %p466 = por %p464, %p465
      %p468 = scmp.ne.s32.totalorder %s453, %s467
      %p469 = scmp.eq.s32.totalorder %s50, 0
      %p470 = por %p468, %p469
      %s472 = sadd.s32 %s471, 1
      %p475 = scmp.eq.s32.totalorder %s44, 1
      %p476 = scmp.ne.s32.totalorder %s471, %s473
      %p477 = scmp.eq.s32.totalorder %s44, 0
      %p478 = por %p476, %p477
      %p479 = scmp.ne.s32.totalorder %s471, %s473
      %p480 = scmp.eq.s32.totalorder %s49, 1
      %p481 = por %p479, %p480
      %p482 = scmp.ne.s32.totalorder %s473, %s474
      %p483 = scmp.eq.s32.totalorder %s49, 0
      %p484 = por %p482, %p483
      %p485 = scmp.ne.s32.totalorder %s473, %s474
      %p486 = scmp.eq.s32.totalorder %s50, 1
      %p487 = por %p485, %p486
      %p489 = scmp.ne.s32.totalorder %s474, %s488
      %p490 = scmp.eq.s32.totalorder %s50, 0
      %p491 = por %p489, %p490
      %s493 = sadd.s32 %s492, 1
      %p496 = scmp.eq.s32.totalorder %s44, 1
      %p497 = scmp.ne.s32.totalorder %s492, %s494
      %p498 = scmp.eq.s32.totalorder %s44, 0
      %p499 = por %p497, %p498
      %p500 = scmp.ne.s32.totalorder %s492, %s494
      %p501 = scmp.eq.s32.totalorder %s49, 1
      %p502 = por %p500, %p501
      %p503 = scmp.ne.s32.totalorder %s494, %s495
      %p504 = scmp.eq.s32.totalorder %s49, 0
      %p505 = por %p503, %p504
      %p506 = scmp.ne.s32.totalorder %s494, %s495
      %p507 = scmp.eq.s32.totalorder %s50, 1
      %p508 = por %p506, %p507
      %p510 = scmp.ne.s32.totalorder %s495, %s509
      %p511 = scmp.eq.s32.totalorder %s50, 0
      %p512 = por %p510, %p511
      %s514 = sadd.s32 %s513, 1
      %p517 = scmp.eq.s32.totalorder %s44, 1
      %p518 = scmp.ne.s32.totalorder %s513, %s515
      %p519 = scmp.eq.s32.totalorder %s44, 0
      %p520 = por %p518, %p519
      %p521 = scmp.ne.s32.totalorder %s513, %s515
      %p522 = scmp.eq.s32.totalorder %s49, 1
      %p523 = por %p521, %p522
      %p524 = scmp.ne.s32.totalorder %s515, %s516
      %p525 = scmp.eq.s32.totalorder %s49, 0
      %p526 = por %p524, %p525
      %p527 = scmp.ne.s32.totalorder %s515, %s516
      %p528 = scmp.eq.s32.totalorder %s50, 1
      %p529 = por %p527, %p528
      %p531 = scmp.ne.s32.totalorder %s516, %s530
      %p532 = scmp.eq.s32.totalorder %s50, 0
      %p533 = por %p531, %p532
      %s535 = sadd.s32 %s534, 1
      %p538 = scmp.eq.s32.totalorder %s44, 1
      %p539 = scmp.ne.s32.totalorder %s534, %s536
      %p540 = scmp.eq.s32.totalorder %s44, 0
      %p541 = por %p539, %p540
      %p542 = scmp.ne.s32.totalorder %s534, %s536
      %p543 = scmp.eq.s32.totalorder %s49, 1
      %p544 = por %p542, %p543
      %p545 = scmp.ne.s32.totalorder %s536, %s537
      %p546 = scmp.eq.s32.totalorder %s49, 0
      %p547 = por %p545, %p546
      %p548 = scmp.ne.s32.totalorder %s536, %s537
      %p549 = scmp.eq.s32.totalorder %s50, 1
      %p550 = por %p548, %p549
      %p552 = scmp.ne.s32.totalorder %s537, %s551
      %p553 = scmp.eq.s32.totalorder %s50, 0
      %p554 = por %p552, %p553
      %s556 = sadd.s32 %s555, 1
      %p559 = scmp.eq.s32.totalorder %s44, 1
      %p560 = scmp.ne.s32.totalorder %s555, %s557
      %p561 = scmp.eq.s32.totalorder %s44, 0
      %p562 = por %p560, %p561
      %p563 = scmp.ne.s32.totalorder %s555, %s557
      %p564 = scmp.eq.s32.totalorder %s49, 1
      %p565 = por %p563, %p564
      %p566 = scmp.ne.s32.totalorder %s557, %s558
      %p567 = scmp.eq.s32.totalorder %s49, 0
      %p568 = por %p566, %p567
      %p569 = scmp.ne.s32.totalorder %s557, %s558
      %p570 = scmp.eq.s32.totalorder %s50, 1
      %p571 = por %p569, %p570
      %p573 = scmp.ne.s32.totalorder %s558, %s572
      %p574 = scmp.eq.s32.totalorder %s50, 0
      %p575 = por %p573, %p574
      %s576 = ssub.s32 %s44, %s51
      %p577 = scmp.eq.s32.totalorder %s576, 0
      %s579 = sadd.s32 %s578, 1
      %s580 = scalar_select %p577, %s578, %s579
      %p583 = pneg %p577
      %p584 = scmp.eq.s32.totalorder %s44, 1
      %p585 = por %p583, %p584
      %p586 = scmp.ne.s32.totalorder %s578, %s581
      %p587 = scmp.eq.s32.totalorder %s44, 0
      %p588 = por %p586, %p587
      %p589 = scmp.ne.s32.totalorder %s578, %s581
      %p590 = scmp.eq.s32.totalorder %s49, 1
      %p591 = por %p589, %p590
      %p592 = scmp.ne.s32.totalorder %s581, %s582
      %p593 = scmp.eq.s32.totalorder %s49, 0
      %p594 = por %p592, %p593
      %p595 = scmp.ne.s32.totalorder %s581, %s582
      %p596 = scmp.eq.s32.totalorder %s50, 1
      %p597 = por %p595, %p596
      %p599 = scmp.ne.s32.totalorder %s582, %s598
      %p600 = scmp.eq.s32.totalorder %s50, 0
      %p601 = por %p599, %p600
      %p602 = scmp.le.s32.totalorder 1, %s44
      %p603 = scmp.lt.s32.totalorder %s44, 3
      %p604 = pnand %p602, %p603
      %p605 = pneg %p604
      // Predicated region
      $region9: #{decoder_layer.1} parent=5 // pred_check
        _
      $region10: #{decoder_layer.1} parent=5 // pred_check_branch
        %607 = sbr.rel (%p604) target = $region12
      $region11: #{decoder_layer.1} parent=5 // pred_region
        %s608 = ssub.s32 %s44, 1
        // Predicated region
        $region13: #{decoder_layer.1} parent=11 // pred_check
          %p609 = pneg %p169
        $region14: #{decoder_layer.1} parent=11 // pred_check_branch
          %611 = sbr.rel (%p609) target = $region16
        $region15: #{decoder_layer.1} parent=11 // pred_region
          _
        $region16: #{decoder_layer.1} parent=11 // pred_fallthru
          _
        // Predicated region
        $region17: #{decoder_layer.1} parent=11 // pred_check
          %p612 = pneg %p190
        $region18: #{decoder_layer.1} parent=11 // pred_check_branch
          %614 = sbr.rel (%p612) target = $region20
        $region19: #{decoder_layer.1} parent=11 // pred_region
          _
        $region20: #{decoder_layer.1} parent=11 // pred_fallthru
          _
        // Predicated region
        $region21: #{decoder_layer.1} parent=11 // pred_check
          %p615 = pneg %p211
        $region22: #{decoder_layer.1} parent=11 // pred_check_branch
          %617 = sbr.rel (%p615) target = $region24
        $region23: #{decoder_layer.1} parent=11 // pred_region
          %619 = vsyncadd [#allocation6], 0
          %s620 = sshll.u32 %s6, 4
          %s621 = int_to_ptr.hbm [resolvable:$true] %s620
          %s622 = sshll.u32 [#allocation5], 4
          %s623 = int_to_ptr.vmem [resolvable:$true] %s622
          %628 = dma.hbm_to_vmem [thread:$0]  %s621, 256, %s623, [#allocation6], 64, 64, 4
        $region24: #{decoder_layer.1} parent=11 // pred_fallthru
          _
        // Predicated region
        $region25: #{decoder_layer.1} parent=11 // pred_check
          %p629 = pneg %p232
        $region26: #{decoder_layer.1} parent=11 // pred_check_branch
          %631 = sbr.rel (%p629) target = $region28
        $region27: #{decoder_layer.1} parent=11 // pred_region
          _
        $region28: #{decoder_layer.1} parent=11 // pred_fallthru
          _
        // Predicated region
        $region29: #{decoder_layer.1} parent=11 // pred_check
          %p632 = pneg %p253
        $region30: #{decoder_layer.1} parent=11 // pred_check_branch
          %634 = sbr.rel (%p632) target = $region32
        $region31: #{decoder_layer.1} parent=11 // pred_region
          %636 = vsyncadd [#allocation6], 0
          %s638 = sshll.u32 %s8, 4
          %s639 = int_to_ptr.hbm [resolvable:$true] %s638
          %s640 = sshll.u32 [#allocation7], 4
          %s641 = int_to_ptr.vmem [resolvable:$true] %s640
          %643 = dma.hbm_to_vmem [thread:$0]  %s639, 16, %s641, [#allocation6]
        $region32: #{decoder_layer.1} parent=11 // pred_fallthru
          _
        // Predicated region
        $region33: #{decoder_layer.1} parent=11 // pred_check
          %p644 = pneg %p274
        $region34: #{decoder_layer.1} parent=11 // pred_check_branch
          %646 = sbr.rel (%p644) target = $region36
        $region35: #{decoder_layer.1} parent=11 // pred_region
          %648 = vsyncadd [#allocation9], 0
          %s650 = sshll.u32 %s9, 4
          %s651 = int_to_ptr.hbm [resolvable:$true] %s650
          %s652 = sshll.u32 [#allocation8], 4
          %s653 = int_to_ptr.vmem [resolvable:$true] %s652
          %655 = dma.hbm_to_vmem [thread:$0]  %s651, 16, %s653, [#allocation9]
        $region36: #{decoder_layer.1} parent=11 // pred_fallthru
          _
        // Predicated region
        $region37: #{decoder_layer.1} parent=11 // pred_check
          %p656 = pneg %p295
        $region38: #{decoder_layer.1} parent=11 // pred_check_branch
          %658 = sbr.rel (%p656) target = $region40
        $region39: #{decoder_layer.1} parent=11 // pred_region
          %660 = vsyncadd [#allocation9], 0
          %s661 = sshll.u32 %s10, 4
          %s662 = int_to_ptr.hbm [resolvable:$true] %s661
          %s663 = sshll.u32 [#allocation10], 4
          %s664 = int_to_ptr.vmem [resolvable:$true] %s663
          %669 = dma.hbm_to_vmem [thread:$0]  %s662, 256, %s664, [#allocation9], 64, 64, 4
        $region40: #{decoder_layer.1} parent=11 // pred_fallthru
          _
        // Predicated region
        $region41: #{decoder_layer.1} parent=11 // pred_check
          %p670 = pneg %p316
        $region42: #{decoder_layer.1} parent=11 // pred_check_branch
          %672 = sbr.rel (%p670) target = $region44
        $region43: #{decoder_layer.1} parent=11 // pred_region
          %674 = vsyncadd [#allocation12], 0
          %s676 = sshll.u32 %s11, 4
          %s677 = int_to_ptr.hbm [resolvable:$true] %s676
          %s678 = sshll.u32 [#allocation11], 4
          %s679 = int_to_ptr.vmem [resolvable:$true] %s678
          %681 = dma.hbm_to_vmem [thread:$0]  %s677, 16, %s679, [#allocation12]
        $region44: #{decoder_layer.1} parent=11 // pred_fallthru
          _
        // Predicated region
        $region45: #{decoder_layer.1} parent=11 // pred_check
          %p682 = pneg %p337
        $region46: #{decoder_layer.1} parent=11 // pred_check_branch
          %684 = sbr.rel (%p682) target = $region48
        $region47: #{decoder_layer.1} parent=11 // pred_region
          %686 = vsyncadd [#allocation12], 0
          %s687 = sshll.u32 %s12, 4
          %s688 = int_to_ptr.hbm [resolvable:$true] %s687
          %s689 = sshll.u32 [#allocation13], 4
          %s690 = int_to_ptr.vmem [resolvable:$true] %s689
          %695 = dma.hbm_to_vmem [thread:$0]  %s688, 256, %s690, [#allocation12], 64, 64, 4
        $region48: #{decoder_layer.1} parent=11 // pred_fallthru
          _
        // Predicated region
        $region49: #{decoder_layer.1} parent=11 // pred_check
          %p696 = pneg %p358
        $region50: #{decoder_layer.1} parent=11 // pred_check_branch
          %698 = sbr.rel (%p696) target = $region52
        $region51: #{decoder_layer.1} parent=11 // pred_region
          %700 = vsyncadd [#allocation15], 0
          %s702 = sshll.u32 %s13, 4
          %s703 = int_to_ptr.hbm [resolvable:$true] %s702
          %s704 = sshll.u32 [#allocation14], 4
          %s705 = int_to_ptr.vmem [resolvable:$true] %s704
          %707 = dma.hbm_to_vmem [thread:$0]  %s703, 16, %s705, [#allocation15]
        $region52: #{decoder_layer.1} parent=11 // pred_fallthru
          _
        // Predicated region
        $region53: #{decoder_layer.1} parent=11 // pred_check
          %p708 = pneg %p379
        $region54: #{decoder_layer.1} parent=11 // pred_check_branch
          %710 = sbr.rel (%p708) target = $region56
        $region55: #{decoder_layer.1} parent=11 // pred_region
          %712 = vsyncadd [#allocation15], 0
          %s713 = sshll.u32 %s14, 4
          %s714 = int_to_ptr.hbm [resolvable:$true] %s713
          %s715 = sshll.u32 [#allocation16], 4
          %s716 = int_to_ptr.vmem [resolvable:$true] %s715
          %721 = dma.hbm_to_vmem [thread:$0]  %s714, 256, %s716, [#allocation15], 64, 64, 4
        $region56: #{decoder_layer.1} parent=11 // pred_fallthru
          _
        // Predicated region
        $region57: #{decoder_layer.1} parent=11 // pred_check
          %p722 = pneg %p400
        $region58: #{decoder_layer.1} parent=11 // pred_check_branch
          %724 = sbr.rel (%p722) target = $region60
        $region59: #{decoder_layer.1} parent=11 // pred_region
          %726 = vsyncadd [#allocation18], 0
          %s728 = sshll.u32 %s15, 4
          %s729 = int_to_ptr.hbm [resolvable:$true] %s728
          %s730 = sshll.u32 [#allocation17], 4
          %s731 = int_to_ptr.vmem [resolvable:$true] %s730
          %733 = dma.hbm_to_vmem [thread:$0]  %s729, 16, %s731, [#allocation18]
        $region60: #{decoder_layer.1} parent=11 // pred_fallthru
          _
        // Predicated region
        $region61: #{decoder_layer.1} parent=11 // pred_check
          %p734 = pneg %p421
        $region62: #{decoder_layer.1} parent=11 // pred_check_branch
          %736 = sbr.rel (%p734) target = $region64
        $region63: #{decoder_layer.1} parent=11 // pred_region
          %738 = vsyncadd [#allocation18], 0
          %s740 = sshll.u32 %s16, 4
          %s741 = int_to_ptr.hbm [resolvable:$true] %s740
          %s742 = sshll.u32 [#allocation19], 4
          %s743 = int_to_ptr.vmem [resolvable:$true] %s742
          %745 = dma.hbm_to_vmem [thread:$0]  %s741, 16, %s743, [#allocation18]
        $region64: #{decoder_layer.1} parent=11 // pred_fallthru
          _
        // Predicated region
        $region65: #{decoder_layer.1} parent=11 // pred_check
          %p746 = pneg %p442
        $region66: #{decoder_layer.1} parent=11 // pred_check_branch
          %748 = sbr.rel (%p746) target = $region68
        $region67: #{decoder_layer.1} parent=11 // pred_region
          %750 = vsyncadd [#allocation21], 0
          %s752 = sshll.u32 %s17, 4
          %s753 = int_to_ptr.hbm [resolvable:$true] %s752
          %s754 = sshll.u32 [#allocation20], 4
          %s755 = int_to_ptr.vmem [resolvable:$true] %s754
          %757 = dma.hbm_to_vmem [thread:$0]  %s753, 16, %s755, [#allocation21]
        $region68: #{decoder_layer.1} parent=11 // pred_fallthru
          _
        // Predicated region
        $region69: #{decoder_layer.1} parent=11 // pred_check
          %p758 = pneg %p463
        $region70: #{decoder_layer.1} parent=11 // pred_check_branch
          %760 = sbr.rel (%p758) target = $region72
        $region71: #{decoder_layer.1} parent=11 // pred_region
          %762 = vsyncadd [#allocation21], 0
          %s763 = sshll.u32 %s18, 4
          %s764 = int_to_ptr.hbm [resolvable:$true] %s763
          %s765 = sshll.u32 [#allocation22], 4
          %s766 = int_to_ptr.vmem [resolvable:$true] %s765
          %771 = dma.hbm_to_vmem [thread:$0]  %s764, 256, %s766, [#allocation21], 64, 64, 4
        $region72: #{decoder_layer.1} parent=11 // pred_fallthru
          _
        // Predicated region
        $region73: #{decoder_layer.1} parent=11 // pred_check
          %p772 = pneg %p484
        $region74: #{decoder_layer.1} parent=11 // pred_check_branch
          %774 = sbr.rel (%p772) target = $region76
        $region75: #{decoder_layer.1} parent=11 // pred_region
          %776 = vsyncadd [#allocation24], 0
          %s778 = sshll.u32 %s19, 4
          %s779 = int_to_ptr.hbm [resolvable:$true] %s778
          %s780 = sshll.u32 [#allocation23], 4
          %s781 = int_to_ptr.vmem [resolvable:$true] %s780
          %783 = dma.hbm_to_vmem [thread:$0]  %s779, 16, %s781, [#allocation24]
        $region76: #{decoder_layer.1} parent=11 // pred_fallthru
          _
        // Predicated region
        $region77: #{decoder_layer.1} parent=11 // pred_check
          %p784 = pneg %p505
        $region78: #{decoder_layer.1} parent=11 // pred_check_branch
          %786 = sbr.rel (%p784) target = $region80
        $region79: #{decoder_layer.1} parent=11 // pred_region
          _
        $region80: #{decoder_layer.1} parent=11 // pred_fallthru
          _
        // Predicated region
        $region81: #{decoder_layer.1} parent=11 // pred_check
          %p787 = pneg %p526
        $region82: #{decoder_layer.1} parent=11 // pred_check_branch
          %789 = sbr.rel (%p787) target = $region84
        $region83: #{decoder_layer.1} parent=11 // pred_region
          %791 = vsyncadd [#allocation24], 0
          %s793 = sshll.u32 %s21, 4
          %s794 = int_to_ptr.hbm [resolvable:$true] %s793
          %s795 = sshll.u32 [#allocation25], 4
          %s796 = int_to_ptr.vmem [resolvable:$true] %s795
          %798 = dma.hbm_to_vmem [thread:$0]  %s794, 16, %s796, [#allocation24]
        $region84: #{decoder_layer.1} parent=11 // pred_fallthru
          _
        // Predicated region
        $region85: #{decoder_layer.1} parent=11 // pred_check
          %p799 = pneg %p547
        $region86: #{decoder_layer.1} parent=11 // pred_check_branch
          %801 = sbr.rel (%p799) target = $region88
        $region87: #{decoder_layer.1} parent=11 // pred_region
          _
        $region88: #{decoder_layer.1} parent=11 // pred_fallthru
          _
        // Predicated region
        $region89: #{decoder_layer.1} parent=11 // pred_check
          %p802 = pneg %p568
        $region90: #{decoder_layer.1} parent=11 // pred_check_branch
          %804 = sbr.rel (%p802) target = $region92
        $region91: #{decoder_layer.1} parent=11 // pred_region
          %806 = vsyncadd [#allocation27], 0
          %s808 = sshll.u32 %s23, 4
          %s809 = int_to_ptr.hbm [resolvable:$true] %s808
          %s810 = sshll.u32 [#allocation26], 4
          %s811 = int_to_ptr.vmem [resolvable:$true] %s810
          %813 = dma.hbm_to_vmem [thread:$0]  %s809, 16, %s811, [#allocation27]
        $region92: #{decoder_layer.1} parent=11 // pred_fallthru
          _
      $region12: #{decoder_layer.1} parent=5 // pred_fallthru
        _
      %p814 = scmp.lt.s32.totalorder %s44, 2
      // Predicated region
      $region93: #{decoder_layer.1} parent=5 // pred_check
        %p815 = pneg %p814
      $region94: #{decoder_layer.1} parent=5 // pred_check_branch
        %817 = sbr.rel (%p815) target = $region96
      $region95: #{decoder_layer.1} parent=5 // pred_region
        // Predicated region
        $region97: #{decoder_layer.1} parent=95 // pred_check
          %p818 = pneg %p64
        $region98: #{decoder_layer.1} parent=95 // pred_check_branch
          %820 = sbr.rel (%p818) target = $region100
        $region99: #{decoder_layer.1} parent=95 // pred_region
          %p821 = scmp.lt.s32.totalorder %s44, 1
          %s822 = scalar_select %p821, %s44, 1
          %s823 = smul.addr %s822, 8
          %s824 = scalar_lea.vmem %s0, %s823
        $region100: #{decoder_layer.1} parent=95 // pred_fallthru
          _
        // Predicated region
        $region101: #{decoder_layer.1} parent=95 // pred_check
          %p825 = pneg %p90
        $region102: #{decoder_layer.1} parent=95 // pred_check_branch
          %827 = sbr.rel (%p825) target = $region104
        $region103: #{decoder_layer.1} parent=95 // pred_region
          %p828 = scmp.lt.s32.totalorder %s44, 1
          %s829 = scalar_select %p828, %s44, 1
          %s830 = smul.addr %s829, 8
          %s831 = scalar_lea.vmem %s1, %s830
        $region104: #{decoder_layer.1} parent=95 // pred_fallthru
          _
        // Predicated region
        $region105: #{decoder_layer.1} parent=95 // pred_check
          %p832 = pneg %p116
        $region106: #{decoder_layer.1} parent=95 // pred_check_branch
          %834 = sbr.rel (%p832) target = $region108
        $region107: #{decoder_layer.1} parent=95 // pred_region
          %p835 = scmp.lt.s32.totalorder %s44, 1
          %s836 = scalar_select %p835, %s44, 1
          %s837 = smul.addr %s836, 8
          %s838 = scalar_lea.vmem %s2, %s837
        $region108: #{decoder_layer.1} parent=95 // pred_fallthru
          _
        // Predicated region
        $region109: #{decoder_layer.1} parent=95 // pred_check
          %p839 = pneg %p142
        $region110: #{decoder_layer.1} parent=95 // pred_check_branch
          %841 = sbr.rel (%p839) target = $region112
        $region111: #{decoder_layer.1} parent=95 // pred_region
          %s842 = sand.u32 %s132, 1
          %s843 = scalar_lea.sflag [#allocation3], %s842
          %s844 = sand.u32 %s132, 1
          %s845 = smul.addr %s844, 8
          %s846 = scalar_lea.vmem [#allocation2], %s845
          %848 = vsyncadd %s843, 0
          %s849 = smul.addr %s44, 8
          %s850 = scalar_lea.hbm %s3, %s849
          %s852 = sshll.u32 %s850, 4
          %s853 = int_to_ptr.hbm [resolvable:$true] %s852
          %s854 = sshll.u32 %s846, 4
          %s855 = int_to_ptr.vmem [resolvable:$true] %s854
          %857 = dma.hbm_to_vmem [thread:$0]  %s853, 128, %s855, %s843
        $region112: #{decoder_layer.1} parent=95 // pred_fallthru
          _
      $region96: #{decoder_layer.1} parent=5 // pred_fallthru
        _
      %p858 = scmp.le.s32.totalorder 1, %s44
      %p859 = scmp.lt.s32.totalorder %s44, 3
      %p860 = pnand %p858, %p859
      %p861 = pneg %p860
      // Predicated region
      $region113: #{decoder_layer.1} parent=5 // pred_check
        _
      $region114: #{decoder_layer.1} parent=5 // pred_check_branch
        %863 = sbr.rel (%p860) target = $region116
      $region115: #{decoder_layer.1} parent=5 // pred_region
        %s864 = ssub.s32 %s44, 1
        %s865 = sand.u32 %s135, 1
        %s866 = scalar_lea.sflag [#allocation3], %s865
        %s867 = sand.u32 %s135, 1
        %s868 = smul.addr %s867, 8
        %s869 = scalar_lea.vmem [#allocation2], %s868
        // Predicated region
        $region117: #{decoder_layer.1} parent=115 // pred_check
          %p870 = pneg %p148
        $region118: #{decoder_layer.1} parent=115 // pred_check_branch
          %872 = sbr.rel (%p870) target = $region120
        $region119: #{decoder_layer.1} parent=115 // pred_region
          %874 = dma.done %s866, 128
        $region120: #{decoder_layer.1} parent=115 // pred_fallthru
          _
        // Predicated region
        $region121: #{decoder_layer.1} parent=115 // pred_check
          %p875 = pneg %p211
        $region122: #{decoder_layer.1} parent=115 // pred_check_branch
          %877 = sbr.rel (%p875) target = $region124
        $region123: #{decoder_layer.1} parent=115 // pred_region
          %879 = dma.done [#allocation6], 256
        $region124: #{decoder_layer.1} parent=115 // pred_fallthru
          _
        // Predicated region
        $region125: #{decoder_layer.1} parent=115 // pred_check
          %p880 = pneg %p253
        $region126: #{decoder_layer.1} parent=115 // pred_check_branch
          %882 = sbr.rel (%p880) target = $region128
        $region127: #{decoder_layer.1} parent=115 // pred_region
          %884 = dma.done [#allocation6], 16
        $region128: #{decoder_layer.1} parent=115 // pred_fallthru
          _
        // Predicated region
        $region129: #{decoder_layer.1} parent=115 // pred_check
          %p885 = pneg %p274
        $region130: #{decoder_layer.1} parent=115 // pred_check_branch
          %887 = sbr.rel (%p885) target = $region132
        $region131: #{decoder_layer.1} parent=115 // pred_region
          %889 = dma.done [#allocation9], 16
        $region132: #{decoder_layer.1} parent=115 // pred_fallthru
          _
        // Predicated region
        $region133: #{decoder_layer.1} parent=115 // pred_check
          %p890 = pneg %p295
        $region134: #{decoder_layer.1} parent=115 // pred_check_branch
          %892 = sbr.rel (%p890) target = $region136
        $region135: #{decoder_layer.1} parent=115 // pred_region
          %894 = dma.done [#allocation9], 256
        $region136: #{decoder_layer.1} parent=115 // pred_fallthru
          _
        // Predicated region
        $region137: #{decoder_layer.1} parent=115 // pred_check
          %p895 = pneg %p316
        $region138: #{decoder_layer.1} parent=115 // pred_check_branch
          %897 = sbr.rel (%p895) target = $region140
        $region139: #{decoder_layer.1} parent=115 // pred_region
          %899 = dma.done [#allocation12], 16
        $region140: #{decoder_layer.1} parent=115 // pred_fallthru
          _
        // Predicated region
        $region141: #{decoder_layer.1} parent=115 // pred_check
          %p900 = pneg %p337
        $region142: #{decoder_layer.1} parent=115 // pred_check_branch
          %902 = sbr.rel (%p900) target = $region144
        $region143: #{decoder_layer.1} parent=115 // pred_region
          %904 = dma.done [#allocation12], 256
        $region144: #{decoder_layer.1} parent=115 // pred_fallthru
          _
        // Predicated region
        $region145: #{decoder_layer.1} parent=115 // pred_check
          %p905 = pneg %p358
        $region146: #{decoder_layer.1} parent=115 // pred_check_branch
          %907 = sbr.rel (%p905) target = $region148
        $region147: #{decoder_layer.1} parent=115 // pred_region
          %909 = dma.done [#allocation15], 16
        $region148: #{decoder_layer.1} parent=115 // pred_fallthru
          _
        // Predicated region
        $region149: #{decoder_layer.1} parent=115 // pred_check
          %p910 = pneg %p379
        $region150: #{decoder_layer.1} parent=115 // pred_check_branch
          %912 = sbr.rel (%p910) target = $region152
        $region151: #{decoder_layer.1} parent=115 // pred_region
          %914 = dma.done [#allocation15], 256
        $region152: #{decoder_layer.1} parent=115 // pred_fallthru
          _
        // Predicated region
        $region153: #{decoder_layer.1} parent=115 // pred_check
          %p915 = pneg %p400
        $region154: #{decoder_layer.1} parent=115 // pred_check_branch
          %917 = sbr.rel (%p915) target = $region156
        $region155: #{decoder_layer.1} parent=115 // pred_region
          %919 = dma.done [#allocation18], 16
        $region156: #{decoder_layer.1} parent=115 // pred_fallthru
          _
        // Predicated region
        $region157: #{decoder_layer.1} parent=115 // pred_check
          %p920 = pneg %p421
        $region158: #{decoder_layer.1} parent=115 // pred_check_branch
          %922 = sbr.rel (%p920) target = $region160
        $region159: #{decoder_layer.1} parent=115 // pred_region
          %924 = dma.done [#allocation18], 16
        $region160: #{decoder_layer.1} parent=115 // pred_fallthru
          _
        // Predicated region
        $region161: #{decoder_layer.1} parent=115 // pred_check
          %p925 = pneg %p442
        $region162: #{decoder_layer.1} parent=115 // pred_check_branch
          %927 = sbr.rel (%p925) target = $region164
        $region163: #{decoder_layer.1} parent=115 // pred_region
          %929 = dma.done [#allocation21], 16
        $region164: #{decoder_layer.1} parent=115 // pred_fallthru
          _
        // Predicated region
        $region165: #{decoder_layer.1} parent=115 // pred_check
          %p930 = pneg %p463
        $region166: #{decoder_layer.1} parent=115 // pred_check_branch
          %932 = sbr.rel (%p930) target = $region168
        $region167: #{decoder_layer.1} parent=115 // pred_region
          %934 = dma.done [#allocation21], 256
        $region168: #{decoder_layer.1} parent=115 // pred_fallthru
          _
        // Predicated region
        $region169: #{decoder_layer.1} parent=115 // pred_check
          %p935 = pneg %p484
        $region170: #{decoder_layer.1} parent=115 // pred_check_branch
          %937 = sbr.rel (%p935) target = $region172
        $region171: #{decoder_layer.1} parent=115 // pred_region
          %939 = dma.done [#allocation24], 16
        $region172: #{decoder_layer.1} parent=115 // pred_fallthru
          _
        // Predicated region
        $region173: #{decoder_layer.1} parent=115 // pred_check
          %p940 = pneg %p526
        $region174: #{decoder_layer.1} parent=115 // pred_check_branch
          %942 = sbr.rel (%p940) target = $region176
        $region175: #{decoder_layer.1} parent=115 // pred_region
          %944 = dma.done [#allocation24], 16
        $region176: #{decoder_layer.1} parent=115 // pred_fallthru
          _
        // Predicated region
        $region177: #{decoder_layer.1} parent=115 // pred_check
          %p945 = pneg %p568
        $region178: #{decoder_layer.1} parent=115 // pred_check_branch
          %947 = sbr.rel (%p945) target = $region180
        $region179: #{decoder_layer.1} parent=115 // pred_region
          %949 = dma.done [#allocation27], 16
        $region180: #{decoder_layer.1} parent=115 // pred_fallthru
          _
        %p950 = scmp.lt.s32.totalorder %s49, 1
        %s951 = scalar_select %p950, %s49, 1
        %s952 = smul.addr %s951, 8
        %s953 = scalar_lea.vmem %s0, %s952
        %p954 = pneg %p70
        %p955 = pneg %p67
        %p956 = scmp.lt.s32.totalorder %s49, 1
        %s957 = scalar_select %p956, %s49, 1
        %s958 = smul.addr %s957, 8
        %s959 = scalar_lea.vmem %s1, %s958
        %p960 = pneg %p96
        %p961 = pneg %p93
        %p962 = scmp.lt.s32.totalorder %s49, 1
        %s963 = scalar_select %p962, %s49, 1
        %s964 = smul.addr %s963, 8
        %s965 = scalar_lea.vmem %s2, %s964
        %p966 = pneg %p122
        %p967 = pneg %p119
        %s968 = sand.u32 %s135, 1
        %s969 = scalar_lea.sflag [#allocation3], %s968
        %s970 = sand.u32 %s135, 1
        %s971 = smul.addr %s970, 8
        %s972 = scalar_lea.vmem [#allocation2], %s971
        %p973 = pneg %p148
        %p974 = pneg %p145
        %p975 = pneg %p169
        %p976 = pneg %p166
        %p977 = pneg %p190
        %p978 = pneg %p187
        %p979 = pneg %p211
        %p980 = pneg %p208
        %p981 = pneg %p232
        %p982 = pneg %p229
        %p983 = pneg %p253
        %p984 = pneg %p250
        %p985 = pneg %p274
        %p986 = pneg %p271
        %p987 = pneg %p295
        %p988 = pneg %p292
        %p989 = pneg %p316
        %p990 = pneg %p313
        %p991 = pneg %p337
        %p992 = pneg %p334
        %p993 = pneg %p358
        %p994 = pneg %p355
        %p995 = pneg %p379
        %p996 = pneg %p376
        %p997 = pneg %p400
        %p998 = pneg %p397
        %p999 = pneg %p421
        %p1000 = pneg %p418
        %p1001 = pneg %p442
        %p1002 = pneg %p439
        %p1003 = pneg %p463
        %p1004 = pneg %p460
        %p1005 = pneg %p484
        %p1006 = pneg %p481
        %p1007 = pneg %p505
        %p1008 = pneg %p502
        %p1009 = pneg %p526
        %p1010 = pneg %p523
        %p1011 = pneg %p547
        %p1012 = pneg %p544
        %p1013 = pneg %p568
        %p1014 = pneg %p565
        %p1015 = pneg %p594
        %p1016 = pneg %p591
        %s1017 = sand.u32 %s581, 1
        %s1018 = scalar_lea.sflag [#allocation4], %s1017
        %s1019 = sand.u32 %s581, 1
        %s1020 = smul.addr %s1019, 8
        %s1021 = scalar_lea.vmem [#allocation28], %s1020
        %p1022 = scmp.lt.s32.totalorder %s49, 1
        %s1023 = scalar_select %p1022, %s49, 1
        %s1024 = smul.addr %s1023, 8
        %s1025 = scalar_lea.vmem %s0, %s1024
        %p1026 = scmp.lt.s32.totalorder %s49, 1
        %s1027 = scalar_select %p1026, %s49, 1
        %s1028 = smul.addr %s1027, 8
        %s1029 = scalar_lea.vmem %s1, %s1028
        %p1030 = scmp.lt.s32.totalorder %s49, 1
        %s1031 = scalar_select %p1030, %s49, 1
        %s1032 = smul.addr %s1031, 8
        %s1033 = scalar_lea.vmem %s2, %s1032
        %v1035 = vld [vmem:[%s1033] sm:$0xff]
        %v1036 = vld [vmem:[%s869] sm:$0xff]
        %v1037 = vld [vmem:[%s1025] sm:$0xff]
        %v1038 = vld [vmem:[%s1029] sm:$0xff]
        %v1039 = vpack.c.bf16 %v1035, %v1035
        %v1040 = vpack.c.bf16 %v1036, %v1036
        %v1041 = vld [vmem:[%s4] sm:$0xf]
        %v1042 = vld [vmem:[%s4 + $0x4] sm:$0xf]
        %v1043 = vld [vmem:[%s4 + $0x8] sm:$0xf]
        %v1044 = vld [vmem:[%s4 + $0xc] sm:$0xf]
        %v1045 = vld [vmem:[%s5] sm:$0x1]
        %v1047 = vperm.slane %v1045, 0
        %v1053 = vunpack.c.l.b16 %v1041
        %v1054 = vunpack.c.l.b16 %v1042
        %v1055 = vunpack.c.l.b16 %v1043
        %v1056 = vunpack.c.l.b16 %v1044
        %v1057 = vpack.c.b16 %v1054, %v1053
        %v1058 = vpack.c.b16 %v1056, %v1055
        %vm1061 = vcmask 261120
        %v1063 = vsel %vm1061, %v1039, 0
        %1065 = vmatpush.bf16.msra.mxu0 0
        %1066 = vmatpush.bf16.msra.mxu0 0
        %1067 = vmatpush.bf16.msra.mxu0 0
        %1068 = vmatpush.bf16.msra.mxu0 0
        %1069 = vmatpush.bf16.msra.mxu0 0
        %1070 = vmatpush.bf16.msra.mxu0 0
        %1071 = vmatpush.bf16.msra.mxu0 %v1058
        %1072 = vmatpush.bf16.msra.mxu0 %v1057
        %1073 = vmatmul.bf16.gmra.mxu0 %v1063
        %v1074 = vpop.f32.mrf.mxu0
        %v1075 = vadd.f32 %v1047, %v1074
        %v1076 = vpop.f32.mrf.mxu0
        %1077 = vdwg.mxu0
        %v1078 = vld [vmem:[#allocation5] sm:$0xf]
        %v1079 = vld [vmem:[#allocation5 + $0x4] sm:$0xf]
        %v1080 = vld [vmem:[#allocation5 + $0x8] sm:$0xf]
        %v1081 = vld [vmem:[#allocation5 + $0xc] sm:$0xf]
        %v1082 = vpack.c.bf16 %v1075, %v1075
        %v1084 = vunpack.c.l.b16 %v1082
        %v1085 = vpack.c.b16 %v1084, %v1084
        %1086 = vrot.lane.b32.xlu0 %v1085, 96
        %v1087 = vpop.permute.xlu0 %1086
        %vm1088 = vcmask 64512
        %v1090 = vsel %vm1088, %v1082, 0
        %v1093 = vsel %vm1088, %v1087, 0
        %1095 = vmatpush.bf16.xpose.msra.mxu0 0
        %1096 = vmatpush.bf16.xpose.msra.mxu0 0
        %1097 = vmatpush.bf16.xpose.msra.mxu0 0
        %1098 = vmatpush.bf16.xpose.msra.mxu0 0
        %1099 = vmatpush.bf16.xpose.msra.mxu0 0
        %1100 = vmatpush.bf16.xpose.msra.mxu0 0
        %1101 = vmatpush.bf16.xpose.msra.mxu0 0
        %1102 = vmatpush.bf16.xpose.msra.mxu0 %v1093
        %1103 = vmatmul.bf16.gmra.mxu0 %v1090
        %v1104 = vpop.f32.mrf.mxu0
        %v1105 = vadd.f32 %v1037, %v1104
        %v1106 = vpop.f32.mrf.mxu0
        %1107 = vdwg.mxu0
        %v1108 = vsel %vm1088, %v1105, -inf
        %1109 = vmax.xlane.f32.xlu0 %v1108
        %v1110 = vpop.xlane.xlu0 %1109
        %v1111 = vsub.f32 %v1105, %v1110
        %v1112 = vmul.f32 %v1111, 1.442695
        %v1113 = vpow.pop %v1112
        %v1114 = vsel %vm1088, %v1113, 0.0
        %1115 = vadd.xlane.f32.xlu0 %v1114
        %v1116 = vpop.xlane.xlu0 %1115
        %v1117 = vrcp.pop %v1116
        %v1118 = vmul.f32 %v1116, %v1117
        %v1119 = vsub.f32 1.0, %v1118
        %v1120 = vmul.f32 %v1117, %v1119
        %v1121 = vadd.f32 %v1117, %v1120
        %vm1122 = vweird.f32 %v1116
        %vm1123 = vweird.f32 %v1117
        %vm1124 = vmor %vm1122, %vm1123
        %v1125 = vsel %vm1124, %v1117, %v1121
        %v1126 = vand.u32 2147483647, %v1116
        %vm1127 = vcmp.eq.f32.partialorder %v1126, 8.507059e+37
        %v1128 = vand.u32 %v1116, 2147483648
        %v1129 = vor.u32 1.1754944e-38, %v1128
        %v1130 = vsel %vm1127, %v1129, %v1125
        %v1131 = vmul.f32 %v1113, %v1130
        %v1132 = vpack.c.bf16 %v1131, %v1131
        %1133 = vrot.lane.b32.xlu0 %v1085, 64
        %v1134 = vpop.permute.xlu0 %1133
        %v1136 = vsel %vm1088, %v1132, 0
        %vm1138 = vcmask 1043456
        %v1140 = vsel %vm1138, %v1134, 0
        %1142 = vmatpush.bf16.msra.mxu0 0
        %1143 = vmatpush.bf16.msra.mxu0 0
        %1144 = vmatpush.bf16.msra.mxu0 0
        %1145 = vmatpush.bf16.msra.mxu0 0
        %1146 = vmatpush.bf16.msra.mxu0 0
        %1147 = vmatpush.bf16.msra.mxu0 0
        %1148 = vmatpush.bf16.msra.mxu0 0
        %1149 = vmatpush.bf16.msra.mxu0 %v1140
        %1150 = vmatmul.bf16.gmra.mxu0 %v1136
        %v1151 = vpop.f32.mrf.mxu0
        %v1152 = vadd.f32 0.0, %v1151
        %v1153 = vpop.f32.mrf.mxu0
        %1154 = vdwg.mxu0
        %v1155 = vpack.c.bf16 %v1152, %v1152
        %1156 = vrot.lane.b32.xlu0 %v1085, 120
        %v1157 = vpop.permute.xlu0 %1156
        %1158 = vrot.lane.b32.xlu0 %v1085, 88
        %v1159 = vpop.permute.xlu0 %1158
        %v1161 = vsel %vm1088, %v1157, 0
        %v1164 = vsel %vm1088, %v1159, 0
        %1166 = vmatpush.bf16.xpose.msra.mxu0 0
        %1167 = vmatpush.bf16.xpose.msra.mxu0 0
        %1168 = vmatpush.bf16.xpose.msra.mxu0 0
        %1169 = vmatpush.bf16.xpose.msra.mxu0 0
        %1170 = vmatpush.bf16.xpose.msra.mxu0 0
        %1171 = vmatpush.bf16.xpose.msra.mxu0 0
        %1172 = vmatpush.bf16.xpose.msra.mxu0 0
        %1173 = vmatpush.bf16.xpose.msra.mxu0 %v1164
        %1174 = vmatmul.bf16.gmra.mxu0 %v1161
        %v1175 = vpop.f32.mrf.mxu0
        %v1176 = vadd.f32 %v1037, %v1175
        %v1177 = vpop.f32.mrf.mxu0
        %1178 = vdwg.mxu0
        %v1179 = vsel %vm1088, %v1176, -inf
        %1180 = vmax.xlane.f32.xlu0 %v1179
        %v1181 = vpop.xlane.xlu0 %1180
        %v1182 = vsub.f32 %v1176, %v1181
        %v1183 = vmul.f32 %v1182, 1.442695
        %v1184 = vpow.pop %v1183
        %v1185 = vsel %vm1088, %v1184, 0.0
        %1186 = vadd.xlane.f32.xlu0 %v1185
        %v1187 = vpop.xlane.xlu0 %1186
        %v1188 = vrcp.pop %v1187
        %v1189 = vmul.f32 %v1187, %v1188
        %v1190 = vsub.f32 1.0, %v1189
        %v1191 = vmul.f32 %v1188, %v1190
        %v1192 = vadd.f32 %v1188, %v1191
        %vm1193 = vweird.f32 %v1187
        %vm1194 = vweird.f32 %v1188
        %vm1195 = vmor %vm1193, %vm1194
        %v1196 = vsel %vm1195, %v1188, %v1192
        %v1197 = vand.u32 2147483647, %v1187
        %vm1198 = vcmp.eq.f32.partialorder %v1197, 8.507059e+37
        %v1199 = vand.u32 %v1187, 2147483648
        %v1200 = vor.u32 1.1754944e-38, %v1199
        %v1201 = vsel %vm1198, %v1200, %v1196
        %v1202 = vmul.f32 %v1184, %v1201
        %v1203 = vpack.c.bf16 %v1202, %v1202
        %1204 = vrot.lane.b32.xlu0 %v1085, 56
        %v1205 = vpop.permute.xlu0 %1204
        %v1207 = vsel %vm1088, %v1203, 0
        %v1210 = vsel %vm1138, %v1205, 0
        %1212 = vmatpush.bf16.msra.mxu0 0
        %1213 = vmatpush.bf16.msra.mxu0 0
        %1214 = vmatpush.bf16.msra.mxu0 0
        %1215 = vmatpush.bf16.msra.mxu0 0
        %1216 = vmatpush.bf16.msra.mxu0 0
        %1217 = vmatpush.bf16.msra.mxu0 0
        %1218 = vmatpush.bf16.msra.mxu0 0
        %1219 = vmatpush.bf16.msra.mxu0 %v1210
        %1220 = vmatmul.bf16.gmra.mxu0 %v1207
        %v1221 = vpop.f32.mrf.mxu0
        %v1222 = vadd.f32 0.0, %v1221
        %v1223 = vpop.f32.mrf.mxu0
        %1224 = vdwg.mxu0
        %v1225 = vpack.c.bf16 %v1222, %v1222
        %v1227 = vsel %vm1088, %v1225, 0
        %v1230 = vsel %vm1138, %v1079, 0
        %1232 = vmatpush.bf16.msra.mxu0 0
        %1233 = vmatpush.bf16.msra.mxu0 0
        %1234 = vmatpush.bf16.msra.mxu0 0
        %1235 = vmatpush.bf16.msra.mxu0 0
        %1236 = vmatpush.bf16.msra.mxu0 0
        %1237 = vmatpush.bf16.msra.mxu0 0
        %1238 = vmatpush.bf16.msra.mxu0 0
        %1239 = vmatpush.bf16.msra.mxu0 %v1230
        %1240 = vmatmul.bf16.gmra.mxu0 %v1227
        %v1241 = vpop.f32.mrf.mxu0
        %v1242 = vadd.f32 0.0, %v1241
        %v1243 = vpop.f32.mrf.mxu0
        %1244 = vdwg.mxu0
        %v1246 = vsel %vm1088, %v1155, 0
        %v1249 = vsel %vm1138, %v1078, 0
        %1251 = vmatpush.bf16.msra.mxu0 0
        %1252 = vmatpush.bf16.msra.mxu0 0
        %1253 = vmatpush.bf16.msra.mxu0 0
        %1254 = vmatpush.bf16.msra.mxu0 0
        %1255 = vmatpush.bf16.msra.mxu0 0
        %1256 = vmatpush.bf16.msra.mxu0 0
        %1257 = vmatpush.bf16.msra.mxu0 0
        %1258 = vmatpush.bf16.msra.mxu0 %v1249
        %1259 = vmatmul.bf16.gmra.mxu0 %v1246
        %v1260 = vpop.f32.mrf.mxu0
        %v1261 = vadd.f32 %v1242, %v1260
        %v1262 = vpop.f32.mrf.mxu0
        %1263 = vdwg.mxu0
        %1264 = vrot.lane.b32.xlu0 %v1085, 112
        %v1265 = vpop.permute.xlu0 %1264
        %1266 = vrot.lane.b32.xlu0 %v1085, 80
        %v1267 = vpop.permute.xlu0 %1266
        %v1269 = vsel %vm1088, %v1265, 0
        %v1272 = vsel %vm1088, %v1267, 0
        %1274 = vmatpush.bf16.xpose.msra.mxu0 0
        %1275 = vmatpush.bf16.xpose.msra.mxu0 0
        %1276 = vmatpush.bf16.xpose.msra.mxu0 0
        %1277 = vmatpush.bf16.xpose.msra.mxu0 0
        %1278 = vmatpush.bf16.xpose.msra.mxu0 0
        %1279 = vmatpush.bf16.xpose.msra.mxu0 0
        %1280 = vmatpush.bf16.xpose.msra.mxu0 0
        %1281 = vmatpush.bf16.xpose.msra.mxu0 %v1272
        %1282 = vmatmul.bf16.gmra.mxu0 %v1269
        %v1283 = vpop.f32.mrf.mxu0
        %v1284 = vadd.f32 %v1037, %v1283
        %v1285 = vpop.f32.mrf.mxu0
        %1286 = vdwg.mxu0
        %v1287 = vsel %vm1088, %v1284, -inf
        %1288 = vmax.xlane.f32.xlu0 %v1287
        %v1289 = vpop.xlane.xlu0 %1288
        %v1290 = vsub.f32 %v1284, %v1289
        %v1291 = vmul.f32 %v1290, 1.442695
        %v1292 = vpow.pop %v1291
        %v1293 = vsel %vm1088, %v1292, 0.0
        %1294 = vadd.xlane.f32.xlu0 %v1293
        %v1295 = vpop.xlane.xlu0 %1294
        %v1296 = vrcp.pop %v1295
        %v1297 = vmul.f32 %v1295, %v1296
        %v1298 = vsub.f32 1.0, %v1297
        %v1299 = vmul.f32 %v1296, %v1298
        %v1300 = vadd.f32 %v1296, %v1299
        %vm1301 = vweird.f32 %v1295
        %vm1302 = vweird.f32 %v1296
        %vm1303 = vmor %vm1301, %vm1302
        %v1304 = vsel %vm1303, %v1296, %v1300
        %v1305 = vand.u32 2147483647, %v1295
        %vm1306 = vcmp.eq.f32.partialorder %v1305, 8.507059e+37
        %v1307 = vand.u32 %v1295, 2147483648
        %v1308 = vor.u32 1.1754944e-38, %v1307
        %v1309 = vsel %vm1306, %v1308, %v1304
        %v1310 = vmul.f32 %v1292, %v1309
        %v1311 = vpack.c.bf16 %v1310, %v1310
        %1312 = vrot.lane.b32.xlu0 %v1085, 48
        %v1313 = vpop.permute.xlu0 %1312
        %v1315 = vsel %vm1088, %v1311, 0
        %v1318 = vsel %vm1138, %v1313, 0
        %1320 = vmatpush.bf16.msra.mxu0 0
        %1321 = vmatpush.bf16.msra.mxu0 0
        %1322 = vmatpush.bf16.msra.mxu0 0
        %1323 = vmatpush.bf16.msra.mxu0 0
        %1324 = vmatpush.bf16.msra.mxu0 0
        %1325 = vmatpush.bf16.msra.mxu0 0
        %1326 = vmatpush.bf16.msra.mxu0 0
        %1327 = vmatpush.bf16.msra.mxu0 %v1318
        %1328 = vmatmul.bf16.gmra.mxu0 %v1315
        %v1329 = vpop.f32.mrf.mxu0
        %v1330 = vadd.f32 0.0, %v1329
        %v1331 = vpop.f32.mrf.mxu0
        %1332 = vdwg.mxu0
        %v1333 = vpack.c.bf16 %v1330, %v1330
        %v1335 = vsel %vm1088, %v1333, 0
        %v1338 = vsel %vm1138, %v1080, 0
        %1340 = vmatpush.bf16.msra.mxu0 0
        %1341 = vmatpush.bf16.msra.mxu0 0
        %1342 = vmatpush.bf16.msra.mxu0 0
        %1343 = vmatpush.bf16.msra.mxu0 0
        %1344 = vmatpush.bf16.msra.mxu0 0
        %1345 = vmatpush.bf16.msra.mxu0 0
        %1346 = vmatpush.bf16.msra.mxu0 0
        %1347 = vmatpush.bf16.msra.mxu0 %v1338
        %1348 = vmatmul.bf16.gmra.mxu0 %v1335
        %v1349 = vpop.f32.mrf.mxu0
        %v1350 = vadd.f32 0.0, %v1349
        %v1351 = vpop.f32.mrf.mxu0
        %1352 = vdwg.mxu0
        %v1353 = vadd.f32 %v1261, %v1350
        %1354 = vrot.lane.b32.xlu0 %v1085, 104
        %v1355 = vpop.permute.xlu0 %1354
        %1356 = vrot.lane.b32.xlu0 %v1085, 72
        %v1357 = vpop.permute.xlu0 %1356
        %v1359 = vsel %vm1088, %v1355, 0
        %v1362 = vsel %vm1088, %v1357, 0
        %1364 = vmatpush.bf16.xpose.msra.mxu0 0
        %1365 = vmatpush.bf16.xpose.msra.mxu0 0
        %1366 = vmatpush.bf16.xpose.msra.mxu0 0
        %1367 = vmatpush.bf16.xpose.msra.mxu0 0
        %1368 = vmatpush.bf16.xpose.msra.mxu0 0
        %1369 = vmatpush.bf16.xpose.msra.mxu0 0
        %1370 = vmatpush.bf16.xpose.msra.mxu0 0
        %1371 = vmatpush.bf16.xpose.msra.mxu0 %v1362
        %1372 = vmatmul.bf16.gmra.mxu0 %v1359
        %v1373 = vpop.f32.mrf.mxu0
        %v1374 = vadd.f32 %v1037, %v1373
        %v1375 = vpop.f32.mrf.mxu0
        %1376 = vdwg.mxu0
        %v1377 = vsel %vm1088, %v1374, -inf
        %1378 = vmax.xlane.f32.xlu0 %v1377
        %v1379 = vpop.xlane.xlu0 %1378
        %v1380 = vsub.f32 %v1374, %v1379
        %v1381 = vmul.f32 %v1380, 1.442695
        %v1382 = vpow.pop %v1381
        %v1383 = vsel %vm1088, %v1382, 0.0
        %1384 = vadd.xlane.f32.xlu0 %v1383
        %v1385 = vpop.xlane.xlu0 %1384
        %v1386 = vrcp.pop %v1385
        %v1387 = vmul.f32 %v1385, %v1386
        %v1388 = vsub.f32 1.0, %v1387
        %v1389 = vmul.f32 %v1386, %v1388
        %v1390 = vadd.f32 %v1386, %v1389
        %vm1391 = vweird.f32 %v1385
        %vm1392 = vweird.f32 %v1386
        %vm1393 = vmor %vm1391, %vm1392
        %v1394 = vsel %vm1393, %v1386, %v1390
        %v1395 = vand.u32 2147483647, %v1385
        %vm1396 = vcmp.eq.f32.partialorder %v1395, 8.507059e+37
        %v1397 = vand.u32 %v1385, 2147483648
        %v1398 = vor.u32 1.1754944e-38, %v1397
        %v1399 = vsel %vm1396, %v1398, %v1394
        %v1400 = vmul.f32 %v1382, %v1399
        %v1401 = vpack.c.bf16 %v1400, %v1400
        %1402 = vrot.lane.b32.xlu0 %v1085, 40
        %v1403 = vpop.permute.xlu0 %1402
        %v1405 = vsel %vm1088, %v1401, 0
        %v1408 = vsel %vm1138, %v1403, 0
        %1410 = vmatpush.bf16.msra.mxu0 0
        %1411 = vmatpush.bf16.msra.mxu0 0
        %1412 = vmatpush.bf16.msra.mxu0 0
        %1413 = vmatpush.bf16.msra.mxu0 0
        %1414 = vmatpush.bf16.msra.mxu0 0
        %1415 = vmatpush.bf16.msra.mxu0 0
        %1416 = vmatpush.bf16.msra.mxu0 0
        %1417 = vmatpush.bf16.msra.mxu0 %v1408
        %1418 = vmatmul.bf16.gmra.mxu0 %v1405
        %v1419 = vpop.f32.mrf.mxu0
        %v1420 = vadd.f32 0.0, %v1419
        %v1421 = vpop.f32.mrf.mxu0
        %1422 = vdwg.mxu0
        %v1423 = vpack.c.bf16 %v1420, %v1420
        %v1425 = vsel %vm1088, %v1423, 0
        %v1428 = vsel %vm1138, %v1081, 0
        %1430 = vmatpush.bf16.msra.mxu0 0
        %1431 = vmatpush.bf16.msra.mxu0 0
        %1432 = vmatpush.bf16.msra.mxu0 0
        %1433 = vmatpush.bf16.msra.mxu0 0
        %1434 = vmatpush.bf16.msra.mxu0 0
        %1435 = vmatpush.bf16.msra.mxu0 0
        %1436 = vmatpush.bf16.msra.mxu0 0
        %1437 = vmatpush.bf16.msra.mxu0 %v1428
        %1438 = vmatmul.bf16.gmra.mxu0 %v1425
        %v1439 = vpop.f32.mrf.mxu0
        %v1440 = vadd.f32 0.0, %v1439
        %v1441 = vpop.f32.mrf.mxu0
        %1442 = vdwg.mxu0
        %v1443 = vadd.f32 %v1353, %v1440
        %v1444 = vld [vmem:[%s7] sm:$0x1]
        %v1446 = vperm.slane %v1444, 0
        %v1448 = vadd.f32 %v1443, %v1446
        %v1449 = vadd.f32 %v1448, %v1035
        %v1450 = vld [vmem:[#allocation7] sm:$0x1]
        %v1451 = vld [vmem:[#allocation8] sm:$0x1]
        %v1452 = vsel %vm1061, %v1449, 0.0
        %1453 = vadd.xlane.f32.xlu0 %v1452
        %v1454 = vpop.xlane.xlu0 %1453
        %v1455 = vrcp.pop 32.0
        %v1456 = vmul.f32 32.0, %v1455
        %v1457 = vsub.f32 1.0, %v1456
        %v1458 = vmul.f32 %v1455, %v1457
        %v1459 = vadd.f32 %v1455, %v1458
        %vm1460 = vweird.f32 %v1455
        %v1461 = vsel %vm1460, %v1455, %v1459
        %v1462 = vmul.f32 %v1454, %v1461
        %v1463 = vsub.f32 %v1449, %v1462
        %v1464 = vmul.f32 %v1463, %v1463
        %v1465 = vsel %vm1061, %v1464, 0.0
        %1466 = vadd.xlane.f32.xlu0 %v1465
        %v1467 = vpop.xlane.xlu0 %1466
        %v1468 = vmul.f32 %v1467, %v1461
        %v1469 = vadd.f32 %v1468, 1e-12
        %v1470 = vrsqrt.pop %v1469
        %v1471 = vmul.f32 %v1470, %v1469
        %v1472 = vmul.f32 %v1471, %v1470
        %v1473 = vmul.f32 0.5, %v1472
        %v1474 = vsub.f32 1.5, %v1473
        %v1475 = vmul.f32 %v1470, %v1474
        %vm1476 = vweird.f32 %v1469
        %vm1477 = vweird.f32 %v1470
        %vm1478 = vmor %vm1476, %vm1477
        %v1479 = vsel %vm1478, %v1470, %v1475
        %v1480 = vmul.f32 %v1463, %v1479
        %v1482 = vperm.slane %v1450, 0
        %v1484 = vmul.f32 %v1482, %v1480
        %v1486 = vperm.slane %v1451, 0
        %v1488 = vadd.f32 %v1484, %v1486
        %v1489 = vpack.c.bf16 %v1488, %v1488
        %v1490 = vld [vmem:[#allocation10] sm:$0xf]
        %v1491 = vld [vmem:[#allocation10 + $0x4] sm:$0xf]
        %v1492 = vld [vmem:[#allocation10 + $0x8] sm:$0xf]
        %v1493 = vld [vmem:[#allocation10 + $0xc] sm:$0xf]
        %v1494 = vld [vmem:[#allocation11] sm:$0x1]
        %v1496 = vperm.slane %v1494, 0
        %v1502 = vunpack.c.l.b16 %v1490
        %v1503 = vunpack.c.l.b16 %v1491
        %v1504 = vunpack.c.l.b16 %v1492
        %v1505 = vunpack.c.l.b16 %v1493
        %v1506 = vpack.c.b16 %v1503, %v1502
        %v1507 = vpack.c.b16 %v1505, %v1504
        %v1511 = vsel %vm1061, %v1489, 0
        %1513 = vmatpush.bf16.msra.mxu0 0
        %1514 = vmatpush.bf16.msra.mxu0 0
        %1515 = vmatpush.bf16.msra.mxu0 0
        %1516 = vmatpush.bf16.msra.mxu0 0
        %1517 = vmatpush.bf16.msra.mxu0 0
        %1518 = vmatpush.bf16.msra.mxu0 0
        %1519 = vmatpush.bf16.msra.mxu0 %v1507
        %1520 = vmatpush.bf16.msra.mxu0 %v1506
        %1521 = vmatmul.bf16.gmra.mxu0 %v1511
        %v1522 = vpop.f32.mrf.mxu0
        %v1523 = vadd.f32 %v1496, %v1522
        %v1524 = vpop.f32.mrf.mxu0
        %1525 = vdwg.mxu0
        %v1526 = vld [vmem:[#allocation13] sm:$0xf]
        %v1527 = vld [vmem:[#allocation13 + $0x4] sm:$0xf]
        %v1528 = vld [vmem:[#allocation13 + $0x8] sm:$0xf]
        %v1529 = vld [vmem:[#allocation13 + $0xc] sm:$0xf]
        %v1530 = vld [vmem:[#allocation14] sm:$0x1]
        %v1532 = vperm.slane %v1530, 0
        %v1538 = vunpack.c.l.b16 %v1526
        %v1539 = vunpack.c.l.b16 %v1527
        %v1540 = vunpack.c.l.b16 %v1528
        %v1541 = vunpack.c.l.b16 %v1529
        %v1542 = vpack.c.b16 %v1539, %v1538
        %v1543 = vpack.c.b16 %v1541, %v1540
        %v1547 = vsel %vm1061, %v1040, 0
        %1549 = vmatpush.bf16.msra.mxu0 0
        %1550 = vmatpush.bf16.msra.mxu0 0
        %1551 = vmatpush.bf16.msra.mxu0 0
        %1552 = vmatpush.bf16.msra.mxu0 0
        %1553 = vmatpush.bf16.msra.mxu0 0
        %1554 = vmatpush.bf16.msra.mxu0 0
        %1555 = vmatpush.bf16.msra.mxu0 %v1543
        %1556 = vmatpush.bf16.msra.mxu0 %v1542
        %1557 = vmatmul.bf16.gmra.mxu0 %v1547
        %v1558 = vpop.f32.mrf.mxu0
        %v1559 = vadd.f32 %v1532, %v1558
        %v1560 = vpop.f32.mrf.mxu0
        %1561 = vdwg.mxu0
        %v1562 = vld [vmem:[#allocation16] sm:$0xf]
        %v1563 = vld [vmem:[#allocation16 + $0x4] sm:$0xf]
        %v1564 = vld [vmem:[#allocation16 + $0x8] sm:$0xf]
        %v1565 = vld [vmem:[#allocation16 + $0xc] sm:$0xf]
        %v1566 = vpack.c.bf16 %v1523, %v1523
        %v1567 = vpack.c.bf16 %v1559, %v1559
        %v1569 = vsel %vm1088, %v1566, 0
        %v1572 = vsel %vm1088, %v1567, 0
        %1574 = vmatpush.bf16.xpose.msra.mxu0 0
        %1575 = vmatpush.bf16.xpose.msra.mxu0 0
        %1576 = vmatpush.bf16.xpose.msra.mxu0 0
        %1577 = vmatpush.bf16.xpose.msra.mxu0 0
        %1578 = vmatpush.bf16.xpose.msra.mxu0 0
        %1579 = vmatpush.bf16.xpose.msra.mxu0 0
        %1580 = vmatpush.bf16.xpose.msra.mxu0 0
        %1581 = vmatpush.bf16.xpose.msra.mxu0 %v1572
        %1582 = vmatmul.bf16.gmra.mxu0 %v1569
        %v1583 = vpop.f32.mrf.mxu0
        %v1584 = vadd.f32 %v1038, %v1583
        %v1585 = vpop.f32.mrf.mxu0
        %1586 = vdwg.mxu0
        %v1587 = vsel %vm1088, %v1584, -inf
        %1588 = vmax.xlane.f32.xlu0 %v1587
        %v1589 = vpop.xlane.xlu0 %1588
        %v1590 = vsub.f32 %v1584, %v1589
        %v1591 = vmul.f32 %v1590, 1.442695
        %v1592 = vpow.pop %v1591
        %v1593 = vsel %vm1088, %v1592, 0.0
        %1594 = vadd.xlane.f32.xlu0 %v1593
        %v1595 = vpop.xlane.xlu0 %1594
        %v1596 = vrcp.pop %v1595
        %v1597 = vmul.f32 %v1595, %v1596
        %v1598 = vsub.f32 1.0, %v1597
        %v1599 = vmul.f32 %v1596, %v1598
        %v1600 = vadd.f32 %v1596, %v1599
        %vm1601 = vweird.f32 %v1595
        %vm1602 = vweird.f32 %v1596
        %vm1603 = vmor %vm1601, %vm1602
        %v1604 = vsel %vm1603, %v1596, %v1600
        %v1605 = vand.u32 2147483647, %v1595
        %vm1606 = vcmp.eq.f32.partialorder %v1605, 8.507059e+37
        %v1607 = vand.u32 %v1595, 2147483648
        %v1608 = vor.u32 1.1754944e-38, %v1607
        %v1609 = vsel %vm1606, %v1608, %v1604
        %v1610 = vmul.f32 %v1592, %v1609
        %v1611 = vpack.c.bf16 %v1610, %v1610
        %v1613 = vunpack.c.l.b16 %v1567
        %v1614 = vpack.c.b16 %v1613, %v1613
        %1615 = vrot.lane.b32.xlu0 %v1614, 96
        %v1616 = vpop.permute.xlu0 %1615
        %v1618 = vsel %vm1088, %v1611, 0
        %v1621 = vsel %vm1138, %v1616, 0
        %1623 = vmatpush.bf16.msra.mxu0 0
        %1624 = vmatpush.bf16.msra.mxu0 0
        %1625 = vmatpush.bf16.msra.mxu0 0
        %1626 = vmatpush.bf16.msra.mxu0 0
        %1627 = vmatpush.bf16.msra.mxu0 0
        %1628 = vmatpush.bf16.msra.mxu0 0
        %1629 = vmatpush.bf16.msra.mxu0 0
        %1630 = vmatpush.bf16.msra.mxu0 %v1621
        %1631 = vmatmul.bf16.gmra.mxu0 %v1618
        %v1632 = vpop.f32.mrf.mxu0
        %v1633 = vadd.f32 0.0, %v1632
        %v1634 = vpop.f32.mrf.mxu0
        %1635 = vdwg.mxu0
        %v1636 = vpack.c.bf16 %v1633, %v1633
        %v1638 = vunpack.c.l.b16 %v1566
        %v1639 = vpack.c.b16 %v1638, %v1638
        %1640 = vrot.lane.b32.xlu0 %v1639, 120
        %v1641 = vpop.permute.xlu0 %1640
        %1642 = vrot.lane.b32.xlu0 %v1614, 120
        %v1643 = vpop.permute.xlu0 %1642
        %v1645 = vsel %vm1088, %v1641, 0
        %v1648 = vsel %vm1088, %v1643, 0
        %1650 = vmatpush.bf16.xpose.msra.mxu0 0
        %1651 = vmatpush.bf16.xpose.msra.mxu0 0
        %1652 = vmatpush.bf16.xpose.msra.mxu0 0
        %1653 = vmatpush.bf16.xpose.msra.mxu0 0
        %1654 = vmatpush.bf16.xpose.msra.mxu0 0
        %1655 = vmatpush.bf16.xpose.msra.mxu0 0
        %1656 = vmatpush.bf16.xpose.msra.mxu0 0
        %1657 = vmatpush.bf16.xpose.msra.mxu0 %v1648
        %1658 = vmatmul.bf16.gmra.mxu0 %v1645
        %v1659 = vpop.f32.mrf.mxu0
        %v1660 = vadd.f32 %v1038, %v1659
        %v1661 = vpop.f32.mrf.mxu0
        %1662 = vdwg.mxu0
        %v1663 = vsel %vm1088, %v1660, -inf
        %1664 = vmax.xlane.f32.xlu0 %v1663
        %v1665 = vpop.xlane.xlu0 %1664
        %v1666 = vsub.f32 %v1660, %v1665
        %v1667 = vmul.f32 %v1666, 1.442695
        %v1668 = vpow.pop %v1667
        %v1669 = vsel %vm1088, %v1668, 0.0
        %1670 = vadd.xlane.f32.xlu0 %v1669
        %v1671 = vpop.xlane.xlu0 %1670
        %v1672 = vrcp.pop %v1671
        %v1673 = vmul.f32 %v1671, %v1672
        %v1674 = vsub.f32 1.0, %v1673
        %v1675 = vmul.f32 %v1672, %v1674
        %v1676 = vadd.f32 %v1672, %v1675
        %vm1677 = vweird.f32 %v1671
        %vm1678 = vweird.f32 %v1672
        %vm1679 = vmor %vm1677, %vm1678
        %v1680 = vsel %vm1679, %v1672, %v1676
        %v1681 = vand.u32 2147483647, %v1671
        %vm1682 = vcmp.eq.f32.partialorder %v1681, 8.507059e+37
        %v1683 = vand.u32 %v1671, 2147483648
        %v1684 = vor.u32 1.1754944e-38, %v1683
        %v1685 = vsel %vm1682, %v1684, %v1680
        %v1686 = vmul.f32 %v1668, %v1685
        %v1687 = vpack.c.bf16 %v1686, %v1686
        %1688 = vrot.lane.b32.xlu0 %v1614, 88
        %v1689 = vpop.permute.xlu0 %1688
        %v1691 = vsel %vm1088, %v1687, 0
        %v1694 = vsel %vm1138, %v1689, 0
        %1696 = vmatpush.bf16.msra.mxu0 0
        %1697 = vmatpush.bf16.msra.mxu0 0
        %1698 = vmatpush.bf16.msra.mxu0 0
        %1699 = vmatpush.bf16.msra.mxu0 0
        %1700 = vmatpush.bf16.msra.mxu0 0
        %1701 = vmatpush.bf16.msra.mxu0 0
        %1702 = vmatpush.bf16.msra.mxu0 0
        %1703 = vmatpush.bf16.msra.mxu0 %v1694
        %1704 = vmatmul.bf16.gmra.mxu0 %v1691
        %v1705 = vpop.f32.mrf.mxu0
        %v1706 = vadd.f32 0.0, %v1705
        %v1707 = vpop.f32.mrf.mxu0
        %1708 = vdwg.mxu0
        %v1709 = vpack.c.bf16 %v1706, %v1706
        %v1711 = vsel %vm1088, %v1709, 0
        %v1714 = vsel %vm1138, %v1563, 0
        %1716 = vmatpush.bf16.msra.mxu0 0
        %1717 = vmatpush.bf16.msra.mxu0 0
        %1718 = vmatpush.bf16.msra.mxu0 0
        %1719 = vmatpush.bf16.msra.mxu0 0
        %1720 = vmatpush.bf16.msra.mxu0 0
        %1721 = vmatpush.bf16.msra.mxu0 0
        %1722 = vmatpush.bf16.msra.mxu0 0
        %1723 = vmatpush.bf16.msra.mxu0 %v1714
        %1724 = vmatmul.bf16.gmra.mxu0 %v1711
        %v1725 = vpop.f32.mrf.mxu0
        %v1726 = vadd.f32 0.0, %v1725
        %v1727 = vpop.f32.mrf.mxu0
        %1728 = vdwg.mxu0
        %v1730 = vsel %vm1088, %v1636, 0
        %v1733 = vsel %vm1138, %v1562, 0
        %1735 = vmatpush.bf16.msra.mxu0 0
        %1736 = vmatpush.bf16.msra.mxu0 0
        %1737 = vmatpush.bf16.msra.mxu0 0
        %1738 = vmatpush.bf16.msra.mxu0 0
        %1739 = vmatpush.bf16.msra.mxu0 0
        %1740 = vmatpush.bf16.msra.mxu0 0
        %1741 = vmatpush.bf16.msra.mxu0 0
        %1742 = vmatpush.bf16.msra.mxu0 %v1733
        %1743 = vmatmul.bf16.gmra.mxu0 %v1730
        %v1744 = vpop.f32.mrf.mxu0
        %v1745 = vadd.f32 %v1726, %v1744
        %v1746 = vpop.f32.mrf.mxu0
        %1747 = vdwg.mxu0
        %1748 = vrot.lane.b32.xlu0 %v1639, 112
        %v1749 = vpop.permute.xlu0 %1748
        %1750 = vrot.lane.b32.xlu0 %v1614, 112
        %v1751 = vpop.permute.xlu0 %1750
        %v1753 = vsel %vm1088, %v1749, 0
        %v1756 = vsel %vm1088, %v1751, 0
        %1758 = vmatpush.bf16.xpose.msra.mxu0 0
        %1759 = vmatpush.bf16.xpose.msra.mxu0 0
        %1760 = vmatpush.bf16.xpose.msra.mxu0 0
        %1761 = vmatpush.bf16.xpose.msra.mxu0 0
        %1762 = vmatpush.bf16.xpose.msra.mxu0 0
        %1763 = vmatpush.bf16.xpose.msra.mxu0 0
        %1764 = vmatpush.bf16.xpose.msra.mxu0 0
        %1765 = vmatpush.bf16.xpose.msra.mxu0 %v1756
        %1766 = vmatmul.bf16.gmra.mxu0 %v1753
        %v1767 = vpop.f32.mrf.mxu0
        %v1768 = vadd.f32 %v1038, %v1767
        %v1769 = vpop.f32.mrf.mxu0
        %1770 = vdwg.mxu0
        %v1771 = vsel %vm1088, %v1768, -inf
        %1772 = vmax.xlane.f32.xlu0 %v1771
        %v1773 = vpop.xlane.xlu0 %1772
        %v1774 = vsub.f32 %v1768, %v1773
        %v1775 = vmul.f32 %v1774, 1.442695
        %v1776 = vpow.pop %v1775
        %v1777 = vsel %vm1088, %v1776, 0.0
        %1778 = vadd.xlane.f32.xlu0 %v1777
        %v1779 = vpop.xlane.xlu0 %1778
        %v1780 = vrcp.pop %v1779
        %v1781 = vmul.f32 %v1779, %v1780
        %v1782 = vsub.f32 1.0, %v1781
        %v1783 = vmul.f32 %v1780, %v1782
        %v1784 = vadd.f32 %v1780, %v1783
        %vm1785 = vweird.f32 %v1779
        %vm1786 = vweird.f32 %v1780
        %vm1787 = vmor %vm1785, %vm1786
        %v1788 = vsel %vm1787, %v1780, %v1784
        %v1789 = vand.u32 2147483647, %v1779
        %vm1790 = vcmp.eq.f32.partialorder %v1789, 8.507059e+37
        %v1791 = vand.u32 %v1779, 2147483648
        %v1792 = vor.u32 1.1754944e-38, %v1791
        %v1793 = vsel %vm1790, %v1792, %v1788
        %v1794 = vmul.f32 %v1776, %v1793
        %v1795 = vpack.c.bf16 %v1794, %v1794
        %1796 = vrot.lane.b32.xlu0 %v1614, 80
        %v1797 = vpop.permute.xlu0 %1796
        %v1799 = vsel %vm1088, %v1795, 0
        %v1802 = vsel %vm1138, %v1797, 0
        %1804 = vmatpush.bf16.msra.mxu0 0
        %1805 = vmatpush.bf16.msra.mxu0 0
        %1806 = vmatpush.bf16.msra.mxu0 0
        %1807 = vmatpush.bf16.msra.mxu0 0
        %1808 = vmatpush.bf16.msra.mxu0 0
        %1809 = vmatpush.bf16.msra.mxu0 0
        %1810 = vmatpush.bf16.msra.mxu0 0
        %1811 = vmatpush.bf16.msra.mxu0 %v1802
        %1812 = vmatmul.bf16.gmra.mxu0 %v1799
        %v1813 = vpop.f32.mrf.mxu0
        %v1814 = vadd.f32 0.0, %v1813
        %v1815 = vpop.f32.mrf.mxu0
        %1816 = vdwg.mxu0
        %v1817 = vpack.c.bf16 %v1814, %v1814
        %v1819 = vsel %vm1088, %v1817, 0
        %v1822 = vsel %vm1138, %v1564, 0
        %1824 = vmatpush.bf16.msra.mxu0 0
        %1825 = vmatpush.bf16.msra.mxu0 0
        %1826 = vmatpush.bf16.msra.mxu0 0
        %1827 = vmatpush.bf16.msra.mxu0 0
        %1828 = vmatpush.bf16.msra.mxu0 0
        %1829 = vmatpush.bf16.msra.mxu0 0
        %1830 = vmatpush.bf16.msra.mxu0 0
        %1831 = vmatpush.bf16.msra.mxu0 %v1822
        %1832 = vmatmul.bf16.gmra.mxu0 %v1819
        %v1833 = vpop.f32.mrf.mxu0
        %v1834 = vadd.f32 0.0, %v1833
        %v1835 = vpop.f32.mrf.mxu0
        %1836 = vdwg.mxu0
        %v1837 = vadd.f32 %v1745, %v1834
        %1838 = vrot.lane.b32.xlu0 %v1639, 104
        %v1839 = vpop.permute.xlu0 %1838
        %1840 = vrot.lane.b32.xlu0 %v1614, 104
        %v1841 = vpop.permute.xlu0 %1840
        %v1843 = vsel %vm1088, %v1839, 0
        %v1846 = vsel %vm1088, %v1841, 0
        %1848 = vmatpush.bf16.xpose.msra.mxu0 0
        %1849 = vmatpush.bf16.xpose.msra.mxu0 0
        %1850 = vmatpush.bf16.xpose.msra.mxu0 0
        %1851 = vmatpush.bf16.xpose.msra.mxu0 0
        %1852 = vmatpush.bf16.xpose.msra.mxu0 0
        %1853 = vmatpush.bf16.xpose.msra.mxu0 0
        %1854 = vmatpush.bf16.xpose.msra.mxu0 0
        %1855 = vmatpush.bf16.xpose.msra.mxu0 %v1846
        %1856 = vmatmul.bf16.gmra.mxu0 %v1843
        %v1857 = vpop.f32.mrf.mxu0
        %v1858 = vadd.f32 %v1038, %v1857
        %v1859 = vpop.f32.mrf.mxu0
        %1860 = vdwg.mxu0
        %v1861 = vsel %vm1088, %v1858, -inf
        %1862 = vmax.xlane.f32.xlu0 %v1861
        %v1863 = vpop.xlane.xlu0 %1862
        %v1864 = vsub.f32 %v1858, %v1863
        %v1865 = vmul.f32 %v1864, 1.442695
        %v1866 = vpow.pop %v1865
        %v1867 = vsel %vm1088, %v1866, 0.0
        %1868 = vadd.xlane.f32.xlu0 %v1867
        %v1869 = vpop.xlane.xlu0 %1868
        %v1870 = vrcp.pop %v1869
        %v1871 = vmul.f32 %v1869, %v1870
        %v1872 = vsub.f32 1.0, %v1871
        %v1873 = vmul.f32 %v1870, %v1872
        %v1874 = vadd.f32 %v1870, %v1873
        %vm1875 = vweird.f32 %v1869
        %vm1876 = vweird.f32 %v1870
        %vm1877 = vmor %vm1875, %vm1876
        %v1878 = vsel %vm1877, %v1870, %v1874
        %v1879 = vand.u32 2147483647, %v1869
        %vm1880 = vcmp.eq.f32.partialorder %v1879, 8.507059e+37
        %v1881 = vand.u32 %v1869, 2147483648
        %v1882 = vor.u32 1.1754944e-38, %v1881
        %v1883 = vsel %vm1880, %v1882, %v1878
        %v1884 = vmul.f32 %v1866, %v1883
        %v1885 = vpack.c.bf16 %v1884, %v1884
        %1886 = vrot.lane.b32.xlu0 %v1614, 72
        %v1887 = vpop.permute.xlu0 %1886
        %v1889 = vsel %vm1088, %v1885, 0
        %v1892 = vsel %vm1138, %v1887, 0
        %1894 = vmatpush.bf16.msra.mxu0 0
        %1895 = vmatpush.bf16.msra.mxu0 0
        %1896 = vmatpush.bf16.msra.mxu0 0
        %1897 = vmatpush.bf16.msra.mxu0 0
        %1898 = vmatpush.bf16.msra.mxu0 0
        %1899 = vmatpush.bf16.msra.mxu0 0
        %1900 = vmatpush.bf16.msra.mxu0 0
        %1901 = vmatpush.bf16.msra.mxu0 %v1892
        %1902 = vmatmul.bf16.gmra.mxu0 %v1889
        %v1903 = vpop.f32.mrf.mxu0
        %v1904 = vadd.f32 0.0, %v1903
        %v1905 = vpop.f32.mrf.mxu0
        %1906 = vdwg.mxu0
        %v1907 = vpack.c.bf16 %v1904, %v1904
        %v1909 = vsel %vm1088, %v1907, 0
        %v1912 = vsel %vm1138, %v1565, 0
        %1914 = vmatpush.bf16.msra.mxu0 0
        %1915 = vmatpush.bf16.msra.mxu0 0
        %1916 = vmatpush.bf16.msra.mxu0 0
        %1917 = vmatpush.bf16.msra.mxu0 0
        %1918 = vmatpush.bf16.msra.mxu0 0
        %1919 = vmatpush.bf16.msra.mxu0 0
        %1920 = vmatpush.bf16.msra.mxu0 0
        %1921 = vmatpush.bf16.msra.mxu0 %v1912
        %1922 = vmatmul.bf16.gmra.mxu0 %v1909
        %v1923 = vpop.f32.mrf.mxu0
        %v1924 = vadd.f32 0.0, %v1923
        %v1925 = vpop.f32.mrf.mxu0
        %1926 = vdwg.mxu0
        %v1927 = vadd.f32 %v1837, %v1924
        %v1928 = vld [vmem:[#allocation17] sm:$0x1]
        %v1930 = vperm.slane %v1928, 0
        %v1932 = vadd.f32 %v1927, %v1930
        %v1933 = vadd.f32 %v1932, %v1488
        %v1934 = vld [vmem:[#allocation19] sm:$0x1]
        %v1935 = vld [vmem:[#allocation20] sm:$0x1]
        %v1936 = vsel %vm1061, %v1933, 0.0
        %1937 = vadd.xlane.f32.xlu0 %v1936
        %v1938 = vpop.xlane.xlu0 %1937
        %v1939 = vmul.f32 %v1938, %v1461
        %v1940 = vsub.f32 %v1933, %v1939
        %v1941 = vmul.f32 %v1940, %v1940
        %v1942 = vsel %vm1061, %v1941, 0.0
        %1943 = vadd.xlane.f32.xlu0 %v1942
        %v1944 = vpop.xlane.xlu0 %1943
        %v1945 = vmul.f32 %v1944, %v1461
        %v1946 = vadd.f32 %v1945, 1e-12
        %v1947 = vrsqrt.pop %v1946
        %v1948 = vmul.f32 %v1947, %v1946
        %v1949 = vmul.f32 %v1948, %v1947
        %v1950 = vmul.f32 0.5, %v1949
        %v1951 = vsub.f32 1.5, %v1950
        %v1952 = vmul.f32 %v1947, %v1951
        %vm1953 = vweird.f32 %v1946
        %vm1954 = vweird.f32 %v1947
        %vm1955 = vmor %vm1953, %vm1954
        %v1956 = vsel %vm1955, %v1947, %v1952
        %v1957 = vmul.f32 %v1940, %v1956
        %v1959 = vperm.slane %v1934, 0
        %v1961 = vmul.f32 %v1959, %v1957
        %v1963 = vperm.slane %v1935, 0
        %v1965 = vadd.f32 %v1961, %v1963
        %v1966 = vpack.c.bf16 %v1965, %v1965
        %v1967 = vld [vmem:[#allocation22] sm:$0xf]
        %v1968 = vld [vmem:[#allocation22 + $0x4] sm:$0xf]
        %v1969 = vld [vmem:[#allocation22 + $0x8] sm:$0xf]
        %v1970 = vld [vmem:[#allocation22 + $0xc] sm:$0xf]
        %v1971 = vld [vmem:[#allocation23] sm:$0x1]
        %v1973 = vperm.slane %v1971, 0
        %v1979 = vunpack.c.l.b16 %v1967
        %v1980 = vunpack.c.l.b16 %v1968
        %v1981 = vunpack.c.l.b16 %v1969
        %v1982 = vunpack.c.l.b16 %v1970
        %v1983 = vpack.c.b16 %v1980, %v1979
        %v1984 = vpack.c.b16 %v1982, %v1981
        %v1988 = vsel %vm1061, %v1966, 0
        %1990 = vmatpush.bf16.msra.mxu0 0
        %1991 = vmatpush.bf16.msra.mxu0 0
        %1992 = vmatpush.bf16.msra.mxu0 0
        %1993 = vmatpush.bf16.msra.mxu0 0
        %1994 = vmatpush.bf16.msra.mxu0 0
        %1995 = vmatpush.bf16.msra.mxu0 0
        %1996 = vmatpush.bf16.msra.mxu0 %v1984
        %1997 = vmatpush.bf16.msra.mxu0 %v1983
        %1998 = vmatmul.bf16.gmra.mxu0 %v1988
        %v1999 = vpop.f32.mrf.mxu0
        %v2000 = vadd.f32 %v1973, %v1999
        %v2001 = vpop.f32.mrf.mxu0
        %2002 = vdwg.mxu0
        %v2003 = vmax.f32 %v2000, 0.0
        %v2004 = vpack.c.bf16 %v2003, %v2003
        %v2005 = vld [vmem:[%s20] sm:$0xf]
        %v2006 = vld [vmem:[%s20 + $0x4] sm:$0xf]
        %v2007 = vld [vmem:[%s20 + $0x8] sm:$0xf]
        %v2008 = vld [vmem:[%s20 + $0xc] sm:$0xf]
        %v2009 = vld [vmem:[%s20 + $0x10] sm:$0xf]
        %v2010 = vld [vmem:[%s20 + $0x14] sm:$0xf]
        %v2011 = vld [vmem:[%s20 + $0x18] sm:$0xf]
        %v2012 = vld [vmem:[%s20 + $0x1c] sm:$0xf]
        %v2013 = vld [vmem:[#allocation25] sm:$0x1]
        %v2015 = vperm.slane %v2013, 0
        %v2025 = vunpack.c.l.b16 %v2005
        %v2026 = vunpack.c.l.b16 %v2006
        %v2027 = vunpack.c.l.b16 %v2007
        %v2028 = vunpack.c.l.b16 %v2008
        %v2029 = vunpack.c.l.b16 %v2009
        %v2030 = vunpack.c.l.b16 %v2010
        %v2031 = vunpack.c.l.b16 %v2011
        %v2032 = vunpack.c.l.b16 %v2012
        %v2033 = vpack.c.b16 %v2026, %v2025
        %v2034 = vpack.c.b16 %v2028, %v2027
        %v2035 = vpack.c.b16 %v2030, %v2029
        %v2036 = vpack.c.b16 %v2032, %v2031
        %vm2041 = vcmask 523264
        %v2043 = vsel %vm2041, %v2004, 0
        %2045 = vmatpush.bf16.msra.mxu0 0
        %2046 = vmatpush.bf16.msra.mxu0 0
        %2047 = vmatpush.bf16.msra.mxu0 0
        %2048 = vmatpush.bf16.msra.mxu0 0
        %2049 = vmatpush.bf16.msra.mxu0 %v2036
        %2050 = vmatpush.bf16.msra.mxu0 %v2035
        %2051 = vmatpush.bf16.msra.mxu0 %v2034
        %2052 = vmatpush.bf16.msra.mxu0 %v2033
        %2053 = vmatmul.bf16.gmra.mxu0 %v2043
        %v2054 = vpop.f32.mrf.mxu0
        %v2055 = vadd.f32 %v2015, %v2054
        %v2056 = vpop.f32.mrf.mxu0
        %2057 = vdwg.mxu0
        %v2058 = vadd.f32 %v2055, %v1965
        %v2059 = vld [vmem:[%s22] sm:$0x1]
        %v2060 = vld [vmem:[#allocation26] sm:$0x1]
        %v2061 = vsel %vm1061, %v2058, 0.0
        %2062 = vadd.xlane.f32.xlu0 %v2061
        %v2063 = vpop.xlane.xlu0 %2062
        %v2064 = vmul.f32 %v2063, %v1461
        %v2065 = vsub.f32 %v2058, %v2064
        %v2066 = vmul.f32 %v2065, %v2065
        %v2067 = vsel %vm1061, %v2066, 0.0
        %2068 = vadd.xlane.f32.xlu0 %v2067
        %v2069 = vpop.xlane.xlu0 %2068
        %v2070 = vmul.f32 %v2069, %v1461
        %v2071 = vadd.f32 %v2070, 1e-12
        %v2072 = vrsqrt.pop %v2071
        %v2073 = vmul.f32 %v2072, %v2071
        %v2074 = vmul.f32 %v2073, %v2072
        %v2075 = vmul.f32 0.5, %v2074
        %v2076 = vsub.f32 1.5, %v2075
        %v2077 = vmul.f32 %v2072, %v2076
        %vm2078 = vweird.f32 %v2071
        %vm2079 = vweird.f32 %v2072
        %vm2080 = vmor %vm2078, %vm2079
        %v2081 = vsel %vm2080, %v2072, %v2077
        %v2082 = vmul.f32 %v2065, %v2081
        %v2084 = vperm.slane %v2059, 0
        %v2086 = vmul.f32 %v2084, %v2082
        %v2088 = vperm.slane %v2060, 0
        %v2090 = vadd.f32 %v2086, %v2088
        %2091 = vst.msk [vmem:[%s1021] sm:$0xff] %vm1061, %v2090
        %s2092 = sand.u32 %s581, 1
        %s2093 = scalar_lea.sflag [#allocation4], %s2092
        %s2094 = sand.u32 %s581, 1
        %s2095 = smul.addr %s2094, 8
        %s2096 = scalar_lea.vmem [#allocation28], %s2095
        // Predicated region
        $region181: #{decoder_layer.1} parent=115 // pred_check
          %p2097 = pneg %p591
        $region182: #{decoder_layer.1} parent=115 // pred_check_branch
          %2099 = sbr.rel (%p2097) target = $region184
        $region183: #{decoder_layer.1} parent=115 // pred_region
          %2101 = vsyncadd %s2093, 0
          %s2102 = smul.addr %s49, 8
          %s2103 = scalar_lea.hbm %s24, %s2102
          %s2105 = sshll.u32 %s2096, 4
          %s2106 = int_to_ptr.vmem [resolvable:$true] %s2105
          %s2107 = sshll.u32 %s2103, 4
          %s2108 = int_to_ptr.hbm [resolvable:$true] %s2107
          %2110 = dma.vmem_to_hbm [thread:$0]  %s2106, 128, %s2108, %s2093
        $region184: #{decoder_layer.1} parent=115 // pred_fallthru
          _
      $region116: #{decoder_layer.1} parent=5 // pred_fallthru
        _
      %p2111 = scmp.le.s32.totalorder 2, %s44
      // Predicated region
      $region185: #{decoder_layer.1} parent=5 // pred_check
        %p2112 = pneg %p2111
      $region186: #{decoder_layer.1} parent=5 // pred_check_branch
        %2114 = sbr.rel (%p2112) target = $region188
      $region187: #{decoder_layer.1} parent=5 // pred_region
        %s2115 = ssub.s32 %s44, 2
        // Predicated region
        $region189: #{decoder_layer.1} parent=187 // pred_check
          %p2116 = pneg %p597
        $region190: #{decoder_layer.1} parent=187 // pred_check_branch
          %2118 = sbr.rel (%p2116) target = $region192
        $region191: #{decoder_layer.1} parent=187 // pred_region
          %s2119 = sand.u32 %s582, 1
          %s2120 = scalar_lea.sflag [#allocation4], %s2119
          %s2121 = sand.u32 %s582, 1
          %s2122 = smul.addr %s2121, 8
          %s2123 = scalar_lea.vmem [#allocation28], %s2122
          %2125 = dma.done %s2120, 128
        $region192: #{decoder_layer.1} parent=187 // pred_fallthru
          _
      $region188: #{decoder_layer.1} parent=5 // pred_fallthru
        _
    $region6: #{decoder_layer.1} parent=1 // loop_footer
      %s48 = sadd.s32 1, %s44
    $region7: #{decoder_layer.1} parent=1 // loop_footer_branch
      %43 = sbr.rel target = $region3
    $region8: #{decoder_layer.1} parent=1 // loop_exit
      _
    %2126 = vsyncpa [#allocation3], 1
    %s2127 = scalar_lea.sflag [#allocation3], 1
    %2128 = vsyncpa %s2127, 1
    %2129 = vsyncpa [#allocation6], 1
    %2130 = vsyncpa [#allocation9], 1
    %2131 = vsyncpa [#allocation12], 1
    %2132 = vsyncpa [#allocation15], 1
    %2133 = vsyncpa [#allocation18], 1
    %2134 = vsyncpa [#allocation21], 1
    %2135 = vsyncpa [#allocation24], 1
    %2136 = vsyncpa [#allocation27], 1
    %2137 = vsyncpa [#allocation4], 1
    %s2138 = scalar_lea.sflag [#allocation4], 1
    %2139 = vsyncpa %s2138, 1

// kernel: decoder_layer.1
$region0: #{decoder_layer.1}
  #allocation0 [shape = 'u32[]', space=smem, size = 0x4, offset = 0x4, fixed_abs, tag = 'smem constant byte address 0x4 - core index']
  #allocation1 [shape = 'u32[72,128]{1,0:T(1,128)}', space=vmem, size = 0x9000, scoped, tag = 'internal scratch']
  %s0 = inlined_call_operand.vmem [shape: f32[2,8,8], index: 0, kind: input, shape index: {}]
  %s1 = inlined_call_operand.vmem [shape: f32[2,8,8], index: 1, kind: input, shape index: {}]
  %s2 = inlined_call_operand.vmem [shape: f32[2,8,32], index: 2, kind: input, shape index: {}]
  %s3 = inlined_call_operand.hbm [shape: f32[2,8,32], index: 3, kind: input, shape index: {}]
  %s4 = inlined_call_operand.vmem [shape: bf16[32,96], index: 4, kind: input, shape index: {}]
  %s5 = inlined_call_operand.vmem [shape: f32[1,96], index: 5, kind: input, shape index: {}]
  %s6 = inlined_call_operand.hbm [shape: bf16[32,32], index: 6, kind: input, shape index: {}]
  %s7 = inlined_call_operand.vmem [shape: f32[1,32], index: 7, kind: input, shape index: {}]
  %s8 = inlined_call_operand.hbm [shape: f32[1,32], index: 8, kind: input, shape index: {}]
  %s9 = inlined_call_operand.hbm [shape: f32[1,32], index: 9, kind: input, shape index: {}]
  %s10 = inlined_call_operand.hbm [shape: bf16[32,32], index: 10, kind: input, shape index: {}]
  %s11 = inlined_call_operand.hbm [shape: f32[1,32], index: 11, kind: input, shape index: {}]
  %s12 = inlined_call_operand.hbm [shape: bf16[32,64], index: 12, kind: input, shape index: {}]
  %s13 = inlined_call_operand.hbm [shape: f32[1,64], index: 13, kind: input, shape index: {}]
  %s14 = inlined_call_operand.hbm [shape: bf16[32,32], index: 14, kind: input, shape index: {}]
  %s15 = inlined_call_operand.hbm [shape: f32[1,32], index: 15, kind: input, shape index: {}]
  %s16 = inlined_call_operand.hbm [shape: f32[1,32], index: 16, kind: input, shape index: {}]
  %s17 = inlined_call_operand.hbm [shape: f32[1,32], index: 17, kind: input, shape index: {}]
  %s18 = inlined_call_operand.hbm [shape: bf16[32,64], index: 18, kind: input, shape index: {}]
  %s19 = inlined_call_operand.hbm [shape: f32[1,64], index: 19, kind: input, shape index: {}]
  %s20 = inlined_call_operand.vmem [shape: bf16[64,32], index: 20, kind: input, shape index: {}]
  %s21 = inlined_call_operand.hbm [shape: f32[1,32], index: 21, kind: input, shape index: {}]
  %s22 = inlined_call_operand.vmem [shape: f32[1,32], index: 22, kind: input, shape index: {}]
  %s23 = inlined_call_operand.hbm [shape: f32[1,32], index: 23, kind: input, shape index: {}]
  %s24 = inlined_call_operand.hbm [shape: f32[2,8,32], index: 24, kind: output, shape index: {}]
  %s25 = sld [smem:[#allocation0]]
  $region193: #{decoder_layer.1} parent=0
    _
  %s27 = ssub.s32 1, %s25
  %s28 = scalar_select 0, %s27, %s25
  $region1: #{decoder_layer.1} parent=0
    #allocation2 [shape = 'u8[8192]{0}', space=vmem, size = 0x2000, scoped, tag = 'input window, operand 3']
    #allocation3 [shape = 's32[2]{0}', space=sflag, size = 0x8, scoped, tag = 'scoped memory for decoder_layer.1']
    #allocation4 [shape = 's32[2]{0}', space=sflag, size = 0x8, scoped, tag = 'scoped memory for decoder_layer.1']
    #allocation5 [shape = 'u8[8192]{0}', space=vmem, size = 0x2000, scoped, tag = 'input window, operand 6, single buffered']
    #allocation6 [shape = 's32[1]{0}', space=sflag, size = 0x4, scoped, tag = 'scoped memory for decoder_layer.1']
    #allocation7 [shape = 'u8[512]{0}', space=vmem, size = 0x400, scoped, tag = 'input window, operand 8, single buffered']
    #allocation8 [shape = 'u8[512]{0}', space=vmem, size = 0x400, scoped, tag = 'input window, operand 9, single buffered']
    #allocation9 [shape = 's32[1]{0}', space=sflag, size = 0x4, scoped, tag = 'scoped memory for decoder_layer.1']
    #allocation10 [shape = 'u8[8192]{0}', space=vmem, size = 0x2000, scoped, tag = 'input window, operand 10, single buffered']
    #allocation11 [shape = 'u8[512]{0}', space=vmem, size = 0x400, scoped, tag = 'input window, operand 11, single buffered']
    #allocation12 [shape = 's32[1]{0}', space=sflag, size = 0x4, scoped, tag = 'scoped memory for decoder_layer.1']
    #allocation13 [shape = 'u8[8192]{0}', space=vmem, size = 0x2000, scoped, tag = 'input window, operand 12, single buffered']
    #allocation14 [shape = 'u8[512]{0}', space=vmem, size = 0x400, scoped, tag = 'input window, operand 13, single buffered']
    #allocation15 [shape = 's32[1]{0}', space=sflag, size = 0x4, scoped, tag = 'scoped memory for decoder_layer.1']
    #allocation16 [shape = 'u8[8192]{0}', space=vmem, size = 0x2000, scoped, tag = 'input window, operand 14, single buffered']
    #allocation17 [shape = 'u8[512]{0}', space=vmem, size = 0x400, scoped, tag = 'input window, operand 15, single buffered']
    #allocation18 [shape = 's32[1]{0}', space=sflag, size = 0x4, scoped, tag = 'scoped memory for decoder_layer.1']
    #allocation19 [shape = 'u8[512]{0}', space=vmem, size = 0x400, scoped, tag = 'input window, operand 16, single buffered']
    #allocation20 [shape = 'u8[512]{0}', space=vmem, size = 0x400, scoped, tag = 'input window, operand 17, single buffered']
    #allocation21 [shape = 's32[1]{0}', space=sflag, size = 0x4, scoped, tag = 'scoped memory for decoder_layer.1']
    #allocation22 [shape = 'u8[8192]{0}', space=vmem, size = 0x2000, scoped, tag = 'input window, operand 18, single buffered']
    #allocation23 [shape = 'u8[512]{0}', space=vmem, size = 0x400, scoped, tag = 'input window, operand 19, single buffered']
    #allocation24 [shape = 's32[1]{0}', space=sflag, size = 0x4, scoped, tag = 'scoped memory for decoder_layer.1']
    #allocation25 [shape = 'u8[512]{0}', space=vmem, size = 0x400, scoped, tag = 'input window, operand 21, single buffered']
    #allocation26 [shape = 'u8[512]{0}', space=vmem, size = 0x400, scoped, tag = 'input window, operand 23, single buffered']
    #allocation27 [shape = 's32[1]{0}', space=sflag, size = 0x4, scoped, tag = 'scoped memory for decoder_layer.1']
    #allocation28 [shape = 'u8[8192]{0}', space=vmem, size = 0x2000, scoped, tag = 'output window, operand 0']
    %29 = vsyncpa [#allocation3], 0
    %s30 = scalar_lea.sflag [#allocation3], 1
    %31 = vsyncpa %s30, 0
    %32 = vsyncpa [#allocation6], 0
    %33 = vsyncpa [#allocation9], 0
    %34 = vsyncpa [#allocation12], 0
    %35 = vsyncpa [#allocation15], 0
    %36 = vsyncpa [#allocation18], 0
    %37 = vsyncpa [#allocation21], 0
    %38 = vsyncpa [#allocation24], 0
    %39 = vsyncpa [#allocation27], 0
    %40 = vsyncpa [#allocation4], 0
    %s41 = scalar_lea.sflag [#allocation4], 1
    %42 = vsyncpa %s41, 0
    loop: start=0, step=1, limit=4
    $region2: #{decoder_layer.1} parent=1 // loop_pre_header
      _
    $region3: #{decoder_layer.1} parent=1 // loop_header
      %s44 = sphi 0, %s48
      %p45 = scmp.ge.s32.totalorder %s44, 4
      %s54 = sphi 0, %s56
      %s57 = sphi 0, %s54
      %s58 = sphi 0, %s57
      %s74 = sphi 0, %s58
      %s80 = sphi 0, %s82
      %s83 = sphi 0, %s80
      %s84 = sphi 0, %s83
      %s100 = sphi 0, %s84
      %s106 = sphi 0, %s108
      %s109 = sphi 0, %s106
      %s110 = sphi 0, %s109
      %s126 = sphi 0, %s110
      %s132 = sphi 0, %s134
      %s135 = sphi 0, %s132
      %s136 = sphi 0, %s135
      %s152 = sphi 0, %s136
      %s156 = sphi 0, %s156
      %s158 = sphi 0, %s156
      %s159 = sphi 0, %s158
      %s173 = sphi 0, %s159
      %s177 = sphi 0, %s177
      %s179 = sphi 0, %s177
      %s180 = sphi 0, %s179
      %s194 = sphi 0, %s180
      %s198 = sphi 0, %s198
      %s200 = sphi 0, %s198
      %s201 = sphi 0, %s200
      %s215 = sphi 0, %s201
      %s219 = sphi 0, %s219
      %s221 = sphi 0, %s219
      %s222 = sphi 0, %s221
      %s236 = sphi 0, %s222
      %s240 = sphi 0, %s240
      %s242 = sphi 0, %s240
      %s243 = sphi 0, %s242
      %s257 = sphi 0, %s243
      %s261 = sphi 0, %s261
      %s263 = sphi 0, %s261
      %s264 = sphi 0, %s263
      %s278 = sphi 0, %s264
      %s282 = sphi 0, %s282
      %s284 = sphi 0, %s282
      %s285 = sphi 0, %s284
      %s299 = sphi 0, %s285
      %s303 = sphi 0, %s303
      %s305 = sphi 0, %s303
      %s306 = sphi 0, %s305
      %s320 = sphi 0, %s306
      %s324 = sphi 0, %s324
      %s326 = sphi 0, %s324
      %s327 = sphi 0, %s326
      %s341 = sphi 0, %s327
      %s345 = sphi 0, %s345
      %s347 = sphi 0, %s345
      %s348 = sphi 0, %s347
      %s362 = sphi 0, %s348
      %s366 = sphi 0, %s366
      %s368 = sphi 0, %s366
      %s369 = sphi 0, %s368
      %s383 = sphi 0, %s369
      %s387 = sphi 0, %s387
      %s389 = sphi 0, %s387
      %s390 = sphi 0, %s389
      %s404 = sphi 0, %s390
      %s408 = sphi 0, %s408
      %s410 = sphi 0, %s408
      %s411 = sphi 0, %s410
      %s425 = sphi 0, %s411
      %s429 = sphi 0, %s429
      %s431 = sphi 0, %s429
      %s432 = sphi 0, %s431
      %s446 = sphi 0, %s432
      %s450 = sphi 0, %s450
      %s452 = sphi 0, %s450
      %s453 = sphi 0, %s452
      %s467 = sphi 0, %s453
      %s471 = sphi 0, %s471
      %s473 = sphi 0, %s471
      %s474 = sphi 0, %s473
      %s488 = sphi 0, %s474
      %s492 = sphi 0, %s492
      %s494 = sphi 0, %s492
      %s495 = sphi 0, %s494
      %s509 = sphi 0, %s495
      %s513 = sphi 0, %s513
      %s515 = sphi 0, %s513
      %s516 = sphi 0, %s515
      %s530 = sphi 0, %s516
      %s534 = sphi 0, %s534
      %s536 = sphi 0, %s534
      %s537 = sphi 0, %s536
      %s551 = sphi 0, %s537
      %s555 = sphi 0, %s555
      %s557 = sphi 0, %s555
      %s558 = sphi 0, %s557
      %s572 = sphi 0, %s558
      %s578 = sphi 0, %s580
      %s581 = sphi 0, %s578
      %s582 = sphi 0, %s581
      %s598 = sphi 0, %s582
    $region4: #{decoder_layer.1} parent=1 // loop_header_branch
      %47 = sbr.rel (%p45) target = $region8
    $region5: #{decoder_layer.1} parent=1 // loop_body
      %s49 = ssub.s32 %s44, 1
      %s50 = ssub.s32 %s44, 2
      %s51 = sadd.s32 %s44, 1
      %s52 = ssub.s32 %s44, %s51
      %p53 = scmp.eq.s32.totalorder %s52, 0
      %s55 = sadd.s32 %s54, 1
      %s56 = scalar_select %p53, %s54, %s55
      %p59 = pneg %p53
      %p60 = scmp.eq.s32.totalorder %s44, 1
      %p61 = por %p59, %p60
      %p62 = scmp.ne.s32.totalorder %s54, %s57
      %p63 = scmp.eq.s32.totalorder %s44, 0
      %p64 = por %p62, %p63
      %p65 = scmp.ne.s32.totalorder %s54, %s57
      %p66 = scmp.eq.s32.totalorder %s49, 1
      %p67 = por %p65, %p66
      %p68 = scmp.ne.s32.totalorder %s57, %s58
      %p69 = scmp.eq.s32.totalorder %s49, 0
      %p70 = por %p68, %p69
      %p71 = scmp.ne.s32.totalorder %s57, %s58
      %p72 = scmp.eq.s32.totalorder %s50, 1
      %p73 = por %p71, %p72
      %p75 = scmp.ne.s32.totalorder %s58, %s74
      %p76 = scmp.eq.s32.totalorder %s50, 0
      %p77 = por %p75, %p76
      %s78 = ssub.s32 %s44, %s51
      %p79 = scmp.eq.s32.totalorder %s78, 0
      %s81 = sadd.s32 %s80, 1
      %s82 = scalar_select %p79, %s80, %s81
      %p85 = pneg %p79
      %p86 = scmp.eq.s32.totalorder %s44, 1
      %p87 = por %p85, %p86
      %p88 = scmp.ne.s32.totalorder %s80, %s83
      %p89 = scmp.eq.s32.totalorder %s44, 0
      %p90 = por %p88, %p89
      %p91 = scmp.ne.s32.totalorder %s80, %s83
      %p92 = scmp.eq.s32.totalorder %s49, 1
      %p93 = por %p91, %p92
      %p94 = scmp.ne.s32.totalorder %s83, %s84
      %p95 = scmp.eq.s32.totalorder %s49, 0
      %p96 = por %p94, %p95
      %p97 = scmp.ne.s32.totalorder %s83, %s84
      %p98 = scmp.eq.s32.totalorder %s50, 1
      %p99 = por %p97, %p98
      %p101 = scmp.ne.s32.totalorder %s84, %s100
      %p102 = scmp.eq.s32.totalorder %s50, 0
      %p103 = por %p101, %p102
      %s104 = ssub.s32 %s44, %s51
      %p105 = scmp.eq.s32.totalorder %s104, 0
      %s107 = sadd.s32 %s106, 1
      %s108 = scalar_select %p105, %s106, %s107
      %p111 = pneg %p105
      %p112 = scmp.eq.s32.totalorder %s44, 1
      %p113 = por %p111, %p112
      %p114 = scmp.ne.s32.totalorder %s106, %s109
      %p115 = scmp.eq.s32.totalorder %s44, 0
      %p116 = por %p114, %p115
      %p117 = scmp.ne.s32.totalorder %s106, %s109
      %p118 = scmp.eq.s32.totalorder %s49, 1
      %p119 = por %p117, %p118
      %p120 = scmp.ne.s32.totalorder %s109, %s110
      %p121 = scmp.eq.s32.totalorder %s49, 0
      %p122 = por %p120, %p121
      %p123 = scmp.ne.s32.totalorder %s109, %s110
      %p124 = scmp.eq.s32.totalorder %s50, 1
      %p125 = por %p123, %p124
      %p127 = scmp.ne.s32.totalorder %s110, %s126
      %p128 = scmp.eq.s32.totalorder %s50, 0
      %p129 = por %p127, %p128
      %s130 = ssub.s32 %s44, %s51
      %p131 = scmp.eq.s32.totalorder %s130, 0
      %s133 = sadd.s32 %s132, 1
      %s134 = scalar_select %p131, %s132, %s133
      %p137 = pneg %p131
      %p138 = scmp.eq.s32.totalorder %s44, 1
      %p139 = por %p137, %p138
      %p140 = scmp.ne.s32.totalorder %s132, %s135
      %p141 = scmp.eq.s32.totalorder %s44, 0
      %p142 = por %p140, %p141
      %p143 = scmp.ne.s32.totalorder %s132, %s135
      %p144 = scmp.eq.s32.totalorder %s49, 1
      %p145 = por %p143, %p144
      %p146 = scmp.ne.s32.totalorder %s135, %s136
      %p147 = scmp.eq.s32.totalorder %s49, 0
      %p148 = por %p146, %p147
      %p149 = scmp.ne.s32.totalorder %s135, %s136
      %p150 = scmp.eq.s32.totalorder %s50, 1
      %p151 = por %p149, %p150
      %p153 = scmp.ne.s32.totalorder %s136, %s152
      %p154 = scmp.eq.s32.totalorder %s50, 0
      %p155 = por %p153, %p154
      %s157 = sadd.s32 %s156, 1
      %p160 = scmp.eq.s32.totalorder %s44, 1
      %p161 = scmp.ne.s32.totalorder %s156, %s158
      %p162 = scmp.eq.s32.totalorder %s44, 0
      %p163 = por %p161, %p162
      %p164 = scmp.ne.s32.totalorder %s156, %s158
      %p165 = scmp.eq.s32.totalorder %s49, 1
      %p166 = por %p164, %p165
      %p167 = scmp.ne.s32.totalorder %s158, %s159
      %p168 = scmp.eq.s32.totalorder %s49, 0
      %p169 = por %p167, %p168
      %p170 = scmp.ne.s32.totalorder %s158, %s159
      %p171 = scmp.eq.s32.totalorder %s50, 1
      %p172 = por %p170, %p171
      %p174 = scmp.ne.s32.totalorder %s159, %s173
      %p175 = scmp.eq.s32.totalorder %s50, 0
      %p176 = por %p174, %p175
      %s178 = sadd.s32 %s177, 1
      %p181 = scmp.eq.s32.totalorder %s44, 1
      %p182 = scmp.ne.s32.totalorder %s177, %s179
      %p183 = scmp.eq.s32.totalorder %s44, 0
      %p184 = por %p182, %p183
      %p185 = scmp.ne.s32.totalorder %s177, %s179
      %p186 = scmp.eq.s32.totalorder %s49, 1
      %p187 = por %p185, %p186
      %p188 = scmp.ne.s32.totalorder %s179, %s180
      %p189 = scmp.eq.s32.totalorder %s49, 0
      %p190 = por %p188, %p189
      %p191 = scmp.ne.s32.totalorder %s179, %s180
      %p192 = scmp.eq.s32.totalorder %s50, 1
      %p193 = por %p191, %p192
      %p195 = scmp.ne.s32.totalorder %s180, %s194
      %p196 = scmp.eq.s32.totalorder %s50, 0
      %p197 = por %p195, %p196
      %s199 = sadd.s32 %s198, 1
      %p202 = scmp.eq.s32.totalorder %s44, 1
      %p203 = scmp.ne.s32.totalorder %s198, %s200
      %p204 = scmp.eq.s32.totalorder %s44, 0
      %p205 = por %p203, %p204
      %p206 = scmp.ne.s32.totalorder %s198, %s200
      %p207 = scmp.eq.s32.totalorder %s49, 1
      %p208 = por %p206, %p207
      %p209 = scmp.ne.s32.totalorder %s200, %s201
      %p210 = scmp.eq.s32.totalorder %s49, 0
      %p211 = por %p209, %p210
      %p212 = scmp.ne.s32.totalorder %s200, %s201
      %p213 = scmp.eq.s32.totalorder %s50, 1
      %p214 = por %p212, %p213
      %p216 = scmp.ne.s32.totalorder %s201, %s215
      %p217 = scmp.eq.s32.totalorder %s50, 0
      %p218 = por %p216, %p217
      %s220 = sadd.s32 %s219, 1
      %p223 = scmp.eq.s32.totalorder %s44, 1
      %p224 = scmp.ne.s32.totalorder %s219, %s221
      %p225 = scmp.eq.s32.totalorder %s44, 0
      %p226 = por %p224, %p225
      %p227 = scmp.ne.s32.totalorder %s219, %s221
      %p228 = scmp.eq.s32.totalorder %s49, 1
      %p229 = por %p227, %p228
      %p230 = scmp.ne.s32.totalorder %s221, %s222
      %p231 = scmp.eq.s32.totalorder %s49, 0
      %p232 = por %p230, %p231
      %p233 = scmp.ne.s32.totalorder %s221, %s222
      %p234 = scmp.eq.s32.totalorder %s50, 1
      %p235 = por %p233, %p234
      %p237 = scmp.ne.s32.totalorder %s222, %s236
      %p238 = scmp.eq.s32.totalorder %s50, 0
      %p239 = por %p237, %p238
      %s241 = sadd.s32 %s240, 1
      %p244 = scmp.eq.s32.totalorder %s44, 1
      %p245 = scmp.ne.s32.totalorder %s240, %s242
      %p246 = scmp.eq.s32.totalorder %s44, 0
      %p247 = por %p245, %p246
      %p248 = scmp.ne.s32.totalorder %s240, %s242
      %p249 = scmp.eq.s32.totalorder %s49, 1
      %p250 = por %p248, %p249
      %p251 = scmp.ne.s32.totalorder %s242, %s243
      %p252 = scmp.eq.s32.totalorder %s49, 0
      %p253 = por %p251, %p252
      %p254 = scmp.ne.s32.totalorder %s242, %s243
      %p255 = scmp.eq.s32.totalorder %s50, 1
      %p256 = por %p254, %p255
      %p258 = scmp.ne.s32.totalorder %s243, %s257
      %p259 = scmp.eq.s32.totalorder %s50, 0
      %p260 = por %p258, %p259
      %s262 = sadd.s32 %s261, 1
      %p265 = scmp.eq.s32.totalorder %s44, 1
      %p266 = scmp.ne.s32.totalorder %s261, %s263
      %p267 = scmp.eq.s32.totalorder %s44, 0
      %p268 = por %p266, %p267
      %p269 = scmp.ne.s32.totalorder %s261, %s263
      %p270 = scmp.eq.s32.totalorder %s49, 1
      %p271 = por %p269, %p270
      %p272 = scmp.ne.s32.totalorder %s263, %s264
      %p273 = scmp.eq.s32.totalorder %s49, 0
      %p274 = por %p272, %p273
      %p275 = scmp.ne.s32.totalorder %s263, %s264
      %p276 = scmp.eq.s32.totalorder %s50, 1
      %p277 = por %p275, %p276
      %p279 = scmp.ne.s32.totalorder %s264, %s278
      %p280 = scmp.eq.s32.totalorder %s50, 0
      %p281 = por %p279, %p280
      %s283 = sadd.s32 %s282, 1
      %p286 = scmp.eq.s32.totalorder %s44, 1
      %p287 = scmp.ne.s32.totalorder %s282, %s284
      %p288 = scmp.eq.s32.totalorder %s44, 0
      %p289 = por %p287, %p288
      %p290 = scmp.ne.s32.totalorder %s282, %s284
      %p291 = scmp.eq.s32.totalorder %s49, 1
      %p292 = por %p290, %p291
      %p293 = scmp.ne.s32.totalorder %s284, %s285
      %p294 = scmp.eq.s32.totalorder %s49, 0
      %p295 = por %p293, %p294
      %p296 = scmp.ne.s32.totalorder %s284, %s285
      %p297 = scmp.eq.s32.totalorder %s50, 1
      %p298 = por %p296, %p297
      %p300 = scmp.ne.s32.totalorder %s285, %s299
      %p301 = scmp.eq.s32.totalorder %s50, 0
      %p302 = por %p300, %p301
      %s304 = sadd.s32 %s303, 1
      %p307 = scmp.eq.s32.totalorder %s44, 1
      %p308 = scmp.ne.s32.totalorder %s303, %s305
      %p309 = scmp.eq.s32.totalorder %s44, 0
      %p310 = por %p308, %p309
      %p311 = scmp.ne.s32.totalorder %s303, %s305
      %p312 = scmp.eq.s32.totalorder %s49, 1
      %p313 = por %p311, %p312
      %p314 = scmp.ne.s32.totalorder %s305, %s306
      %p315 = scmp.eq.s32.totalorder %s49, 0
      %p316 = por %p314, %p315
      %p317 = scmp.ne.s32.totalorder %s305, %s306
      %p318 = scmp.eq.s32.totalorder %s50, 1
      %p319 = por %p317, %p318
      %p321 = scmp.ne.s32.totalorder %s306, %s320
      %p322 = scmp.eq.s32.totalorder %s50, 0
      %p323 = por %p321, %p322
      %s325 = sadd.s32 %s324, 1
      %p328 = scmp.eq.s32.totalorder %s44, 1
      %p329 = scmp.ne.s32.totalorder %s324, %s326
      %p330 = scmp.eq.s32.totalorder %s44, 0
      %p331 = por %p329, %p330
      %p332 = scmp.ne.s32.totalorder %s324, %s326
      %p333 = scmp.eq.s32.totalorder %s49, 1
      %p334 = por %p332, %p333
      %p335 = scmp.ne.s32.totalorder %s326, %s327
      %p336 = scmp.eq.s32.totalorder %s49, 0
      %p337 = por %p335, %p336
      %p338 = scmp.ne.s32.totalorder %s326, %s327
      %p339 = scmp.eq.s32.totalorder %s50, 1
      %p340 = por %p338, %p339
      %p342 = scmp.ne.s32.totalorder %s327, %s341
      %p343 = scmp.eq.s32.totalorder %s50, 0
      %p344 = por %p342, %p343
      %s346 = sadd.s32 %s345, 1
      %p349 = scmp.eq.s32.totalorder %s44, 1
      %p350 = scmp.ne.s32.totalorder %s345, %s347
      %p351 = scmp.eq.s32.totalorder %s44, 0
      %p352 = por %p350, %p351
      %p353 = scmp.ne.s32.totalorder %s345, %s347
      %p354 = scmp.eq.s32.totalorder %s49, 1
      %p355 = por %p353, %p354
      %p356 = scmp.ne.s32.totalorder %s347, %s348
      %p357 = scmp.eq.s32.totalorder %s49, 0
      %p358 = por %p356, %p357
      %p359 = scmp.ne.s32.totalorder %s347, %s348
      %p360 = scmp.eq.s32.totalorder %s50, 1
      %p361 = por %p359, %p360
      %p363 = scmp.ne.s32.totalorder %s348, %s362
      %p364 = scmp.eq.s32.totalorder %s50, 0
      %p365 = por %p363, %p364
      %s367 = sadd.s32 %s366, 1
      %p370 = scmp.eq.s32.totalorder %s44, 1
      %p371 = scmp.ne.s32.totalorder %s366, %s368
      %p372 = scmp.eq.s32.totalorder %s44, 0
      %p373 = por %p371, %p372
      %p374 = scmp.ne.s32.totalorder %s366, %s368
      %p375 = scmp.eq.s32.totalorder %s49, 1
      %p376 = por %p374, %p375
      %p377 = scmp.ne.s32.totalorder %s368, %s369
      %p378 = scmp.eq.s32.totalorder %s49, 0
      %p379 = por %p377, %p378
      %p380 = scmp.ne.s32.totalorder %s368, %s369
      %p381 = scmp.eq.s32.totalorder %s50, 1
      %p382 = por %p380, %p381
      %p384 = scmp.ne.s32.totalorder %s369, %s383
      %p385 = scmp.eq.s32.totalorder %s50, 0
      %p386 = por %p384, %p385
      %s388 = sadd.s32 %s387, 1
      %p391 = scmp.eq.s32.totalorder %s44, 1
      %p392 = scmp.ne.s32.totalorder %s387, %s389
      %p393 = scmp.eq.s32.totalorder %s44, 0
      %p394 = por %p392, %p393
      %p395 = scmp.ne.s32.totalorder %s387, %s389
      %p396 = scmp.eq.s32.totalorder %s49, 1
      %p397 = por %p395, %p396
      %p398 = scmp.ne.s32.totalorder %s389, %s390
      %p399 = scmp.eq.s32.totalorder %s49, 0
      %p400 = por %p398, %p399
      %p401 = scmp.ne.s32.totalorder %s389, %s390
      %p402 = scmp.eq.s32.totalorder %s50, 1
      %p403 = por %p401, %p402
      %p405 = scmp.ne.s32.totalorder %s390, %s404
      %p406 = scmp.eq.s32.totalorder %s50, 0
      %p407 = por %p405, %p406
      %s409 = sadd.s32 %s408, 1
      %p412 = scmp.eq.s32.totalorder %s44, 1
      %p413 = scmp.ne.s32.totalorder %s408, %s410
      %p414 = scmp.eq.s32.totalorder %s44, 0
      %p415 = por %p413, %p414
      %p416 = scmp.ne.s32.totalorder %s408, %s410
      %p417 = scmp.eq.s32.totalorder %s49, 1
      %p418 = por %p416, %p417
      %p419 = scmp.ne.s32.totalorder %s410, %s411
      %p420 = scmp.eq.s32.totalorder %s49, 0
      %p421 = por %p419, %p420
      %p422 = scmp.ne.s32.totalorder %s410, %s411
      %p423 = scmp.eq.s32.totalorder %s50, 1
      %p424 = por %p422, %p423
      %p426 = scmp.ne.s32.totalorder %s411, %s425
      %p427 = scmp.eq.s32.totalorder %s50, 0
      %p428 = por %p426, %p427
      %s430 = sadd.s32 %s429, 1
      %p433 = scmp.eq.s32.totalorder %s44, 1
      %p434 = scmp.ne.s32.totalorder %s429, %s431
      %p435 = scmp.eq.s32.totalorder %s44, 0
      %p436 = por %p434, %p435
      %p437 = scmp.ne.s32.totalorder %s429, %s431
      %p438 = scmp.eq.s32.totalorder %s49, 1
      %p439 = por %p437, %p438
      %p440 = scmp.ne.s32.totalorder %s431, %s432
      %p441 = scmp.eq.s32.totalorder %s49, 0
      %p442 = por %p440, %p441
      %p443 = scmp.ne.s32.totalorder %s431, %s432
      %p444 = scmp.eq.s32.totalorder %s50, 1
      %p445 = por %p443, %p444
      %p447 = scmp.ne.s32.totalorder %s432, %s446
      %p448 = scmp.eq.s32.totalorder %s50, 0
      %p449 = por %p447, %p448
      %s451 = sadd.s32 %s450, 1
      %p454 = scmp.eq.s32.totalorder %s44, 1
      %p455 = scmp.ne.s32.totalorder %s450, %s452
      %p456 = scmp.eq.s32.totalorder %s44, 0
      %p457 = por %p455, %p456
      %p458 = scmp.ne.s32.totalorder %s450, %s452
      %p459 = scmp.eq.s32.totalorder %s49, 1
      %p460 = por %p458, %p459
      %p461 = scmp.ne.s32.totalorder %s452, %s453
      %p462 = scmp.eq.s32.totalorder %s49, 0
      %p463 = por %p461, %p462
      %p464 = scmp.ne.s32.totalorder %s452, %s453
      %p465 = scmp.eq.s32.totalorder %s50, 1
      %p466 = por %p464, %p465
      %p468 = scmp.ne.s32.totalorder %s453, %s467
      %p469 = scmp.eq.s32.totalorder %s50, 0
      %p470 = por %p468, %p469
      %s472 = sadd.s32 %s471, 1
      %p475 = scmp.eq.s32.totalorder %s44, 1
      %p476 = scmp.ne.s32.totalorder %s471, %s473
      %p477 = scmp.eq.s32.totalorder %s44, 0
      %p478 = por %p476, %p477
      %p479 = scmp.ne.s32.totalorder %s471, %s473
      %p480 = scmp.eq.s32.totalorder %s49, 1
      %p481 = por %p479, %p480
      %p482 = scmp.ne.s32.totalorder %s473, %s474
      %p483 = scmp.eq.s32.totalorder %s49, 0
      %p484 = por %p482, %p483
      %p485 = scmp.ne.s32.totalorder %s473, %s474
      %p486 = scmp.eq.s32.totalorder %s50, 1
      %p487 = por %p485, %p486
      %p489 = scmp.ne.s32.totalorder %s474, %s488
      %p490 = scmp.eq.s32.totalorder %s50, 0
      %p491 = por %p489, %p490
      %s493 = sadd.s32 %s492, 1
      %p496 = scmp.eq.s32.totalorder %s44, 1
      %p497 = scmp.ne.s32.totalorder %s492, %s494
      %p498 = scmp.eq.s32.totalorder %s44, 0
      %p499 = por %p497, %p498
      %p500 = scmp.ne.s32.totalorder %s492, %s494
      %p501 = scmp.eq.s32.totalorder %s49, 1
      %p502 = por %p500, %p501
      %p503 = scmp.ne.s32.totalorder %s494, %s495
      %p504 = scmp.eq.s32.totalorder %s49, 0
      %p505 = por %p503, %p504
      %p506 = scmp.ne.s32.totalorder %s494, %s495
      %p507 = scmp.eq.s32.totalorder %s50, 1
      %p508 = por %p506, %p507
      %p510 = scmp.ne.s32.totalorder %s495, %s509
      %p511 = scmp.eq.s32.totalorder %s50, 0
      %p512 = por %p510, %p511
      %s514 = sadd.s32 %s513, 1
      %p517 = scmp.eq.s32.totalorder %s44, 1
      %p518 = scmp.ne.s32.totalorder %s513, %s515
      %p519 = scmp.eq.s32.totalorder %s44, 0
      %p520 = por %p518, %p519
      %p521 = scmp.ne.s32.totalorder %s513, %s515
      %p522 = scmp.eq.s32.totalorder %s49, 1
      %p523 = por %p521, %p522
      %p524 = scmp.ne.s32.totalorder %s515, %s516
      %p525 = scmp.eq.s32.totalorder %s49, 0
      %p526 = por %p524, %p525
      %p527 = scmp.ne.s32.totalorder %s515, %s516
      %p528 = scmp.eq.s32.totalorder %s50, 1
      %p529 = por %p527, %p528
      %p531 = scmp.ne.s32.totalorder %s516, %s530
      %p532 = scmp.eq.s32.totalorder %s50, 0
      %p533 = por %p531, %p532
      %s535 = sadd.s32 %s534, 1
      %p538 = scmp.eq.s32.totalorder %s44, 1
      %p539 = scmp.ne.s32.totalorder %s534, %s536
      %p540 = scmp.eq.s32.totalorder %s44, 0
      %p541 = por %p539, %p540
      %p542 = scmp.ne.s32.totalorder %s534, %s536
      %p543 = scmp.eq.s32.totalorder %s49, 1
      %p544 = por %p542, %p543
      %p545 = scmp.ne.s32.totalorder %s536, %s537
      %p546 = scmp.eq.s32.totalorder %s49, 0
      %p547 = por %p545, %p546
      %p548 = scmp.ne.s32.totalorder %s536, %s537
      %p549 = scmp.eq.s32.totalorder %s50, 1
      %p550 = por %p548, %p549
      %p552 = scmp.ne.s32.totalorder %s537, %s551
      %p553 = scmp.eq.s32.totalorder %s50, 0
      %p554 = por %p552, %p553
      %s556 = sadd.s32 %s555, 1
      %p559 = scmp.eq.s32.totalorder %s44, 1
      %p560 = scmp.ne.s32.totalorder %s555, %s557
      %p561 = scmp.eq.s32.totalorder %s44, 0
      %p562 = por %p560, %p561
      %p563 = scmp.ne.s32.totalorder %s555, %s557
      %p564 = scmp.eq.s32.totalorder %s49, 1
      %p565 = por %p563, %p564
      %p566 = scmp.ne.s32.totalorder %s557, %s558
      %p567 = scmp.eq.s32.totalorder %s49, 0
      %p568 = por %p566, %p567
      %p569 = scmp.ne.s32.totalorder %s557, %s558
      %p570 = scmp.eq.s32.totalorder %s50, 1
      %p571 = por %p569, %p570
      %p573 = scmp.ne.s32.totalorder %s558, %s572
      %p574 = scmp.eq.s32.totalorder %s50, 0
      %p575 = por %p573, %p574
      %s576 = ssub.s32 %s44, %s51
      %p577 = scmp.eq.s32.totalorder %s576, 0
      %s579 = sadd.s32 %s578, 1
      %s580 = scalar_select %p577, %s578, %s579
      %p583 = pneg %p577
      %p584 = scmp.eq.s32.totalorder %s44, 1
      %p585 = por %p583, %p584
      %p586 = scmp.ne.s32.totalorder %s578, %s581
      %p587 = scmp.eq.s32.totalorder %s44, 0
      %p588 = por %p586, %p587
      %p589 = scmp.ne.s32.totalorder %s578, %s581
      %p590 = scmp.eq.s32.totalorder %s49, 1
      %p591 = por %p589, %p590
      %p592 = scmp.ne.s32.totalorder %s581, %s582
      %p593 = scmp.eq.s32.totalorder %s49, 0
      %p594 = por %p592, %p593
      %p595 = scmp.ne.s32.totalorder %s581, %s582
      %p596 = scmp.eq.s32.totalorder %s50, 1
      %p597 = por %p595, %p596
      %p599 = scmp.ne.s32.totalorder %s582, %s598
      %p600 = scmp.eq.s32.totalorder %s50, 0
      %p601 = por %p599, %p600
      %p602 = scmp.le.s32.totalorder 1, %s44
      %p603 = scmp.lt.s32.totalorder %s44, 3
      %p604 = pnand %p602, %p603
      %p605 = pneg %p604
      // Predicated region
      $region9: #{decoder_layer.1} parent=5 // pred_check
        _
      $region10: #{decoder_layer.1} parent=5 // pred_check_branch
        %607 = sbr.rel (%p604) target = $region12
      $region11: #{decoder_layer.1} parent=5 // pred_region
        %s608 = ssub.s32 %s44, 1
        // Predicated region
        $region13: #{decoder_layer.1} parent=11 // pred_check
          %p609 = pneg %p169
        $region14: #{decoder_layer.1} parent=11 // pred_check_branch
          %611 = sbr.rel (%p609) target = $region16
        $region15: #{decoder_layer.1} parent=11 // pred_region
          _
        $region16: #{decoder_layer.1} parent=11 // pred_fallthru
          _
        // Predicated region
        $region17: #{decoder_layer.1} parent=11 // pred_check
          %p612 = pneg %p190
        $region18: #{decoder_layer.1} parent=11 // pred_check_branch
          %614 = sbr.rel (%p612) target = $region20
        $region19: #{decoder_layer.1} parent=11 // pred_region
          _
        $region20: #{decoder_layer.1} parent=11 // pred_fallthru
          _
        // Predicated region
        $region21: #{decoder_layer.1} parent=11 // pred_check
          %p615 = pneg %p211
        $region22: #{decoder_layer.1} parent=11 // pred_check_branch
          %617 = sbr.rel (%p615) target = $region24
        $region23: #{decoder_layer.1} parent=11 // pred_region
          %619 = vsyncadd [#allocation6], 0
          %s620 = sshll.u32 %s6, 4
          %s621 = int_to_ptr.hbm [resolvable:$true] %s620
          %s622 = sshll.u32 [#allocation5], 4
          %s623 = int_to_ptr.vmem [resolvable:$true] %s622
          %628 = dma.hbm_to_vmem [thread:$0]  %s621, 256, %s623, [#allocation6], 64, 64, 4
        $region24: #{decoder_layer.1} parent=11 // pred_fallthru
          _
        // Predicated region
        $region25: #{decoder_layer.1} parent=11 // pred_check
          %p629 = pneg %p232
        $region26: #{decoder_layer.1} parent=11 // pred_check_branch
          %631 = sbr.rel (%p629) target = $region28
        $region27: #{decoder_layer.1} parent=11 // pred_region
          _
        $region28: #{decoder_layer.1} parent=11 // pred_fallthru
          _
        // Predicated region
        $region29: #{decoder_layer.1} parent=11 // pred_check
          %p632 = pneg %p253
        $region30: #{decoder_layer.1} parent=11 // pred_check_branch
          %634 = sbr.rel (%p632) target = $region32
        $region31: #{decoder_layer.1} parent=11 // pred_region
          %636 = vsyncadd [#allocation6], 0
          %s638 = sshll.u32 %s8, 4
          %s639 = int_to_ptr.hbm [resolvable:$true] %s638
          %s640 = sshll.u32 [#allocation7], 4
          %s641 = int_to_ptr.vmem [resolvable:$true] %s640
          %643 = dma.hbm_to_vmem [thread:$0]  %s639, 16, %s641, [#allocation6]
        $region32: #{decoder_layer.1} parent=11 // pred_fallthru
          _
        // Predicated region
        $region33: #{decoder_layer.1} parent=11 // pred_check
          %p644 = pneg %p274
        $region34: #{decoder_layer.1} parent=11 // pred_check_branch
          %646 = sbr.rel (%p644) target = $region36
        $region35: #{decoder_layer.1} parent=11 // pred_region
          %648 = vsyncadd [#allocation9], 0
          %s650 = sshll.u32 %s9, 4
          %s651 = int_to_ptr.hbm [resolvable:$true] %s650
          %s652 = sshll.u32 [#allocation8], 4
          %s653 = int_to_ptr.vmem [resolvable:$true] %s652
          %655 = dma.hbm_to_vmem [thread:$0]  %s651, 16, %s653, [#allocation9]
        $region36: #{decoder_layer.1} parent=11 // pred_fallthru
          _
        // Predicated region
        $region37: #{decoder_layer.1} parent=11 // pred_check
          %p656 = pneg %p295
        $region38: #{decoder_layer.1} parent=11 // pred_check_branch
          %658 = sbr.rel (%p656) target = $region40
        $region39: #{decoder_layer.1} parent=11 // pred_region
          %660 = vsyncadd [#allocation9], 0
          %s661 = sshll.u32 %s10, 4
          %s662 = int_to_ptr.hbm [resolvable:$true] %s661
          %s663 = sshll.u32 [#allocation10], 4
          %s664 = int_to_ptr.vmem [resolvable:$true] %s663
          %669 = dma.hbm_to_vmem [thread:$0]  %s662, 256, %s664, [#allocation9], 64, 64, 4
        $region40: #{decoder_layer.1} parent=11 // pred_fallthru
          _
        // Predicated region
        $region41: #{decoder_layer.1} parent=11 // pred_check
          %p670 = pneg %p316
        $region42: #{decoder_layer.1} parent=11 // pred_check_branch
          %672 = sbr.rel (%p670) target = $region44
        $region43: #{decoder_layer.1} parent=11 // pred_region
          %674 = vsyncadd [#allocation12], 0
          %s676 = sshll.u32 %s11, 4
          %s677 = int_to_ptr.hbm [resolvable:$true] %s676
          %s678 = sshll.u32 [#allocation11], 4
          %s679 = int_to_ptr.vmem [resolvable:$true] %s678
          %681 = dma.hbm_to_vmem [thread:$0]  %s677, 16, %s679, [#allocation12]
        $region44: #{decoder_layer.1} parent=11 // pred_fallthru
          _
        // Predicated region
        $region45: #{decoder_layer.1} parent=11 // pred_check
          %p682 = pneg %p337
        $region46: #{decoder_layer.1} parent=11 // pred_check_branch
          %684 = sbr.rel (%p682) target = $region48
        $region47: #{decoder_layer.1} parent=11 // pred_region
          %686 = vsyncadd [#allocation12], 0
          %s687 = sshll.u32 %s12, 4
          %s688 = int_to_ptr.hbm [resolvable:$true] %s687
          %s689 = sshll.u32 [#allocation13], 4
          %s690 = int_to_ptr.vmem [resolvable:$true] %s689
          %695 = dma.hbm_to_vmem [thread:$0]  %s688, 256, %s690, [#allocation12], 64, 64, 4
        $region48: #{decoder_layer.1} parent=11 // pred_fallthru
          _
        // Predicated region
        $region49: #{decoder_layer.1} parent=11 // pred_check
          %p696 = pneg %p358
        $region50: #{decoder_layer.1} parent=11 // pred_check_branch
          %698 = sbr.rel (%p696) target = $region52
        $region51: #{decoder_layer.1} parent=11 // pred_region
          %700 = vsyncadd [#allocation15], 0
          %s702 = sshll.u32 %s13, 4
          %s703 = int_to_ptr.hbm [resolvable:$true] %s702
          %s704 = sshll.u32 [#allocation14], 4
          %s705 = int_to_ptr.vmem [resolvable:$true] %s704
          %707 = dma.hbm_to_vmem [thread:$0]  %s703, 16, %s705, [#allocation15]
        $region52: #{decoder_layer.1} parent=11 // pred_fallthru
          _
        // Predicated region
        $region53: #{decoder_layer.1} parent=11 // pred_check
          %p708 = pneg %p379
        $region54: #{decoder_layer.1} parent=11 // pred_check_branch
          %710 = sbr.rel (%p708) target = $region56
        $region55: #{decoder_layer.1} parent=11 // pred_region
          %712 = vsyncadd [#allocation15], 0
          %s713 = sshll.u32 %s14, 4
          %s714 = int_to_ptr.hbm [resolvable:$true] %s713
          %s715 = sshll.u32 [#allocation16], 4
          %s716 = int_to_ptr.vmem [resolvable:$true] %s715
          %721 = dma.hbm_to_vmem [thread:$0]  %s714, 256, %s716, [#allocation15], 64, 64, 4
        $region56: #{decoder_layer.1} parent=11 // pred_fallthru
          _
        // Predicated region
        $region57: #{decoder_layer.1} parent=11 // pred_check
          %p722 = pneg %p400
        $region58: #{decoder_layer.1} parent=11 // pred_check_branch
          %724 = sbr.rel (%p722) target = $region60
        $region59: #{decoder_layer.1} parent=11 // pred_region
          %726 = vsyncadd [#allocation18], 0
          %s728 = sshll.u32 %s15, 4
          %s729 = int_to_ptr.hbm [resolvable:$true] %s728
          %s730 = sshll.u32 [#allocation17], 4
          %s731 = int_to_ptr.vmem [resolvable:$true] %s730
          %733 = dma.hbm_to_vmem [thread:$0]  %s729, 16, %s731, [#allocation18]
        $region60: #{decoder_layer.1} parent=11 // pred_fallthru
          _
        // Predicated region
        $region61: #{decoder_layer.1} parent=11 // pred_check
          %p734 = pneg %p421
        $region62: #{decoder_layer.1} parent=11 // pred_check_branch
          %736 = sbr.rel (%p734) target = $region64
        $region63: #{decoder_layer.1} parent=11 // pred_region
          %738 = vsyncadd [#allocation18], 0
          %s740 = sshll.u32 %s16, 4
          %s741 = int_to_ptr.hbm [resolvable:$true] %s740
          %s742 = sshll.u32 [#allocation19], 4
          %s743 = int_to_ptr.vmem [resolvable:$true] %s742
          %745 = dma.hbm_to_vmem [thread:$0]  %s741, 16, %s743, [#allocation18]
        $region64: #{decoder_layer.1} parent=11 // pred_fallthru
          _
        // Predicated region
        $region65: #{decoder_layer.1} parent=11 // pred_check
          %p746 = pneg %p442
        $region66: #{decoder_layer.1} parent=11 // pred_check_branch
          %748 = sbr.rel (%p746) target = $region68
        $region67: #{decoder_layer.1} parent=11 // pred_region
          %750 = vsyncadd [#allocation21], 0
          %s752 = sshll.u32 %s17, 4
          %s753 = int_to_ptr.hbm [resolvable:$true] %s752
          %s754 = sshll.u32 [#allocation20], 4
          %s755 = int_to_ptr.vmem [resolvable:$true] %s754
          %757 = dma.hbm_to_vmem [thread:$0]  %s753, 16, %s755, [#allocation21]
        $region68: #{decoder_layer.1} parent=11 // pred_fallthru
          _
        // Predicated region
        $region69: #{decoder_layer.1} parent=11 // pred_check
          %p758 = pneg %p463
        $region70: #{decoder_layer.1} parent=11 // pred_check_branch
          %760 = sbr.rel (%p758) target = $region72
        $region71: #{decoder_layer.1} parent=11 // pred_region
          %762 = vsyncadd [#allocation21], 0
          %s763 = sshll.u32 %s18, 4
          %s764 = int_to_ptr.hbm [resolvable:$true] %s763
          %s765 = sshll.u32 [#allocation22], 4
          %s766 = int_to_ptr.vmem [resolvable:$true] %s765
          %771 = dma.hbm_to_vmem [thread:$0]  %s764, 256, %s766, [#allocation21], 64, 64, 4
        $region72: #{decoder_layer.1} parent=11 // pred_fallthru
          _
        // Predicated region
        $region73: #{decoder_layer.1} parent=11 // pred_check
          %p772 = pneg %p484
        $region74: #{decoder_layer.1} parent=11 // pred_check_branch
          %774 = sbr.rel (%p772) target = $region76
        $region75: #{decoder_layer.1} parent=11 // pred_region
          %776 = vsyncadd [#allocation24], 0
          %s778 = sshll.u32 %s19, 4
          %s779 = int_to_ptr.hbm [resolvable:$true] %s778
          %s780 = sshll.u32 [#allocation23], 4
          %s781 = int_to_ptr.vmem [resolvable:$true] %s780
          %783 = dma.hbm_to_vmem [thread:$0]  %s779, 16, %s781, [#allocation24]
        $region76: #{decoder_layer.1} parent=11 // pred_fallthru
          _
        // Predicated region
        $region77: #{decoder_layer.1} parent=11 // pred_check
          %p784 = pneg %p505
        $region78: #{decoder_layer.1} parent=11 // pred_check_branch
          %786 = sbr.rel (%p784) target = $region80
        $region79: #{decoder_layer.1} parent=11 // pred_region
          _
        $region80: #{decoder_layer.1} parent=11 // pred_fallthru
          _
        // Predicated region
        $region81: #{decoder_layer.1} parent=11 // pred_check
          %p787 = pneg %p526
        $region82: #{decoder_layer.1} parent=11 // pred_check_branch
          %789 = sbr.rel (%p787) target = $region84
        $region83: #{decoder_layer.1} parent=11 // pred_region
          %791 = vsyncadd [#allocation24], 0
          %s793 = sshll.u32 %s21, 4
          %s794 = int_to_ptr.hbm [resolvable:$true] %s793
          %s795 = sshll.u32 [#allocation25], 4
          %s796 = int_to_ptr.vmem [resolvable:$true] %s795
          %798 = dma.hbm_to_vmem [thread:$0]  %s794, 16, %s796, [#allocation24]
        $region84: #{decoder_layer.1} parent=11 // pred_fallthru
          _
        // Predicated region
        $region85: #{decoder_layer.1} parent=11 // pred_check
          %p799 = pneg %p547
        $region86: #{decoder_layer.1} parent=11 // pred_check_branch
          %801 = sbr.rel (%p799) target = $region88
        $region87: #{decoder_layer.1} parent=11 // pred_region
          _
        $region88: #{decoder_layer.1} parent=11 // pred_fallthru
          _
        // Predicated region
        $region89: #{decoder_layer.1} parent=11 // pred_check
          %p802 = pneg %p568
        $region90: #{decoder_layer.1} parent=11 // pred_check_branch
          %804 = sbr.rel (%p802) target = $region92
        $region91: #{decoder_layer.1} parent=11 // pred_region
          %806 = vsyncadd [#allocation27], 0
          %s808 = sshll.u32 %s23, 4
          %s809 = int_to_ptr.hbm [resolvable:$true] %s808
          %s810 = sshll.u32 [#allocation26], 4
          %s811 = int_to_ptr.vmem [resolvable:$true] %s810
          %813 = dma.hbm_to_vmem [thread:$0]  %s809, 16, %s811, [#allocation27]
        $region92: #{decoder_layer.1} parent=11 // pred_fallthru
          _
      $region12: #{decoder_layer.1} parent=5 // pred_fallthru
        _
      %p814 = scmp.lt.s32.totalorder %s44, 2
      // Predicated region
      $region93: #{decoder_layer.1} parent=5 // pred_check
        %p815 = pneg %p814
      $region94: #{decoder_layer.1} parent=5 // pred_check_branch
        %817 = sbr.rel (%p815) target = $region96
      $region95: #{decoder_layer.1} parent=5 // pred_region
        // Predicated region
        $region97: #{decoder_layer.1} parent=95 // pred_check
          %p818 = pneg %p64
        $region98: #{decoder_layer.1} parent=95 // pred_check_branch
          %820 = sbr.rel (%p818) target = $region100
        $region99: #{decoder_layer.1} parent=95 // pred_region
          %p821 = scmp.lt.s32.totalorder %s44, 1
          %s822 = scalar_select %p821, %s44, 1
          %s823 = smul.addr %s822, 8
          %s824 = scalar_lea.vmem %s0, %s823
        $region100: #{decoder_layer.1} parent=95 // pred_fallthru
          _
        // Predicated region
        $region101: #{decoder_layer.1} parent=95 // pred_check
          %p825 = pneg %p90
        $region102: #{decoder_layer.1} parent=95 // pred_check_branch
          %827 = sbr.rel (%p825) target = $region104
        $region103: #{decoder_layer.1} parent=95 // pred_region
          %p828 = scmp.lt.s32.totalorder %s44, 1
          %s829 = scalar_select %p828, %s44, 1
          %s830 = smul.addr %s829, 8
          %s831 = scalar_lea.vmem %s1, %s830
        $region104: #{decoder_layer.1} parent=95 // pred_fallthru
          _
        // Predicated region
        $region105: #{decoder_layer.1} parent=95 // pred_check
          %p832 = pneg %p116
        $region106: #{decoder_layer.1} parent=95 // pred_check_branch
          %834 = sbr.rel (%p832) target = $region108
        $region107: #{decoder_layer.1} parent=95 // pred_region
          %p835 = scmp.lt.s32.totalorder %s44, 1
          %s836 = scalar_select %p835, %s44, 1
          %s837 = smul.addr %s836, 8
          %s838 = scalar_lea.vmem %s2, %s837
        $region108: #{decoder_layer.1} parent=95 // pred_fallthru
          _
        // Predicated region
        $region109: #{decoder_layer.1} parent=95 // pred_check
          %p839 = pneg %p142
        $region110: #{decoder_layer.1} parent=95 // pred_check_branch
          %841 = sbr.rel (%p839) target = $region112
        $region111: #{decoder_layer.1} parent=95 // pred_region
          %s842 = sand.u32 %s132, 1
          %s843 = scalar_lea.sflag [#allocation3], %s842
          %s844 = sand.u32 %s132, 1
          %s845 = smul.addr %s844, 8
          %s846 = scalar_lea.vmem [#allocation2], %s845
          %848 = vsyncadd %s843, 0
          %s849 = smul.addr %s44, 8
          %s850 = scalar_lea.hbm %s3, %s849
          %s852 = sshll.u32 %s850, 4
          %s853 = int_to_ptr.hbm [resolvable:$true] %s852
          %s854 = sshll.u32 %s846, 4
          %s855 = int_to_ptr.vmem [resolvable:$true] %s854
          %857 = dma.hbm_to_vmem [thread:$0]  %s853, 128, %s855, %s843
        $region112: #{decoder_layer.1} parent=95 // pred_fallthru
          _
      $region96: #{decoder_layer.1} parent=5 // pred_fallthru
        _
      %p858 = scmp.le.s32.totalorder 1, %s44
      %p859 = scmp.lt.s32.totalorder %s44, 3
      %p860 = pnand %p858, %p859
      %p861 = pneg %p860
      // Predicated region
      $region113: #{decoder_layer.1} parent=5 // pred_check
        _
      $region114: #{decoder_layer.1} parent=5 // pred_check_branch
        %863 = sbr.rel (%p860) target = $region116
      $region115: #{decoder_layer.1} parent=5 // pred_region
        %s864 = ssub.s32 %s44, 1
        %s865 = sand.u32 %s135, 1
        %s866 = scalar_lea.sflag [#allocation3], %s865
        %s867 = sand.u32 %s135, 1
        %s868 = smul.addr %s867, 8
        %s869 = scalar_lea.vmem [#allocation2], %s868
        // Predicated region
        $region117: #{decoder_layer.1} parent=115 // pred_check
          %p870 = pneg %p148
        $region118: #{decoder_layer.1} parent=115 // pred_check_branch
          %872 = sbr.rel (%p870) target = $region120
        $region119: #{decoder_layer.1} parent=115 // pred_region
          %874 = dma.done %s866, 128
        $region120: #{decoder_layer.1} parent=115 // pred_fallthru
          _
        // Predicated region
        $region121: #{decoder_layer.1} parent=115 // pred_check
          %p875 = pneg %p211
        $region122: #{decoder_layer.1} parent=115 // pred_check_branch
          %877 = sbr.rel (%p875) target = $region124
        $region123: #{decoder_layer.1} parent=115 // pred_region
          %879 = dma.done [#allocation6], 256
        $region124: #{decoder_layer.1} parent=115 // pred_fallthru
          _
        // Predicated region
        $region125: #{decoder_layer.1} parent=115 // pred_check
          %p880 = pneg %p253
        $region126: #{decoder_layer.1} parent=115 // pred_check_branch
          %882 = sbr.rel (%p880) target = $region128
        $region127: #{decoder_layer.1} parent=115 // pred_region
          %884 = dma.done [#allocation6], 16
        $region128: #{decoder_layer.1} parent=115 // pred_fallthru
          _
        // Predicated region
        $region129: #{decoder_layer.1} parent=115 // pred_check
          %p885 = pneg %p274
        $region130: #{decoder_layer.1} parent=115 // pred_check_branch
          %887 = sbr.rel (%p885) target = $region132
        $region131: #{decoder_layer.1} parent=115 // pred_region
          %889 = dma.done [#allocation9], 16
        $region132: #{decoder_layer.1} parent=115 // pred_fallthru
          _
        // Predicated region
        $region133: #{decoder_layer.1} parent=115 // pred_check
          %p890 = pneg %p295
        $region134: #{decoder_layer.1} parent=115 // pred_check_branch
          %892 = sbr.rel (%p890) target = $region136
        $region135: #{decoder_layer.1} parent=115 // pred_region
          %894 = dma.done [#allocation9], 256
        $region136: #{decoder_layer.1} parent=115 // pred_fallthru
          _
        // Predicated region
        $region137: #{decoder_layer.1} parent=115 // pred_check
          %p895 = pneg %p316
        $region138: #{decoder_layer.1} parent=115 // pred_check_branch
          %897 = sbr.rel (%p895) target = $region140
        $region139: #{decoder_layer.1} parent=115 // pred_region
          %899 = dma.done [#allocation12], 16
        $region140: #{decoder_layer.1} parent=115 // pred_fallthru
          _
        // Predicated region
        $region141: #{decoder_layer.1} parent=115 // pred_check
          %p900 = pneg %p337
        $region142: #{decoder_layer.1} parent=115 // pred_check_branch
          %902 = sbr.rel (%p900) target = $region144
        $region143: #{decoder_layer.1} parent=115 // pred_region
          %904 = dma.done [#allocation12], 256
        $region144: #{decoder_layer.1} parent=115 // pred_fallthru
          _
        // Predicated region
        $region145: #{decoder_layer.1} parent=115 // pred_check
          %p905 = pneg %p358
        $region146: #{decoder_layer.1} parent=115 // pred_check_branch
          %907 = sbr.rel (%p905) target = $region148
        $region147: #{decoder_layer.1} parent=115 // pred_region
          %909 = dma.done [#allocation15], 16
        $region148: #{decoder_layer.1} parent=115 // pred_fallthru
          _
        // Predicated region
        $region149: #{decoder_layer.1} parent=115 // pred_check
          %p910 = pneg %p379
        $region150: #{decoder_layer.1} parent=115 // pred_check_branch
          %912 = sbr.rel (%p910) target = $region152
        $region151: #{decoder_layer.1} parent=115 // pred_region
          %914 = dma.done [#allocation15], 256
        $region152: #{decoder_layer.1} parent=115 // pred_fallthru
          _
        // Predicated region
        $region153: #{decoder_layer.1} parent=115 // pred_check
          %p915 = pneg %p400
        $region154: #{decoder_layer.1} parent=115 // pred_check_branch
          %917 = sbr.rel (%p915) target = $region156
        $region155: #{decoder_layer.1} parent=115 // pred_region
          %919 = dma.done [#allocation18], 16
        $region156: #{decoder_layer.1} parent=115 // pred_fallthru
          _
        // Predicated region
        $region157: #{decoder_layer.1} parent=115 // pred_check
          %p920 = pneg %p421
        $region158: #{decoder_layer.1} parent=115 // pred_check_branch
          %922 = sbr.rel (%p920) target = $region160
        $region159: #{decoder_layer.1} parent=115 // pred_region
          %924 = dma.done [#allocation18], 16
        $region160: #{decoder_layer.1} parent=115 // pred_fallthru
          _
        // Predicated region
        $region161: #{decoder_layer.1} parent=115 // pred_check
          %p925 = pneg %p442
        $region162: #{decoder_layer.1} parent=115 // pred_check_branch
          %927 = sbr.rel (%p925) target = $region164
        $region163: #{decoder_layer.1} parent=115 // pred_region
          %929 = dma.done [#allocation21], 16
        $region164: #{decoder_layer.1} parent=115 // pred_fallthru
          _
        // Predicated region
        $region165: #{decoder_layer.1} parent=115 // pred_check
          %p930 = pneg %p463
        $region166: #{decoder_layer.1} parent=115 // pred_check_branch
          %932 = sbr.rel (%p930) target = $region168
        $region167: #{decoder_layer.1} parent=115 // pred_region
          %934 = dma.done [#allocation21], 256
        $region168: #{decoder_layer.1} parent=115 // pred_fallthru
          _
        // Predicated region
        $region169: #{decoder_layer.1} parent=115 // pred_check
          %p935 = pneg %p484
        $region170: #{decoder_layer.1} parent=115 // pred_check_branch
          %937 = sbr.rel (%p935) target = $region172
        $region171: #{decoder_layer.1} parent=115 // pred_region
          %939 = dma.done [#allocation24], 16
        $region172: #{decoder_layer.1} parent=115 // pred_fallthru
          _
        // Predicated region
        $region173: #{decoder_layer.1} parent=115 // pred_check
          %p940 = pneg %p526
        $region174: #{decoder_layer.1} parent=115 // pred_check_branch
          %942 = sbr.rel (%p940) target = $region176
        $region175: #{decoder_layer.1} parent=115 // pred_region
          %944 = dma.done [#allocation24], 16
        $region176: #{decoder_layer.1} parent=115 // pred_fallthru
          _
        // Predicated region
        $region177: #{decoder_layer.1} parent=115 // pred_check
          %p945 = pneg %p568
        $region178: #{decoder_layer.1} parent=115 // pred_check_branch
          %947 = sbr.rel (%p945) target = $region180
        $region179: #{decoder_layer.1} parent=115 // pred_region
          %949 = dma.done [#allocation27], 16
        $region180: #{decoder_layer.1} parent=115 // pred_fallthru
          _
        %p950 = scmp.lt.s32.totalorder %s49, 1
        %s951 = scalar_select %p950, %s49, 1
        %s952 = smul.addr %s951, 8
        %s953 = scalar_lea.vmem %s0, %s952
        %p954 = pneg %p70
        %p955 = pneg %p67
        %p956 = scmp.lt.s32.totalorder %s49, 1
        %s957 = scalar_select %p956, %s49, 1
        %s958 = smul.addr %s957, 8
        %s959 = scalar_lea.vmem %s1, %s958
        %p960 = pneg %p96
        %p961 = pneg %p93
        %p962 = scmp.lt.s32.totalorder %s49, 1
        %s963 = scalar_select %p962, %s49, 1
        %s964 = smul.addr %s963, 8
        %s965 = scalar_lea.vmem %s2, %s964
        %p966 = pneg %p122
        %p967 = pneg %p119
        %s968 = sand.u32 %s135, 1
        %s969 = scalar_lea.sflag [#allocation3], %s968
        %s970 = sand.u32 %s135, 1
        %s971 = smul.addr %s970, 8
        %s972 = scalar_lea.vmem [#allocation2], %s971
        %p973 = pneg %p148
        %p974 = pneg %p145
        %p975 = pneg %p169
        %p976 = pneg %p166
        %p977 = pneg %p190
        %p978 = pneg %p187
        %p979 = pneg %p211
        %p980 = pneg %p208
        %p981 = pneg %p232
        %p982 = pneg %p229
        %p983 = pneg %p253
        %p984 = pneg %p250
        %p985 = pneg %p274
        %p986 = pneg %p271
        %p987 = pneg %p295
        %p988 = pneg %p292
        %p989 = pneg %p316
        %p990 = pneg %p313
        %p991 = pneg %p337
        %p992 = pneg %p334
        %p993 = pneg %p358
        %p994 = pneg %p355
        %p995 = pneg %p379
        %p996 = pneg %p376
        %p997 = pneg %p400
        %p998 = pneg %p397
        %p999 = pneg %p421
        %p1000 = pneg %p418
        %p1001 = pneg %p442
        %p1002 = pneg %p439
        %p1003 = pneg %p463
        %p1004 = pneg %p460
        %p1005 = pneg %p484
        %p1006 = pneg %p481
        %p1007 = pneg %p505
        %p1008 = pneg %p502
        %p1009 = pneg %p526
        %p1010 = pneg %p523
        %p1011 = pneg %p547
        %p1012 = pneg %p544
        %p1013 = pneg %p568
        %p1014 = pneg %p565
        %p1015 = pneg %p594
        %p1016 = pneg %p591
        %s1017 = sand.u32 %s581, 1
        %s1018 = scalar_lea.sflag [#allocation4], %s1017
        %s1019 = sand.u32 %s581, 1
        %s1020 = smul.addr %s1019, 8
        %s1021 = scalar_lea.vmem [#allocation28], %s1020
        %p1022 = scmp.lt.s32.totalorder %s49, 1
        %s1023 = scalar_select %p1022, %s49, 1
        %s1024 = smul.addr %s1023, 8
        %s1025 = scalar_lea.vmem %s0, %s1024
        %p1026 = scmp.lt.s32.totalorder %s49, 1
        %s1027 = scalar_select %p1026, %s49, 1
        %s1028 = smul.addr %s1027, 8
        %s1029 = scalar_lea.vmem %s1, %s1028
        %p1030 = scmp.lt.s32.totalorder %s49, 1
        %s1031 = scalar_select %p1030, %s49, 1
        %s1032 = smul.addr %s1031, 8
        %s1033 = scalar_lea.vmem %s2, %s1032
        %v1035 = vld [vmem:[%s1033] sm:$0xff]
        %v1036 = vld [vmem:[%s869] sm:$0xff]
        %v1037 = vld [vmem:[%s1025] sm:$0xff]
        %v1038 = vld [vmem:[%s1029] sm:$0xff]
        %v1039 = vpack.c.bf16 %v1035, %v1035
        %v1040 = vpack.c.bf16 %v1036, %v1036
        %v1041 = vld [vmem:[%s4] sm:$0xf]
        %v1042 = vld [vmem:[%s4 + $0x4] sm:$0xf]
        %v1043 = vld [vmem:[%s4 + $0x8] sm:$0xf]
        %v1044 = vld [vmem:[%s4 + $0xc] sm:$0xf]
        %v1045 = vld [vmem:[%s5] sm:$0x1]
        %v1047 = vperm.slane %v1045, 0
        %v1053 = vunpack.c.l.b16 %v1041
        %v1054 = vunpack.c.l.b16 %v1042
        %v1055 = vunpack.c.l.b16 %v1043
        %v1056 = vunpack.c.l.b16 %v1044
        %v1057 = vpack.c.b16 %v1054, %v1053
        %v1058 = vpack.c.b16 %v1056, %v1055
        %vm1061 = vcmask 261120
        %v1063 = vsel %vm1061, %v1039, 0
        %1065 = vmatpush.bf16.msra.mxu0 0
        %1066 = vmatpush.bf16.msra.mxu0 0
        %1067 = vmatpush.bf16.msra.mxu0 0
        %1068 = vmatpush.bf16.msra.mxu0 0
        %1069 = vmatpush.bf16.msra.mxu0 0
        %1070 = vmatpush.bf16.msra.mxu0 0
        %1071 = vmatpush.bf16.msra.mxu0 %v1058
        %1072 = vmatpush.bf16.msra.mxu0 %v1057
        %1073 = vmatmul.bf16.gmra.mxu0 %v1063
        %v1074 = vpop.f32.mrf.mxu0
        %v1075 = vadd.f32 %v1047, %v1074
        %v1076 = vpop.f32.mrf.mxu0
        %1077 = vdwg.mxu0
        %v1078 = vld [vmem:[#allocation5] sm:$0xf]
        %v1079 = vld [vmem:[#allocation5 + $0x4] sm:$0xf]
        %v1080 = vld [vmem:[#allocation5 + $0x8] sm:$0xf]
        %v1081 = vld [vmem:[#allocation5 + $0xc] sm:$0xf]
        %v1082 = vpack.c.bf16 %v1075, %v1075
        %v1084 = vunpack.c.l.b16 %v1082
        %v1085 = vpack.c.b16 %v1084, %v1084
        %1086 = vrot.lane.b32.xlu0 %v1085, 96
        %v1087 = vpop.permute.xlu0 %1086
        %vm1088 = vcmask 64512
        %v1090 = vsel %vm1088, %v1082, 0
        %v1093 = vsel %vm1088, %v1087, 0
        %1095 = vmatpush.bf16.xpose.msra.mxu0 0
        %1096 = vmatpush.bf16.xpose.msra.mxu0 0
        %1097 = vmatpush.bf16.xpose.msra.mxu0 0
        %1098 = vmatpush.bf16.xpose.msra.mxu0 0
        %1099 = vmatpush.bf16.xpose.msra.mxu0 0
        %1100 = vmatpush.bf16.xpose.msra.mxu0 0
        %1101 = vmatpush.bf16.xpose.msra.mxu0 0
        %1102 = vmatpush.bf16.xpose.msra.mxu0 %v1093
        %1103 = vmatmul.bf16.gmra.mxu0 %v1090
        %v1104 = vpop.f32.mrf.mxu0
        %v1105 = vadd.f32 %v1037, %v1104
        %v1106 = vpop.f32.mrf.mxu0
        %1107 = vdwg.mxu0
        %v1108 = vsel %vm1088, %v1105, -inf
        %1109 = vmax.xlane.f32.xlu0 %v1108
        %v1110 = vpop.xlane.xlu0 %1109
        %v1111 = vsub.f32 %v1105, %v1110
        %v1112 = vmul.f32 %v1111, 1.442695
        %v1113 = vpow.pop %v1112
        %v1114 = vsel %vm1088, %v1113, 0.0
        %1115 = vadd.xlane.f32.xlu0 %v1114
        %v1116 = vpop.xlane.xlu0 %1115
        %v1117 = vrcp.pop %v1116
        %v1118 = vmul.f32 %v1116, %v1117
        %v1119 = vsub.f32 1.0, %v1118
        %v1120 = vmul.f32 %v1117, %v1119
        %v1121 = vadd.f32 %v1117, %v1120
        %vm1122 = vweird.f32 %v1116
        %vm1123 = vweird.f32 %v1117
        %vm1124 = vmor %vm1122, %vm1123
        %v1125 = vsel %vm1124, %v1117, %v1121
        %v1126 = vand.u32 2147483647, %v1116
        %vm1127 = vcmp.eq.f32.partialorder %v1126, 8.507059e+37
        %v1128 = vand.u32 %v1116, 2147483648
        %v1129 = vor.u32 1.1754944e-38, %v1128
        %v1130 = vsel %vm1127, %v1129, %v1125
        %v1131 = vmul.f32 %v1113, %v1130
        %v1132 = vpack.c.bf16 %v1131, %v1131
        %1133 = vrot.lane.b32.xlu0 %v1085, 64
        %v1134 = vpop.permute.xlu0 %1133
        %v1136 = vsel %vm1088, %v1132, 0
        %vm1138 = vcmask 1043456
        %v1140 = vsel %vm1138, %v1134, 0
        %1142 = vmatpush.bf16.msra.mxu0 0
        %1143 = vmatpush.bf16.msra.mxu0 0
        %1144 = vmatpush.bf16.msra.mxu0 0
        %1145 = vmatpush.bf16.msra.mxu0 0
        %1146 = vmatpush.bf16.msra.mxu0 0
        %1147 = vmatpush.bf16.msra.mxu0 0
        %1148 = vmatpush.bf16.msra.mxu0 0
        %1149 = vmatpush.bf16.msra.mxu0 %v1140
        %1150 = vmatmul.bf16.gmra.mxu0 %v1136
        %v1151 = vpop.f32.mrf.mxu0
        %v1152 = vadd.f32 0.0, %v1151
        %v1153 = vpop.f32.mrf.mxu0
        %1154 = vdwg.mxu0
        %v1155 = vpack.c.bf16 %v1152, %v1152
        %1156 = vrot.lane.b32.xlu0 %v1085, 120
        %v1157 = vpop.permute.xlu0 %1156
        %1158 = vrot.lane.b32.xlu0 %v1085, 88
        %v1159 = vpop.permute.xlu0 %1158
        %v1161 = vsel %vm1088, %v1157, 0
        %v1164 = vsel %vm1088, %v1159, 0
        %1166 = vmatpush.bf16.xpose.msra.mxu0 0
        %1167 = vmatpush.bf16.xpose.msra.mxu0 0
        %1168 = vmatpush.bf16.xpose.msra.mxu0 0
        %1169 = vmatpush.bf16.xpose.msra.mxu0 0
        %1170 = vmatpush.bf16.xpose.msra.mxu0 0
        %1171 = vmatpush.bf16.xpose.msra.mxu0 0
        %1172 = vmatpush.bf16.xpose.msra.mxu0 0
        %1173 = vmatpush.bf16.xpose.msra.mxu0 %v1164
        %1174 = vmatmul.bf16.gmra.mxu0 %v1161
        %v1175 = vpop.f32.mrf.mxu0
        %v1176 = vadd.f32 %v1037, %v1175
        %v1177 = vpop.f32.mrf.mxu0
        %1178 = vdwg.mxu0
        %v1179 = vsel %vm1088, %v1176, -inf
        %1180 = vmax.xlane.f32.xlu0 %v1179
        %v1181 = vpop.xlane.xlu0 %1180
        %v1182 = vsub.f32 %v1176, %v1181
        %v1183 = vmul.f32 %v1182, 1.442695
        %v1184 = vpow.pop %v1183
        %v1185 = vsel %vm1088, %v1184, 0.0
        %1186 = vadd.xlane.f32.xlu0 %v1185
        %v1187 = vpop.xlane.xlu0 %1186
        %v1188 = vrcp.pop %v1187
        %v1189 = vmul.f32 %v1187, %v1188
        %v1190 = vsub.f32 1.0, %v1189
        %v1191 = vmul.f32 %v1188, %v1190
        %v1192 = vadd.f32 %v1188, %v1191
        %vm1193 = vweird.f32 %v1187
        %vm1194 = vweird.f32 %v1188
        %vm1195 = vmor %vm1193, %vm1194
        %v1196 = vsel %vm1195, %v1188, %v1192
        %v1197 = vand.u32 2147483647, %v1187
        %vm1198 = vcmp.eq.f32.partialorder %v1197, 8.507059e+37
        %v1199 = vand.u32 %v1187, 2147483648
        %v1200 = vor.u32 1.1754944e-38, %v1199
        %v1201 = vsel %vm1198, %v1200, %v1196
        %v1202 = vmul.f32 %v1184, %v1201
        %v1203 = vpack.c.bf16 %v1202, %v1202
        %1204 = vrot.lane.b32.xlu0 %v1085, 56
        %v1205 = vpop.permute.xlu0 %1204
        %v1207 = vsel %vm1088, %v1203, 0
        %v1210 = vsel %vm1138, %v1205, 0
        %1212 = vmatpush.bf16.msra.mxu0 0
        %1213 = vmatpush.bf16.msra.mxu0 0
        %1214 = vmatpush.bf16.msra.mxu0 0
        %1215 = vmatpush.bf16.msra.mxu0 0
        %1216 = vmatpush.bf16.msra.mxu0 0
        %1217 = vmatpush.bf16.msra.mxu0 0
        %1218 = vmatpush.bf16.msra.mxu0 0
        %1219 = vmatpush.bf16.msra.mxu0 %v1210
        %1220 = vmatmul.bf16.gmra.mxu0 %v1207
        %v1221 = vpop.f32.mrf.mxu0
        %v1222 = vadd.f32 0.0, %v1221
        %v1223 = vpop.f32.mrf.mxu0
        %1224 = vdwg.mxu0
        %v1225 = vpack.c.bf16 %v1222, %v1222
        %v1227 = vsel %vm1088, %v1225, 0
        %v1230 = vsel %vm1138, %v1079, 0
        %1232 = vmatpush.bf16.msra.mxu0 0
        %1233 = vmatpush.bf16.msra.mxu0 0
        %1234 = vmatpush.bf16.msra.mxu0 0
        %1235 = vmatpush.bf16.msra.mxu0 0
        %1236 = vmatpush.bf16.msra.mxu0 0
        %1237 = vmatpush.bf16.msra.mxu0 0
        %1238 = vmatpush.bf16.msra.mxu0 0
        %1239 = vmatpush.bf16.msra.mxu0 %v1230
        %1240 = vmatmul.bf16.gmra.mxu0 %v1227
        %v1241 = vpop.f32.mrf.mxu0
        %v1242 = vadd.f32 0.0, %v1241
        %v1243 = vpop.f32.mrf.mxu0
        %1244 = vdwg.mxu0
        %v1246 = vsel %vm1088, %v1155, 0
        %v1249 = vsel %vm1138, %v1078, 0
        %1251 = vmatpush.bf16.msra.mxu0 0
        %1252 = vmatpush.bf16.msra.mxu0 0
        %1253 = vmatpush.bf16.msra.mxu0 0
        %1254 = vmatpush.bf16.msra.mxu0 0
        %1255 = vmatpush.bf16.msra.mxu0 0
        %1256 = vmatpush.bf16.msra.mxu0 0
        %1257 = vmatpush.bf16.msra.mxu0 0
        %1258 = vmatpush.bf16.msra.mxu0 %v1249
        %1259 = vmatmul.bf16.gmra.mxu0 %v1246
        %v1260 = vpop.f32.mrf.mxu0
        %v1261 = vadd.f32 %v1242, %v1260
        %v1262 = vpop.f32.mrf.mxu0
        %1263 = vdwg.mxu0
        %1264 = vrot.lane.b32.xlu0 %v1085, 112
        %v1265 = vpop.permute.xlu0 %1264
        %1266 = vrot.lane.b32.xlu0 %v1085, 80
        %v1267 = vpop.permute.xlu0 %1266
        %v1269 = vsel %vm1088, %v1265, 0
        %v1272 = vsel %vm1088, %v1267, 0
        %1274 = vmatpush.bf16.xpose.msra.mxu0 0
        %1275 = vmatpush.bf16.xpose.msra.mxu0 0
        %1276 = vmatpush.bf16.xpose.msra.mxu0 0
        %1277 = vmatpush.bf16.xpose.msra.mxu0 0
        %1278 = vmatpush.bf16.xpose.msra.mxu0 0
        %1279 = vmatpush.bf16.xpose.msra.mxu0 0
        %1280 = vmatpush.bf16.xpose.msra.mxu0 0
        %1281 = vmatpush.bf16.xpose.msra.mxu0 %v1272
        %1282 = vmatmul.bf16.gmra.mxu0 %v1269
        %v1283 = vpop.f32.mrf.mxu0
        %v1284 = vadd.f32 %v1037, %v1283
        %v1285 = vpop.f32.mrf.mxu0
        %1286 = vdwg.mxu0
        %v1287 = vsel %vm1088, %v1284, -inf
        %1288 = vmax.xlane.f32.xlu0 %v1287
        %v1289 = vpop.xlane.xlu0 %1288
        %v1290 = vsub.f32 %v1284, %v1289
        %v1291 = vmul.f32 %v1290, 1.442695
        %v1292 = vpow.pop %v1291
        %v1293 = vsel %vm1088, %v1292, 0.0
        %1294 = vadd.xlane.f32.xlu0 %v1293
        %v1295 = vpop.xlane.xlu0 %1294
        %v1296 = vrcp.pop %v1295
        %v1297 = vmul.f32 %v1295, %v1296
        %v1298 = vsub.f32 1.0, %v1297
        %v1299 = vmul.f32 %v1296, %v1298
        %v1300 = vadd.f32 %v1296, %v1299
        %vm1301 = vweird.f32 %v1295
        %vm1302 = vweird.f32 %v1296
        %vm1303 = vmor %vm1301, %vm1302
        %v1304 = vsel %vm1303, %v1296, %v1300
        %v1305 = vand.u32 2147483647, %v1295
        %vm1306 = vcmp.eq.f32.partialorder %v1305, 8.507059e+37
        %v1307 = vand.u32 %v1295, 2147483648
        %v1308 = vor.u32 1.1754944e-38, %v1307
        %v1309 = vsel %vm1306, %v1308, %v1304
        %v1310 = vmul.f32 %v1292, %v1309
        %v1311 = vpack.c.bf16 %v1310, %v1310
        %1312 = vrot.lane.b32.xlu0 %v1085, 48
        %v1313 = vpop.permute.xlu0 %1312
        %v1315 = vsel %vm1088, %v1311, 0
        %v1318 = vsel %vm1138, %v1313, 0
        %1320 = vmatpush.bf16.msra.mxu0 0
        %1321 = vmatpush.bf16.msra.mxu0 0
        %1322 = vmatpush.bf16.msra.mxu0 0
        %1323 = vmatpush.bf16.msra.mxu0 0
        %1324 = vmatpush.bf16.msra.mxu0 0
        %1325 = vmatpush.bf16.msra.mxu0 0
        %1326 = vmatpush.bf16.msra.mxu0 0
        %1327 = vmatpush.bf16.msra.mxu0 %v1318
        %1328 = vmatmul.bf16.gmra.mxu0 %v1315
        %v1329 = vpop.f32.mrf.mxu0
        %v1330 = vadd.f32 0.0, %v1329
        %v1331 = vpop.f32.mrf.mxu0
        %1332 = vdwg.mxu0
        %v1333 = vpack.c.bf16 %v1330, %v1330
        %v1335 = vsel %vm1088, %v1333, 0
        %v1338 = vsel %vm1138, %v1080, 0
        %1340 = vmatpush.bf16.msra.mxu0 0
        %1341 = vmatpush.bf16.msra.mxu0 0
        %1342 = vmatpush.bf16.msra.mxu0 0
        %1343 = vmatpush.bf16.msra.mxu0 0
        %1344 = vmatpush.bf16.msra.mxu0 0
        %1345 = vmatpush.bf16.msra.mxu0 0
        %1346 = vmatpush.bf16.msra.mxu0 0
        %1347 = vmatpush.bf16.msra.mxu0 %v1338
        %1348 = vmatmul.bf16.gmra.mxu0 %v1335
        %v1349 = vpop.f32.mrf.mxu0
        %v1350 = vadd.f32 0.0, %v1349
        %v1351 = vpop.f32.mrf.mxu0
        %1352 = vdwg.mxu0
        %v1353 = vadd.f32 %v1261, %v1350
        %1354 = vrot.lane.b32.xlu0 %v1085, 104
        %v1355 = vpop.permute.xlu0 %1354
        %1356 = vrot.lane.b32.xlu0 %v1085, 72
        %v1357 = vpop.permute.xlu0 %1356
        %v1359 = vsel %vm1088, %v1355, 0
        %v1362 = vsel %vm1088, %v1357, 0
        %1364 = vmatpush.bf16.xpose.msra.mxu0 0
        %1365 = vmatpush.bf16.xpose.msra.mxu0 0
        %1366 = vmatpush.bf16.xpose.msra.mxu0 0
        %1367 = vmatpush.bf16.xpose.msra.mxu0 0
        %1368 = vmatpush.bf16.xpose.msra.mxu0 0
        %1369 = vmatpush.bf16.xpose.msra.mxu0 0
        %1370 = vmatpush.bf16.xpose.msra.mxu0 0
        %1371 = vmatpush.bf16.xpose.msra.mxu0 %v1362
        %1372 = vmatmul.bf16.gmra.mxu0 %v1359
        %v1373 = vpop.f32.mrf.mxu0
        %v1374 = vadd.f32 %v1037, %v1373
        %v1375 = vpop.f32.mrf.mxu0
        %1376 = vdwg.mxu0
        %v1377 = vsel %vm1088, %v1374, -inf
        %1378 = vmax.xlane.f32.xlu0 %v1377
        %v1379 = vpop.xlane.xlu0 %1378
        %v1380 = vsub.f32 %v1374, %v1379
        %v1381 = vmul.f32 %v1380, 1.442695
        %v1382 = vpow.pop %v1381
        %v1383 = vsel %vm1088, %v1382, 0.0
        %1384 = vadd.xlane.f32.xlu0 %v1383
        %v1385 = vpop.xlane.xlu0 %1384
        %v1386 = vrcp.pop %v1385
        %v1387 = vmul.f32 %v1385, %v1386
        %v1388 = vsub.f32 1.0, %v1387
        %v1389 = vmul.f32 %v1386, %v1388
        %v1390 = vadd.f32 %v1386, %v1389
        %vm1391 = vweird.f32 %v1385
        %vm1392 = vweird.f32 %v1386
        %vm1393 = vmor %vm1391, %vm1392
        %v1394 = vsel %vm1393, %v1386, %v1390
        %v1395 = vand.u32 2147483647, %v1385
        %vm1396 = vcmp.eq.f32.partialorder %v1395, 8.507059e+37
        %v1397 = vand.u32 %v1385, 2147483648
        %v1398 = vor.u32 1.1754944e-38, %v1397
        %v1399 = vsel %vm1396, %v1398, %v1394
        %v1400 = vmul.f32 %v1382, %v1399
        %v1401 = vpack.c.bf16 %v1400, %v1400
        %1402 = vrot.lane.b32.xlu0 %v1085, 40
        %v1403 = vpop.permute.xlu0 %1402
        %v1405 = vsel %vm1088, %v1401, 0
        %v1408 = vsel %vm1138, %v1403, 0
        %1410 = vmatpush.bf16.msra.mxu0 0
        %1411 = vmatpush.bf16.msra.mxu0 0
        %1412 = vmatpush.bf16.msra.mxu0 0
        %1413 = vmatpush.bf16.msra.mxu0 0
        %1414 = vmatpush.bf16.msra.mxu0 0
        %1415 = vmatpush.bf16.msra.mxu0 0
        %1416 = vmatpush.bf16.msra.mxu0 0
        %1417 = vmatpush.bf16.msra.mxu0 %v1408
        %1418 = vmatmul.bf16.gmra.mxu0 %v1405
        %v1419 = vpop.f32.mrf.mxu0
        %v1420 = vadd.f32 0.0, %v1419
        %v1421 = vpop.f32.mrf.mxu0
        %1422 = vdwg.mxu0
        %v1423 = vpack.c.bf16 %v1420, %v1420
        %v1425 = vsel %vm1088, %v1423, 0
        %v1428 = vsel %vm1138, %v1081, 0
        %1430 = vmatpush.bf16.msra.mxu0 0
        %1431 = vmatpush.bf16.msra.mxu0 0
        %1432 = vmatpush.bf16.msra.mxu0 0
        %1433 = vmatpush.bf16.msra.mxu0 0
        %1434 = vmatpush.bf16.msra.mxu0 0
        %1435 = vmatpush.bf16.msra.mxu0 0
        %1436 = vmatpush.bf16.msra.mxu0 0
        %1437 = vmatpush.bf16.msra.mxu0 %v1428
        %1438 = vmatmul.bf16.gmra.mxu0 %v1425
        %v1439 = vpop.f32.mrf.mxu0
        %v1440 = vadd.f32 0.0, %v1439
        %v1441 = vpop.f32.mrf.mxu0
        %1442 = vdwg.mxu0
        %v1443 = vadd.f32 %v1353, %v1440
        %v1444 = vld [vmem:[%s7] sm:$0x1]
        %v1446 = vperm.slane %v1444, 0
        %v1448 = vadd.f32 %v1443, %v1446
        %v1449 = vadd.f32 %v1448, %v1035
        %v1450 = vld [vmem:[#allocation7] sm:$0x1]
        %v1451 = vld [vmem:[#allocation8] sm:$0x1]
        %v1452 = vsel %vm1061, %v1449, 0.0
        %1453 = vadd.xlane.f32.xlu0 %v1452
        %v1454 = vpop.xlane.xlu0 %1453
        %v1455 = vrcp.pop 32.0
        %v1456 = vmul.f32 32.0, %v1455
        %v1457 = vsub.f32 1.0, %v1456
        %v1458 = vmul.f32 %v1455, %v1457
        %v1459 = vadd.f32 %v1455, %v1458
        %vm1460 = vweird.f32 %v1455
        %v1461 = vsel %vm1460, %v1455, %v1459
        %v1462 = vmul.f32 %v1454, %v1461
        %v1463 = vsub.f32 %v1449, %v1462
        %v1464 = vmul.f32 %v1463, %v1463
        %v1465 = vsel %vm1061, %v1464, 0.0
        %1466 = vadd.xlane.f32.xlu0 %v1465
        %v1467 = vpop.xlane.xlu0 %1466
        %v1468 = vmul.f32 %v1467, %v1461
        %v1469 = vadd.f32 %v1468, 1e-12
        %v1470 = vrsqrt.pop %v1469
        %v1471 = vmul.f32 %v1470, %v1469
        %v1472 = vmul.f32 %v1471, %v1470
        %v1473 = vmul.f32 0.5, %v1472
        %v1474 = vsub.f32 1.5, %v1473
        %v1475 = vmul.f32 %v1470, %v1474
        %vm1476 = vweird.f32 %v1469
        %vm1477 = vweird.f32 %v1470
        %vm1478 = vmor %vm1476, %vm1477
        %v1479 = vsel %vm1478, %v1470, %v1475
        %v1480 = vmul.f32 %v1463, %v1479
        %v1482 = vperm.slane %v1450, 0
        %v1484 = vmul.f32 %v1482, %v1480
        %v1486 = vperm.slane %v1451, 0
        %v1488 = vadd.f32 %v1484, %v1486
        %v1489 = vpack.c.bf16 %v1488, %v1488
        %v1490 = vld [vmem:[#allocation10] sm:$0xf]
        %v1491 = vld [vmem:[#allocation10 + $0x4] sm:$0xf]
        %v1492 = vld [vmem:[#allocation10 + $0x8] sm:$0xf]
        %v1493 = vld [vmem:[#allocation10 + $0xc] sm:$0xf]
        %v1494 = vld [vmem:[#allocation11] sm:$0x1]
        %v1496 = vperm.slane %v1494, 0
        %v1502 = vunpack.c.l.b16 %v1490
        %v1503 = vunpack.c.l.b16 %v1491
        %v1504 = vunpack.c.l.b16 %v1492
        %v1505 = vunpack.c.l.b16 %v1493
        %v1506 = vpack.c.b16 %v1503, %v1502
        %v1507 = vpack.c.b16 %v1505, %v1504
        %v1511 = vsel %vm1061, %v1489, 0
        %1513 = vmatpush.bf16.msra.mxu0 0
        %1514 = vmatpush.bf16.msra.mxu0 0
        %1515 = vmatpush.bf16.msra.mxu0 0
        %1516 = vmatpush.bf16.msra.mxu0 0
        %1517 = vmatpush.bf16.msra.mxu0 0
        %1518 = vmatpush.bf16.msra.mxu0 0
        %1519 = vmatpush.bf16.msra.mxu0 %v1507
        %1520 = vmatpush.bf16.msra.mxu0 %v1506
        %1521 = vmatmul.bf16.gmra.mxu0 %v1511
        %v1522 = vpop.f32.mrf.mxu0
        %v1523 = vadd.f32 %v1496, %v1522
        %v1524 = vpop.f32.mrf.mxu0
        %1525 = vdwg.mxu0
        %v1526 = vld [vmem:[#allocation13] sm:$0xf]
        %v1527 = vld [vmem:[#allocation13 + $0x4] sm:$0xf]
        %v1528 = vld [vmem:[#allocation13 + $0x8] sm:$0xf]
        %v1529 = vld [vmem:[#allocation13 + $0xc] sm:$0xf]
        %v1530 = vld [vmem:[#allocation14] sm:$0x1]
        %v1532 = vperm.slane %v1530, 0
        %v1538 = vunpack.c.l.b16 %v1526
        %v1539 = vunpack.c.l.b16 %v1527
        %v1540 = vunpack.c.l.b16 %v1528
        %v1541 = vunpack.c.l.b16 %v1529
        %v1542 = vpack.c.b16 %v1539, %v1538
        %v1543 = vpack.c.b16 %v1541, %v1540
        %v1547 = vsel %vm1061, %v1040, 0
        %1549 = vmatpush.bf16.msra.mxu0 0
        %1550 = vmatpush.bf16.msra.mxu0 0
        %1551 = vmatpush.bf16.msra.mxu0 0
        %1552 = vmatpush.bf16.msra.mxu0 0
        %1553 = vmatpush.bf16.msra.mxu0 0
        %1554 = vmatpush.bf16.msra.mxu0 0
        %1555 = vmatpush.bf16.msra.mxu0 %v1543
        %1556 = vmatpush.bf16.msra.mxu0 %v1542
        %1557 = vmatmul.bf16.gmra.mxu0 %v1547
        %v1558 = vpop.f32.mrf.mxu0
        %v1559 = vadd.f32 %v1532, %v1558
        %v1560 = vpop.f32.mrf.mxu0
        %1561 = vdwg.mxu0
        %v1562 = vld [vmem:[#allocation16] sm:$0xf]
        %v1563 = vld [vmem:[#allocation16 + $0x4] sm:$0xf]
        %v1564 = vld [vmem:[#allocation16 + $0x8] sm:$0xf]
        %v1565 = vld [vmem:[#allocation16 + $0xc] sm:$0xf]
        %v1566 = vpack.c.bf16 %v1523, %v1523
        %v1567 = vpack.c.bf16 %v1559, %v1559
        %v1569 = vsel %vm1088, %v1566, 0
        %v1572 = vsel %vm1088, %v1567, 0
        %1574 = vmatpush.bf16.xpose.msra.mxu0 0
        %1575 = vmatpush.bf16.xpose.msra.mxu0 0
        %1576 = vmatpush.bf16.xpose.msra.mxu0 0
        %1577 = vmatpush.bf16.xpose.msra.mxu0 0
        %1578 = vmatpush.bf16.xpose.msra.mxu0 0
        %1579 = vmatpush.bf16.xpose.msra.mxu0 0
        %1580 = vmatpush.bf16.xpose.msra.mxu0 0
        %1581 = vmatpush.bf16.xpose.msra.mxu0 %v1572
        %1582 = vmatmul.bf16.gmra.mxu0 %v1569
        %v1583 = vpop.f32.mrf.mxu0
        %v1584 = vadd.f32 %v1038, %v1583
        %v1585 = vpop.f32.mrf.mxu0
        %1586 = vdwg.mxu0
        %v1587 = vsel %vm1088, %v1584, -inf
        %1588 = vmax.xlane.f32.xlu0 %v1587
        %v1589 = vpop.xlane.xlu0 %1588
        %v1590 = vsub.f32 %v1584, %v1589
        %v1591 = vmul.f32 %v1590, 1.442695
        %v1592 = vpow.pop %v1591
        %v1593 = vsel %vm1088, %v1592, 0.0
        %1594 = vadd.xlane.f32.xlu0 %v1593
        %v1595 = vpop.xlane.xlu0 %1594
        %v1596 = vrcp.pop %v1595
        %v1597 = vmul.f32 %v1595, %v1596
        %v1598 = vsub.f32 1.0, %v1597
        %v1599 = vmul.f32 %v1596, %v1598
        %v1600 = vadd.f32 %v1596, %v1599
        %vm1601 = vweird.f32 %v1595
        %vm1602 = vweird.f32 %v1596
        %vm1603 = vmor %vm1601, %vm1602
        %v1604 = vsel %vm1603, %v1596, %v1600
        %v1605 = vand.u32 2147483647, %v1595
        %vm1606 = vcmp.eq.f32.partialorder %v1605, 8.507059e+37
        %v1607 = vand.u32 %v1595, 2147483648
        %v1608 = vor.u32 1.1754944e-38, %v1607
        %v1609 = vsel %vm1606, %v1608, %v1604
        %v1610 = vmul.f32 %v1592, %v1609
        %v1611 = vpack.c.bf16 %v1610, %v1610
        %v1613 = vunpack.c.l.b16 %v1567
        %v1614 = vpack.c.b16 %v1613, %v1613
        %1615 = vrot.lane.b32.xlu0 %v1614, 96
        %v1616 = vpop.permute.xlu0 %1615
        %v1618 = vsel %vm1088, %v1611, 0
        %v1621 = vsel %vm1138, %v1616, 0
        %1623 = vmatpush.bf16.msra.mxu0 0
        %1624 = vmatpush.bf16.msra.mxu0 0
        %1625 = vmatpush.bf16.msra.mxu0 0
        %1626 = vmatpush.bf16.msra.mxu0 0
        %1627 = vmatpush.bf16.msra.mxu0 0
        %1628 = vmatpush.bf16.msra.mxu0 0
        %1629 = vmatpush.bf16.msra.mxu0 0
        %1630 = vmatpush.bf16.msra.mxu0 %v1621
        %1631 = vmatmul.bf16.gmra.mxu0 %v1618
        %v1632 = vpop.f32.mrf.mxu0
        %v1633 = vadd.f32 0.0, %v1632
        %v1634 = vpop.f32.mrf.mxu0
        %1635 = vdwg.mxu0
        %v1636 = vpack.c.bf16 %v1633, %v1633
        %v1638 = vunpack.c.l.b16 %v1566
        %v1639 = vpack.c.b16 %v1638, %v1638
        %1640 = vrot.lane.b32.xlu0 %v1639, 120
        %v1641 = vpop.permute.xlu0 %1640
        %1642 = vrot.lane.b32.xlu0 %v1614, 120
        %v1643 = vpop.permute.xlu0 %1642
        %v1645 = vsel %vm1088, %v1641, 0
        %v1648 = vsel %vm1088, %v1643, 0
        %1650 = vmatpush.bf16.xpose.msra.mxu0 0
        %1651 = vmatpush.bf16.xpose.msra.mxu0 0
        %1652 = vmatpush.bf16.xpose.msra.mxu0 0
        %1653 = vmatpush.bf16.xpose.msra.mxu0 0
        %1654 = vmatpush.bf16.xpose.msra.mxu0 0
        %1655 = vmatpush.bf16.xpose.msra.mxu0 0
        %1656 = vmatpush.bf16.xpose.msra.mxu0 0
        %1657 = vmatpush.bf16.xpose.msra.mxu0 %v1648
        %1658 = vmatmul.bf16.gmra.mxu0 %v1645
        %v1659 = vpop.f32.mrf.mxu0
        %v1660 = vadd.f32 %v1038, %v1659
        %v1661 = vpop.f32.mrf.mxu0
        %1662 = vdwg.mxu0
        %v1663 = vsel %vm1088, %v1660, -inf
        %1664 = vmax.xlane.f32.xlu0 %v1663
        %v1665 = vpop.xlane.xlu0 %1664
        %v1666 = vsub.f32 %v1660, %v1665
        %v1667 = vmul.f32 %v1666, 1.442695
        %v1668 = vpow.pop %v1667
        %v1669 = vsel %vm1088, %v1668, 0.0
        %1670 = vadd.xlane.f32.xlu0 %v1669
        %v1671 = vpop.xlane.xlu0 %1670
        %v1672 = vrcp.pop %v1671
        %v1673 = vmul.f32 %v1671, %v1672
        %v1674 = vsub.f32 1.0, %v1673
        %v1675 = vmul.f32 %v1672, %v1674
        %v1676 = vadd.f32 %v1672, %v1675
        %vm1677 = vweird.f32 %v1671
        %vm1678 = vweird.f32 %v1672
        %vm1679 = vmor %vm1677, %vm1678
        %v1680 = vsel %vm1679, %v1672, %v1676
        %v1681 = vand.u32 2147483647, %v1671
        %vm1682 = vcmp.eq.f32.partialorder %v1681, 8.507059e+37
        %v1683 = vand.u32 %v1671, 2147483648
        %v1684 = vor.u32 1.1754944e-38, %v1683
        %v1685 = vsel %vm1682, %v1684, %v1680
        %v1686 = vmul.f32 %v1668, %v1685
        %v1687 = vpack.c.bf16 %v1686, %v1686
        %1688 = vrot.lane.b32.xlu0 %v1614, 88
        %v1689 = vpop.permute.xlu0 %1688
        %v1691 = vsel %vm1088, %v1687, 0
        %v1694 = vsel %vm1138, %v1689, 0
        %1696 = vmatpush.bf16.msra.mxu0 0
        %1697 = vmatpush.bf16.msra.mxu0 0
        %1698 = vmatpush.bf16.msra.mxu0 0
        %1699 = vmatpush.bf16.msra.mxu0 0
        %1700 = vmatpush.bf16.msra.mxu0 0
        %1701 = vmatpush.bf16.msra.mxu0 0
        %1702 = vmatpush.bf16.msra.mxu0 0
        %1703 = vmatpush.bf16.msra.mxu0 %v1694
        %1704 = vmatmul.bf16.gmra.mxu0 %v1691
        %v1705 = vpop.f32.mrf.mxu0
        %v1706 = vadd.f32 0.0, %v1705
        %v1707 = vpop.f32.mrf.mxu0
        %1708 = vdwg.mxu0
        %v1709 = vpack.c.bf16 %v1706, %v1706
        %v1711 = vsel %vm1088, %v1709, 0
        %v1714 = vsel %vm1138, %v1563, 0
        %1716 = vmatpush.bf16.msra.mxu0 0
        %1717 = vmatpush.bf16.msra.mxu0 0
        %1718 = vmatpush.bf16.msra.mxu0 0
        %1719 = vmatpush.bf16.msra.mxu0 0
        %1720 = vmatpush.bf16.msra.mxu0 0
        %1721 = vmatpush.bf16.msra.mxu0 0
        %1722 = vmatpush.bf16.msra.mxu0 0
        %1723 = vmatpush.bf16.msra.mxu0 %v1714
        %1724 = vmatmul.bf16.gmra.mxu0 %v1711
        %v1725 = vpop.f32.mrf.mxu0
        %v1726 = vadd.f32 0.0, %v1725
        %v1727 = vpop.f32.mrf.mxu0
        %1728 = vdwg.mxu0
        %v1730 = vsel %vm1088, %v1636, 0
        %v1733 = vsel %vm1138, %v1562, 0
        %1735 = vmatpush.bf16.msra.mxu0 0
        %1736 = vmatpush.bf16.msra.mxu0 0
        %1737 = vmatpush.bf16.msra.mxu0 0
        %1738 = vmatpush.bf16.msra.mxu0 0
        %1739 = vmatpush.bf16.msra.mxu0 0
        %1740 = vmatpush.bf16.msra.mxu0 0
        %1741 = vmatpush.bf16.msra.mxu0 0
        %1742 = vmatpush.bf16.msra.mxu0 %v1733
        %1743 = vmatmul.bf16.gmra.mxu0 %v1730
        %v1744 = vpop.f32.mrf.mxu0
        %v1745 = vadd.f32 %v1726, %v1744
        %v1746 = vpop.f32.mrf.mxu0
        %1747 = vdwg.mxu0
        %1748 = vrot.lane.b32.xlu0 %v1639, 112
        %v1749 = vpop.permute.xlu0 %1748
        %1750 = vrot.lane.b32.xlu0 %v1614, 112
        %v1751 = vpop.permute.xlu0 %1750
        %v1753 = vsel %vm1088, %v1749, 0
        %v1756 = vsel %vm1088, %v1751, 0
        %1758 = vmatpush.bf16.xpose.msra.mxu0 0
        %1759 = vmatpush.bf16.xpose.msra.mxu0 0
        %1760 = vmatpush.bf16.xpose.msra.mxu0 0
        %1761 = vmatpush.bf16.xpose.msra.mxu0 0
        %1762 = vmatpush.bf16.xpose.msra.mxu0 0
        %1763 = vmatpush.bf16.xpose.msra.mxu0 0
        %1764 = vmatpush.bf16.xpose.msra.mxu0 0
        %1765 = vmatpush.bf16.xpose.msra.mxu0 %v1756
        %1766 = vmatmul.bf16.gmra.mxu0 %v1753
        %v1767 = vpop.f32.mrf.mxu0
        %v1768 = vadd.f32 %v1038, %v1767
        %v1769 = vpop.f32.mrf.mxu0
        %1770 = vdwg.mxu0
        %v1771 = vsel %vm1088, %v1768, -inf
        %1772 = vmax.xlane.f32.xlu0 %v1771
        %v1773 = vpop.xlane.xlu0 %1772
        %v1774 = vsub.f32 %v1768, %v1773
        %v1775 = vmul.f32 %v1774, 1.442695
        %v1776 = vpow.pop %v1775
        %v1777 = vsel %vm1088, %v1776, 0.0
        %1778 = vadd.xlane.f32.xlu0 %v1777
        %v1779 = vpop.xlane.xlu0 %1778
        %v1780 = vrcp.pop %v1779
        %v1781 = vmul.f32 %v1779, %v1780
        %v1782 = vsub.f32 1.0, %v1781
        %v1783 = vmul.f32 %v1780, %v1782
        %v1784 = vadd.f32 %v1780, %v1783
        %vm1785 = vweird.f32 %v1779
        %vm1786 = vweird.f32 %v1780
        %vm1787 = vmor %vm1785, %vm1786
        %v1788 = vsel %vm1787, %v1780, %v1784
        %v1789 = vand.u32 2147483647, %v1779
        %vm1790 = vcmp.eq.f32.partialorder %v1789, 8.507059e+37
        %v1791 = vand.u32 %v1779, 2147483648
        %v1792 = vor.u32 1.1754944e-38, %v1791
        %v1793 = vsel %vm1790, %v1792, %v1788
        %v1794 = vmul.f32 %v1776, %v1793
        %v1795 = vpack.c.bf16 %v1794, %v1794
        %1796 = vrot.lane.b32.xlu0 %v1614, 80
        %v1797 = vpop.permute.xlu0 %1796
        %v1799 = vsel %vm1088, %v1795, 0
        %v1802 = vsel %vm1138, %v1797, 0
        %1804 = vmatpush.bf16.msra.mxu0 0
        %1805 = vmatpush.bf16.msra.mxu0 0
        %1806 = vmatpush.bf16.msra.mxu0 0
        %1807 = vmatpush.bf16.msra.mxu0 0
        %1808 = vmatpush.bf16.msra.mxu0 0
        %1809 = vmatpush.bf16.msra.mxu0 0
        %1810 = vmatpush.bf16.msra.mxu0 0
        %1811 = vmatpush.bf16.msra.mxu0 %v1802
        %1812 = vmatmul.bf16.gmra.mxu0 %v1799
        %v1813 = vpop.f32.mrf.mxu0
        %v1814 = vadd.f32 0.0, %v1813
        %v1815 = vpop.f32.mrf.mxu0
        %1816 = vdwg.mxu0
        %v1817 = vpack.c.bf16 %v1814, %v1814
        %v1819 = vsel %vm1088, %v1817, 0
        %v1822 = vsel %vm1138, %v1564, 0
        %1824 = vmatpush.bf16.msra.mxu0 0
        %1825 = vmatpush.bf16.msra.mxu0 0
        %1826 = vmatpush.bf16.msra.mxu0 0
        %1827 = vmatpush.bf16.msra.mxu0 0
        %1828 = vmatpush.bf16.msra.mxu0 0
        %1829 = vmatpush.bf16.msra.mxu0 0
        %1830 = vmatpush.bf16.msra.mxu0 0
        %1831 = vmatpush.bf16.msra.mxu0 %v1822
        %1832 = vmatmul.bf16.gmra.mxu0 %v1819
        %v1833 = vpop.f32.mrf.mxu0
        %v1834 = vadd.f32 0.0, %v1833
        %v1835 = vpop.f32.mrf.mxu0
        %1836 = vdwg.mxu0
        %v1837 = vadd.f32 %v1745, %v1834
        %1838 = vrot.lane.b32.xlu0 %v1639, 104
        %v1839 = vpop.permute.xlu0 %1838
        %1840 = vrot.lane.b32.xlu0 %v1614, 104
        %v1841 = vpop.permute.xlu0 %1840
        %v1843 = vsel %vm1088, %v1839, 0
        %v1846 = vsel %vm1088, %v1841, 0
        %1848 = vmatpush.bf16.xpose.msra.mxu0 0
        %1849 = vmatpush.bf16.xpose.msra.mxu0 0
        %1850 = vmatpush.bf16.xpose.msra.mxu0 0
        %1851 = vmatpush.bf16.xpose.msra.mxu0 0
        %1852 = vmatpush.bf16.xpose.msra.mxu0 0
        %1853 = vmatpush.bf16.xpose.msra.mxu0 0
        %1854 = vmatpush.bf16.xpose.msra.mxu0 0
        %1855 = vmatpush.bf16.xpose.msra.mxu0 %v1846
        %1856 = vmatmul.bf16.gmra.mxu0 %v1843
        %v1857 = vpop.f32.mrf.mxu0
        %v1858 = vadd.f32 %v1038, %v1857
        %v1859 = vpop.f32.mrf.mxu0
        %1860 = vdwg.mxu0
        %v1861 = vsel %vm1088, %v1858, -inf
        %1862 = vmax.xlane.f32.xlu0 %v1861
        %v1863 = vpop.xlane.xlu0 %1862
        %v1864 = vsub.f32 %v1858, %v1863
        %v1865 = vmul.f32 %v1864, 1.442695
        %v1866 = vpow.pop %v1865
        %v1867 = vsel %vm1088, %v1866, 0.0
        %1868 = vadd.xlane.f32.xlu0 %v1867
        %v1869 = vpop.xlane.xlu0 %1868
        %v1870 = vrcp.pop %v1869
        %v1871 = vmul.f32 %v1869, %v1870
        %v1872 = vsub.f32 1.0, %v1871
        %v1873 = vmul.f32 %v1870, %v1872
        %v1874 = vadd.f32 %v1870, %v1873
        %vm1875 = vweird.f32 %v1869
        %vm1876 = vweird.f32 %v1870
        %vm1877 = vmor %vm1875, %vm1876
        %v1878 = vsel %vm1877, %v1870, %v1874
        %v1879 = vand.u32 2147483647, %v1869
        %vm1880 = vcmp.eq.f32.partialorder %v1879, 8.507059e+37
        %v1881 = vand.u32 %v1869, 2147483648
        %v1882 = vor.u32 1.1754944e-38, %v1881
        %v1883 = vsel %vm1880, %v1882, %v1878
        %v1884 = vmul.f32 %v1866, %v1883
        %v1885 = vpack.c.bf16 %v1884, %v1884
        %1886 = vrot.lane.b32.xlu0 %v1614, 72
        %v1887 = vpop.permute.xlu0 %1886
        %v1889 = vsel %vm1088, %v1885, 0
        %v1892 = vsel %vm1138, %v1887, 0
        %1894 = vmatpush.bf16.msra.mxu0 0
        %1895 = vmatpush.bf16.msra.mxu0 0
        %1896 = vmatpush.bf16.msra.mxu0 0
        %1897 = vmatpush.bf16.msra.mxu0 0
        %1898 = vmatpush.bf16.msra.mxu0 0
        %1899 = vmatpush.bf16.msra.mxu0 0
        %1900 = vmatpush.bf16.msra.mxu0 0
        %1901 = vmatpush.bf16.msra.mxu0 %v1892
        %1902 = vmatmul.bf16.gmra.mxu0 %v1889
        %v1903 = vpop.f32.mrf.mxu0
        %v1904 = vadd.f32 0.0, %v1903
        %v1905 = vpop.f32.mrf.mxu0
        %1906 = vdwg.mxu0
        %v1907 = vpack.c.bf16 %v1904, %v1904
        %v1909 = vsel %vm1088, %v1907, 0
        %v1912 = vsel %vm1138, %v1565, 0
        %1914 = vmatpush.bf16.msra.mxu0 0
        %1915 = vmatpush.bf16.msra.mxu0 0
        %1916 = vmatpush.bf16.msra.mxu0 0
        %1917 = vmatpush.bf16.msra.mxu0 0
        %1918 = vmatpush.bf16.msra.mxu0 0
        %1919 = vmatpush.bf16.msra.mxu0 0
        %1920 = vmatpush.bf16.msra.mxu0 0
        %1921 = vmatpush.bf16.msra.mxu0 %v1912
        %1922 = vmatmul.bf16.gmra.mxu0 %v1909
        %v1923 = vpop.f32.mrf.mxu0
        %v1924 = vadd.f32 0.0, %v1923
        %v1925 = vpop.f32.mrf.mxu0
        %1926 = vdwg.mxu0
        %v1927 = vadd.f32 %v1837, %v1924
        %v1928 = vld [vmem:[#allocation17] sm:$0x1]
        %v1930 = vperm.slane %v1928, 0
        %v1932 = vadd.f32 %v1927, %v1930
        %v1933 = vadd.f32 %v1932, %v1488
        %v1934 = vld [vmem:[#allocation19] sm:$0x1]
        %v1935 = vld [vmem:[#allocation20] sm:$0x1]
        %v1936 = vsel %vm1061, %v1933, 0.0
        %1937 = vadd.xlane.f32.xlu0 %v1936
        %v1938 = vpop.xlane.xlu0 %1937
        %v1939 = vmul.f32 %v1938, %v1461
        %v1940 = vsub.f32 %v1933, %v1939
        %v1941 = vmul.f32 %v1940, %v1940
        %v1942 = vsel %vm1061, %v1941, 0.0
        %1943 = vadd.xlane.f32.xlu0 %v1942
        %v1944 = vpop.xlane.xlu0 %1943
        %v1945 = vmul.f32 %v1944, %v1461
        %v1946 = vadd.f32 %v1945, 1e-12
        %v1947 = vrsqrt.pop %v1946
        %v1948 = vmul.f32 %v1947, %v1946
        %v1949 = vmul.f32 %v1948, %v1947
        %v1950 = vmul.f32 0.5, %v1949
        %v1951 = vsub.f32 1.5, %v1950
        %v1952 = vmul.f32 %v1947, %v1951
        %vm1953 = vweird.f32 %v1946
        %vm1954 = vweird.f32 %v1947
        %vm1955 = vmor %vm1953, %vm1954
        %v1956 = vsel %vm1955, %v1947, %v1952
        %v1957 = vmul.f32 %v1940, %v1956
        %v1959 = vperm.slane %v1934, 0
        %v1961 = vmul.f32 %v1959, %v1957
        %v1963 = vperm.slane %v1935, 0
        %v1965 = vadd.f32 %v1961, %v1963
        %v1966 = vpack.c.bf16 %v1965, %v1965
        %v1967 = vld [vmem:[#allocation22] sm:$0xf]
        %v1968 = vld [vmem:[#allocation22 + $0x4] sm:$0xf]
        %v1969 = vld [vmem:[#allocation22 + $0x8] sm:$0xf]
        %v1970 = vld [vmem:[#allocation22 + $0xc] sm:$0xf]
        %v1971 = vld [vmem:[#allocation23] sm:$0x1]
        %v1973 = vperm.slane %v1971, 0
        %v1979 = vunpack.c.l.b16 %v1967
        %v1980 = vunpack.c.l.b16 %v1968
        %v1981 = vunpack.c.l.b16 %v1969
        %v1982 = vunpack.c.l.b16 %v1970
        %v1983 = vpack.c.b16 %v1980, %v1979
        %v1984 = vpack.c.b16 %v1982, %v1981
        %v1988 = vsel %vm1061, %v1966, 0
        %1990 = vmatpush.bf16.msra.mxu0 0
        %1991 = vmatpush.bf16.msra.mxu0 0
        %1992 = vmatpush.bf16.msra.mxu0 0
        %1993 = vmatpush.bf16.msra.mxu0 0
        %1994 = vmatpush.bf16.msra.mxu0 0
        %1995 = vmatpush.bf16.msra.mxu0 0
        %1996 = vmatpush.bf16.msra.mxu0 %v1984
        %1997 = vmatpush.bf16.msra.mxu0 %v1983
        %1998 = vmatmul.bf16.gmra.mxu0 %v1988
        %v1999 = vpop.f32.mrf.mxu0
        %v2000 = vadd.f32 %v1973, %v1999
        %v2001 = vpop.f32.mrf.mxu0
        %2002 = vdwg.mxu0
        %v2003 = vmax.f32 %v2000, 0.0
        %v2004 = vpack.c.bf16 %v2003, %v2003
        %v2005 = vld [vmem:[%s20] sm:$0xf]
        %v2006 = vld [vmem:[%s20 + $0x4] sm:$0xf]
        %v2007 = vld [vmem:[%s20 + $0x8] sm:$0xf]
        %v2008 = vld [vmem:[%s20 + $0xc] sm:$0xf]
        %v2009 = vld [vmem:[%s20 + $0x10] sm:$0xf]
        %v2010 = vld [vmem:[%s20 + $0x14] sm:$0xf]
        %v2011 = vld [vmem:[%s20 + $0x18] sm:$0xf]
        %v2012 = vld [vmem:[%s20 + $0x1c] sm:$0xf]
        %v2013 = vld [vmem:[#allocation25] sm:$0x1]
        %v2015 = vperm.slane %v2013, 0
        %v2025 = vunpack.c.l.b16 %v2005
        %v2026 = vunpack.c.l.b16 %v2006
        %v2027 = vunpack.c.l.b16 %v2007
        %v2028 = vunpack.c.l.b16 %v2008
        %v2029 = vunpack.c.l.b16 %v2009
        %v2030 = vunpack.c.l.b16 %v2010
        %v2031 = vunpack.c.l.b16 %v2011
        %v2032 = vunpack.c.l.b16 %v2012
        %v2033 = vpack.c.b16 %v2026, %v2025
        %v2034 = vpack.c.b16 %v2028, %v2027
        %v2035 = vpack.c.b16 %v2030, %v2029
        %v2036 = vpack.c.b16 %v2032, %v2031
        %vm2041 = vcmask 523264
        %v2043 = vsel %vm2041, %v2004, 0
        %2045 = vmatpush.bf16.msra.mxu0 0
        %2046 = vmatpush.bf16.msra.mxu0 0
        %2047 = vmatpush.bf16.msra.mxu0 0
        %2048 = vmatpush.bf16.msra.mxu0 0
        %2049 = vmatpush.bf16.msra.mxu0 %v2036
        %2050 = vmatpush.bf16.msra.mxu0 %v2035
        %2051 = vmatpush.bf16.msra.mxu0 %v2034
        %2052 = vmatpush.bf16.msra.mxu0 %v2033
        %2053 = vmatmul.bf16.gmra.mxu0 %v2043
        %v2054 = vpop.f32.mrf.mxu0
        %v2055 = vadd.f32 %v2015, %v2054
        %v2056 = vpop.f32.mrf.mxu0
        %2057 = vdwg.mxu0
        %v2058 = vadd.f32 %v2055, %v1965
        %v2059 = vld [vmem:[%s22] sm:$0x1]
        %v2060 = vld [vmem:[#allocation26] sm:$0x1]
        %v2061 = vsel %vm1061, %v2058, 0.0
        %2062 = vadd.xlane.f32.xlu0 %v2061
        %v2063 = vpop.xlane.xlu0 %2062
        %v2064 = vmul.f32 %v2063, %v1461
        %v2065 = vsub.f32 %v2058, %v2064
        %v2066 = vmul.f32 %v2065, %v2065
        %v2067 = vsel %vm1061, %v2066, 0.0
        %2068 = vadd.xlane.f32.xlu0 %v2067
        %v2069 = vpop.xlane.xlu0 %2068
        %v2070 = vmul.f32 %v2069, %v1461
        %v2071 = vadd.f32 %v2070, 1e-12
        %v2072 = vrsqrt.pop %v2071
        %v2073 = vmul.f32 %v2072, %v2071
        %v2074 = vmul.f32 %v2073, %v2072
        %v2075 = vmul.f32 0.5, %v2074
        %v2076 = vsub.f32 1.5, %v2075
        %v2077 = vmul.f32 %v2072, %v2076
        %vm2078 = vweird.f32 %v2071
        %vm2079 = vweird.f32 %v2072
        %vm2080 = vmor %vm2078, %vm2079
        %v2081 = vsel %vm2080, %v2072, %v2077
        %v2082 = vmul.f32 %v2065, %v2081
        %v2084 = vperm.slane %v2059, 0
        %v2086 = vmul.f32 %v2084, %v2082
        %v2088 = vperm.slane %v2060, 0
        %v2090 = vadd.f32 %v2086, %v2088
        %2091 = vst.msk [vmem:[%s1021] sm:$0xff] %vm1061, %v2090
        %s2092 = sand.u32 %s581, 1
        %s2093 = scalar_lea.sflag [#allocation4], %s2092
        %s2094 = sand.u32 %s581, 1
        %s2095 = smul.addr %s2094, 8
        %s2096 = scalar_lea.vmem [#allocation28], %s2095
        // Predicated region
        $region181: #{decoder_layer.1} parent=115 // pred_check
          %p2097 = pneg %p591
        $region182: #{decoder_layer.1} parent=115 // pred_check_branch
          %2099 = sbr.rel (%p2097) target = $region184
        $region183: #{decoder_layer.1} parent=115 // pred_region
          %2101 = vsyncadd %s2093, 0
          %s2102 = smul.addr %s49, 8
          %s2103 = scalar_lea.hbm %s24, %s2102
          %s2105 = sshll.u32 %s2096, 4
          %s2106 = int_to_ptr.vmem [resolvable:$true] %s2105
          %s2107 = sshll.u32 %s2103, 4
          %s2108 = int_to_ptr.hbm [resolvable:$true] %s2107
          %2110 = dma.vmem_to_hbm [thread:$0]  %s2106, 128, %s2108, %s2093
        $region184: #{decoder_layer.1} parent=115 // pred_fallthru
          _
      $region116: #{decoder_layer.1} parent=5 // pred_fallthru
        _
      %p2111 = scmp.le.s32.totalorder 2, %s44
      // Predicated region
      $region185: #{decoder_layer.1} parent=5 // pred_check
        %p2112 = pneg %p2111
      $region186: #{decoder_layer.1} parent=5 // pred_check_branch
        %2114 = sbr.rel (%p2112) target = $region188
      $region187: #{decoder_layer.1} parent=5 // pred_region
        %s2115 = ssub.s32 %s44, 2
        // Predicated region
        $region189: #{decoder_layer.1} parent=187 // pred_check
          %p2116 = pneg %p597
        $region190: #{decoder_layer.1} parent=187 // pred_check_branch
          %2118 = sbr.rel (%p2116) target = $region192
        $region191: #{decoder_layer.1} parent=187 // pred_region
          %s2119 = sand.u32 %s582, 1
          %s2120 = scalar_lea.sflag [#allocation4], %s2119
          %s2121 = sand.u32 %s582, 1
          %s2122 = smul.addr %s2121, 8
          %s2123 = scalar_lea.vmem [#allocation28], %s2122
          %2125 = dma.done %s2120, 128
        $region192: #{decoder_layer.1} parent=187 // pred_fallthru
          _
      $region188: #{decoder_layer.1} parent=5 // pred_fallthru
        _
    $region6: #{decoder_layer.1} parent=1 // loop_footer
      %s48 = sadd.s32 1, %s44
    $region7: #{decoder_layer.1} parent=1 // loop_footer_branch
      %43 = sbr.rel target = $region3
    $region8: #{decoder_layer.1} parent=1 // loop_exit
      _
    %2126 = vsyncpa [#allocation3], 1
    %s2127 = scalar_lea.sflag [#allocation3], 1
    %2128 = vsyncpa %s2127, 1
    %2129 = vsyncpa [#allocation6], 1
    %2130 = vsyncpa [#allocation9], 1
    %2131 = vsyncpa [#allocation12], 1
    %2132 = vsyncpa [#allocation15], 1
    %2133 = vsyncpa [#allocation18], 1
    %2134 = vsyncpa [#allocation21], 1
    %2135 = vsyncpa [#allocation24], 1
    %2136 = vsyncpa [#allocation27], 1
    %2137 = vsyncpa [#allocation4], 1
    %s2138 = scalar_lea.sflag [#allocation4], 1
    %2139 = vsyncpa %s2138, 1

</llo_original>
